<compile_context>
chip_gen: v7x
topology: tpu7x:2x2x1
jax: 0.10.0
libtpu: 0.0.40
codegen_flags: <defaults>
</compile_context>

<pallas_src>
import functools

import jax
import jax.numpy as jnp
import numpy as np
from jax import lax
from jax.experimental import pallas as pl
from jax.experimental.pallas import tpu as pltpu

_EPS = 1e-5
_LANE = 128
_VMEM_LIMIT = 32 * 1024 * 1024  # safe on v5e/v6e (128 MiB) and v7x (64 MiB)


def _round_up(n, m=_LANE):
    return -(-n // m) * m


def _pick_tile(dim, prefs):
    for p in prefs:
        if dim % p == 0:
            return p
    return dim


# ----------------------------------------------------------------------------
# Tiled fused GEMM kernels (conv1x1 + BN folded into w/b, optional ReLU,
# optional residual-add + final ReLU).
# ----------------------------------------------------------------------------
def _gemm_kernel(x_ref, w_ref, b_ref, o_ref, acc_ref, *, relu):
    @pl.when(pl.program_id(2) == 0)
    def _():
        acc_ref[...] = jnp.zeros_like(acc_ref)

    acc_ref[...] += jnp.dot(x_ref[...], w_ref[...],
                            preferred_element_type=jnp.float32)

    @pl.when(pl.program_id(2) == pl.num_programs(2) - 1)
    def _():
        y = acc_ref[...] + b_ref[...]
        if relu:
            y = jnp.maximum(y, 0.0)
        o_ref[...] = y.astype(o_ref.dtype)


def _gemm_res_kernel(x_ref, w_ref, b_ref, r_ref, o_ref, acc_ref):
    @pl.when(pl.program_id(2) == 0)
    def _():
        acc_ref[...] = jnp.zeros_like(acc_ref)

    acc_ref[...] += jnp.dot(x_ref[...], w_ref[...],
                            preferred_element_type=jnp.float32)

    @pl.when(pl.program_id(2) == pl.num_programs(2) - 1)
    def _():
        y = acc_ref[...] + b_ref[...] + r_ref[...].astype(jnp.float32)
        o_ref[...] = jnp.maximum(y, 0.0).astype(o_ref.dtype)


def _pallas_gemm(x2d, w2d, bias, *, relu, residual2d=None,
                 out_dtype=jnp.bfloat16):
    """x2d: (M, K) bf16, w2d: (K, N) bf16, bias: (1, N) f32."""
    m, k = x2d.shape
    n = w2d.shape[1]
    # Tile budget (v7x, 64 MiB VMEM): 2*(tm*tk + tk*tn) bf16 double-buffered
    # input blocks + tm*tn f32 acc + output block -- comfortably < 1 MiB here.
    tm = _pick_tile(m, (256, 128, 64, 32, 16, 8))
    tn = _pick_tile(n, (256, 128))
    tk = _pick_tile(k, (512, 256, 128))
    grid = (m // tm, n // tn, k // tk)

    x_spec = pl.BlockSpec((tm, tk), lambda i, j, kk: (i, kk))
    w_spec = pl.BlockSpec((tk, tn), lambda i, j, kk: (kk, j))
    b_spec = pl.BlockSpec((1, tn), lambda i, j, kk: (0, j))
    o_spec = pl.BlockSpec((tm, tn), lambda i, j, kk: (i, j))
    cparams = pltpu.CompilerParams(
        dimension_semantics=("parallel", "parallel", "arbitrary"),
        vmem_limit_bytes=_VMEM_LIMIT)
    scratch = [pltpu.VMEM((tm, tn), jnp.float32)]
    out_shape = jax.ShapeDtypeStruct((m, n), out_dtype)

    if residual2d is None:
        return pl.pallas_call(
            functools.partial(_gemm_kernel, relu=relu),
            out_shape=out_shape,
            grid_spec=pltpu.PrefetchScalarGridSpec(
                num_scalar_prefetch=0, grid=grid,
                in_specs=[x_spec, w_spec, b_spec],
                out_specs=o_spec, scratch_shapes=scratch),
            compiler_params=cparams,
        )(x2d, w2d, bias)

    r_spec = pl.BlockSpec((tm, tn), lambda i, j, kk: (i, j))
    return pl.pallas_call(
        _gemm_res_kernel,
        out_shape=out_shape,
        grid_spec=pltpu.PrefetchScalarGridSpec(
            num_scalar_prefetch=0, grid=grid,
            in_specs=[x_spec, w_spec, b_spec, r_spec],
            out_specs=o_spec, scratch_shapes=scratch),
        compiler_params=cparams,
    )(x2d, w2d, bias, residual2d)


# ----------------------------------------------------------------------------
# 3x3 conv kernel: the 9 taps are a reduction *inside* the kernel over shifted
# windows of the phase-decomposed padded input (no 9x im2col in HBM).
# ----------------------------------------------------------------------------
def _conv3x3_kernel(x_ref, w_ref, b_ref, o_ref, *, stride, ho, wo):
    # x_ref: (1, s*s, Hq, Wq, Cinp) bf16   phase-decomposed padded image
    # w_ref: (9, Cinp, tn) bf16            per-tap weights (BN folded)
    # b_ref: (1, tn) f32
    # o_ref: (1, ho*wo, tn)
    s = stride
    cinp = x_ref.shape[-1]
    tn = o_ref.shape[-1]
    acc = jnp.zeros((ho * wo, tn), jnp.float32)
    for kh in range(3):
        for kw in range(3):
            t = kh * 3 + kw
            p = (kh % s) * s + (kw % s)          # phase index
            r0, c0 = kh // s, kw // s            # shift inside the phase
            # Load the needed rows, then shift/reshape in f32 (layout no-op
            # for f32 sublanes) before casting back to bf16 for the MXU.
            win = x_ref[0, p, r0:r0 + ho, :, :].astype(jnp.float32)
            win = win[:, c0:c0 + wo, :].reshape(ho * wo, cinp)
            win = win.astype(jnp.bfloat16)
            acc = acc + jnp.dot(win, w_ref[t],
                                preferred_element_type=jnp.float32)
    y = acc + b_ref[...]
    o_ref[0] = jnp.maximum(y, 0.0).astype(o_ref.dtype)


# ----------------------------------------------------------------------------
# Glue: BN folding, channel padding, layer wrappers.
# ----------------------------------------------------------------------------
def _fold_bn(w_oihw, conv_bias, bn):
    gamma, beta, mean, var = bn
    scale = gamma / jnp.sqrt(var + _EPS)
    w_folded = w_oihw * scale[:, None, None, None]
    b_folded = (conv_bias - mean) * scale + beta
    return w_folded, b_folded


def _conv1x1_bn(x, w_oihw, conv_bias, bn, *, stride=1, relu=True,
                residual=None, out_dtype=jnp.bfloat16):
    """x: (N, H, W, Cinp) channel-padded NHWC."""
    wf, bf = _fold_bn(w_oihw, conv_bias, bn)
    cout, cin = wf.shape[0], wf.shape[1]
    if stride > 1:
        x = x[:, ::stride, ::stride, :]
    n, h, wsp, cinp = x.shape
    coutp = _round_up(cout)
    w2d = jnp.zeros((cinp, coutp), jnp.float32)
    w2d = w2d.at[:cin, :cout].set(wf.reshape(cout, cin).T)
    bias = jnp.zeros((1, coutp), jnp.float32).at[0, :cout].set(bf)
    x2d = x.reshape(n * h * wsp, cinp).astype(jnp.bfloat16)
    r2d = None
    if residual is not None:
        r2d = residual.reshape(n * h * wsp, coutp)
    y = _pallas_gemm(x2d, w2d.astype(jnp.bfloat16), bias, relu=relu,
                     residual2d=r2d, out_dtype=out_dtype)
    return y.reshape(n, h, wsp, coutp)


def _conv3x3_bn_relu(x, w_oihw, conv_bias, bn, *, stride,
                     out_dtype=jnp.bfloat16):
    """x: (N, H, W, Cinp) channel-padded NHWC; 3x3, pad=1, given stride."""
    wf, bf = _fold_bn(w_oihw, conv_bias, bn)
    cout, cin = wf.shape[0], wf.shape[1]
    n, h, wsp, cinp = x.shape
    coutp = _round_up(cout)
    s = stride

    # weights -> (9, Cinp, Coutp), BN folded, zero-padded channels
    w_t = wf.transpose(2, 3, 1, 0)                      # (3, 3, Cin, Cout)
    w9 = jnp.zeros((3, 3, cinp, coutp), jnp.float32)
    w9 = w9.at[:, :, :cin, :cout].set(w_t).reshape(9, cinp, coutp)
    bias = jnp.zeros((1, coutp), jnp.float32).at[0, :cout].set(bf)

    ho = (h - 1) // s + 1
    wo = (wsp - 1) // s + 1
    hp, wp = h + 2, wsp + 2
    hq, wq = -(-hp // s), -(-wp // s)

    # spatial pad (=1) + phase decomposition: phases[n, ph*s+pw, i, j, c] ==
    # x_pad[n, i*s+ph, j*s+pw, c]; ~1x traffic instead of a 9x im2col.
    xp = jnp.pad(x, ((0, 0), (1, 1), (1, 1), (0, 0)))
    xp = jnp.pad(xp, ((0, 0), (0, hq * s - hp), (0, wq * s - wp), (0, 0)))
    phases = xp.reshape(n, hq, s, wq, s, cinp).transpose(0, 2, 4, 1, 3, 5)
    phases = phases.reshape(n, s * s, hq, wq, cinp).astype(jnp.bfloat16)

    tn = _pick_tile(coutp, (256, 128))
    out = pl.pallas_call(
        functools.partial(_conv3x3_kernel, stride=s, ho=ho, wo=wo),
        out_shape=jax.ShapeDtypeStruct((n, ho * wo, coutp), out_dtype),
        grid_spec=pltpu.PrefetchScalarGridSpec(
            num_scalar_prefetch=0,
            grid=(n, coutp // tn),
            in_specs=[
                pl.BlockSpec((1, s * s, hq, wq, cinp),
                             lambda b, j: (b, 0, 0, 0, 0)),
                pl.BlockSpec((9, cinp, tn), lambda b, j: (0, 0, j)),
                pl.BlockSpec((1, tn), lambda b, j: (0, j)),
            ],
            out_specs=pl.BlockSpec((1, ho * wo, tn), lambda b, j: (b, 0, j))),
        compiler_params=pltpu.CompilerParams(
            dimension_semantics=("parallel", "parallel"),
            vmem_limit_bytes=_VMEM_LIMIT),
    )(phases, w9.astype(jnp.bfloat16), bias)
    return out.reshape(n, ho, wo, coutp)


# ----------------------------------------------------------------------------
# Bottleneck module (parameters built deterministically in-script)
# ----------------------------------------------------------------------------
def init_bottleneck_params(key, in_channel, out_channel, if_downsample):
    def conv_p(k, cout, cin, kh, kw):
        k1, k2 = jax.random.split(k)
        w = jax.random.normal(k1, (cout, cin, kh, kw), jnp.float32) * 0.1
        b = jax.random.normal(k2, (cout,), jnp.float32) * 0.1
        return w, b

    def bn_p(k, c):
        k1, k2, k3, k4 = jax.random.split(k, 4)
        gamma = 1.0 + 0.1 * jax.random.normal(k1, (c,), jnp.float32)
        beta = 0.1 * jax.random.normal(k2, (c,), jnp.float32)
        mean = 0.1 * jax.random.normal(k3, (c,), jnp.float32)
        var = 1.0 + 0.1 * jnp.abs(jax.random.normal(k4, (c,), jnp.float32))
        return gamma, beta, mean, var

    ks = jax.random.split(key, 8)
    p = {}
    p["conv1_w"], p["conv1_b"] = conv_p(ks[0], out_channel, in_channel, 1, 1)
    p["bn1"] = bn_p(ks[1], out_channel)
    p["conv2_w"], p["conv2_b"] = conv_p(ks[2], out_channel, out_channel, 3, 3)
    p["bn2"] = bn_p(ks[3], out_channel)
    p["conv3_w"], p["conv3_b"] = conv_p(ks[4], out_channel * 4, out_channel, 1, 1)
    p["bn3"] = bn_p(ks[5], out_channel * 4)
    if if_downsample:
        p["down_w"], p["down_b"] = conv_p(ks[6], out_channel * 4, in_channel, 1, 1)
        p["down_bn"] = bn_p(ks[7], out_channel * 4)
    return p


def bottleneck_forward(x_nchw, params, *, stride, if_downsample):
    x = jnp.transpose(x_nchw, (0, 2, 3, 1)).astype(jnp.float32)   # NHWC
    cin = x.shape[-1]
    cinp = _round_up(cin)
    x = jnp.pad(x, ((0, 0), (0, 0), (0, 0), (0, cinp - cin)))     # lane pad

    cout4 = params["conv3_w"].shape[0]

    # identity / downsample path (bf16 intermediate)
    if if_downsample:
        identity = _conv1x1_bn(x, params["down_w"], params["down_b"],
                               params["down_bn"], stride=stride, relu=False,
                               out_dtype=jnp.bfloat16)
    else:
        assert stride == 1 and cin == cout4, (
            "if_downsample=False requires stride=1 and in_channel == "
            "out_channel*4 for the residual add")
        identity = x.astype(jnp.bfloat16)

    # residual path
    r = _conv1x1_bn(x, params["conv1_w"], params["conv1_b"], params["bn1"],
                    stride=1, relu=True, out_dtype=jnp.bfloat16)
    r = _conv3x3_bn_relu(r, params["conv2_w"], params["conv2_b"],
                         params["bn2"], stride=stride,
                         out_dtype=jnp.bfloat16)
    # last conv + BN fused with residual add + final ReLU inside one kernel
    out = _conv1x1_bn(r, params["conv3_w"], params["conv3_b"], params["bn3"],
                      stride=1, relu=False, residual=identity,
                      out_dtype=jnp.float32)
    out = out[..., :cout4]                     # drop channel padding
    return jnp.transpose(out, (0, 3, 1, 2))    # back to NCHW


# ----------------------------------------------------------------------------
# Pure-JAX reference (lax.conv, f32) for correctness checking
# ----------------------------------------------------------------------------
def _ref_conv_bn(x, w_oihw, b, bn, stride, pad):
    y = lax.conv_general_dilated(
        x, jnp.transpose(w_oihw, (2, 3, 1, 0)),
        window_strides=(stride, stride), padding=[(pad, pad), (pad, pad)],
        dimension_numbers=("NHWC", "HWIO", "NHWC"))
    y = y + b[None, None, None, :]
    gamma, beta, mean, var = bn
    return (y - mean) / jnp.sqrt(var + _EPS) * gamma + beta


def bottleneck_reference(x_nchw, params, *, stride, if_downsample):
    x = jnp.transpose(x_nchw, (0, 2, 3, 1)).astype(jnp.float32)
    if if_downsample:
        identity = _ref_conv_bn(x, params["down_w"], params["down_b"],
                                params["down_bn"], stride, 0)
    else:
        identity = x
    r = jax.nn.relu(_ref_conv_bn(x, params["conv1_w"], params["conv1_b"],
                                 params["bn1"], 1, 0))
    r = jax.nn.relu(_ref_conv_bn(r, params["conv2_w"], params["conv2_b"],
                                 params["bn2"], stride, 1))
    r = _ref_conv_bn(r, params["conv3_w"], params["conv3_b"], params["bn3"],
                     1, 0)
    out = jax.nn.relu(r + identity)
    return jnp.transpose(out, (0, 3, 1, 2))


# ----------------------------------------------------------------------------
if __name__ == "__main__":
    key = jax.random.PRNGKey(0)
    k_x, k_p = jax.random.split(key)

    batch, in_channel, out_channel, spatial, stride = 2, 4, 4, 16, 2
    if_downsample = True

    x = jax.random.normal(k_x, (batch, in_channel, spatial, spatial),
                          jnp.float32)
    params = init_bottleneck_params(k_p, in_channel, out_channel,
                                    if_downsample)

    fwd = jax.jit(functools.partial(bottleneck_forward, stride=stride,
                                    if_downsample=if_downsample))
    out = fwd(x, params)
    jax.block_until_ready(out)

    ref = bottleneck_reference(x, params, stride=stride,
                               if_downsample=if_downsample)
    # bf16 weights/intermediates -> looser tolerance than a pure-f32 pipeline.
    np.testing.assert_allclose(np.asarray(out), np.asarray(ref),
                               rtol=5e-2, atol=2e-2)
    assert out.shape == (batch, out_channel * 4, spatial // stride,
                         spatial // stride)
    print("KERNEL_OK")
</pallas_src>

<mosaic_0001>
module attributes {stable_mosaic.version = 11 : i64} {
  func.func @_gemm_kernel(%arg0: i32, %arg1: i32, %arg2: i32, %arg3: memref<256x128xbf16, #tpu.memory_space<vmem>>, %arg4: memref<128x128xbf16, #tpu.memory_space<vmem>>, %arg5: memref<1x128xf32, #tpu.memory_space<vmem>>, %arg6: memref<256x128xbf16, #tpu.memory_space<vmem>>, %arg7: memref<256x128xf32, #tpu.memory_space<vmem>>) attributes {dimension_semantics = [#tpu.dimension_semantics<parallel>, #tpu.dimension_semantics<parallel>, #tpu.dimension_semantics<arbitrary>], iteration_bounds = array<i64: 2, 1, 1>, scalar_prefetch = 0 : i64, scratch_operands = 1 : i64, tpu.core_type = #tpu.core_type<tc>, window_params = [{transform_indices = @transform_0, window_bounds = array<i64: 256, 128>}, {transform_indices = @transform_1, window_bounds = array<i64: 128, 128>}, {transform_indices = @transform_2, window_bounds = array<i64: 1, 128>}, {transform_indices = @transform_3, window_bounds = array<i64: 256, 128>}]} {
    %c0_i32 = arith.constant 0 : i32
    %0 = arith.cmpi eq, %arg2, %c0_i32 : i32
    %1 = arith.extui %0 : i1 to i32
    %c0_i32_0 = arith.constant 0 : i32
    %2 = arith.cmpi ne, %1, %c0_i32_0 : i32
    scf.if %2 {
      %cst_10 = arith.constant 0.000000e+00 : f32
      %12 = vector.broadcast %cst_10 : f32 to vector<256x128xf32>
      %c0_11 = arith.constant 0 : index
      %c0_12 = arith.constant 0 : index
      %13 = vector.load %arg7[%c0_11, %c0_12] : memref<256x128xf32, #tpu.memory_space<vmem>>, vector<256x128xf32>
      tpu.vector_store %arg7[%c0_11, %c0_12], %12 {strides = array<i32>} : memref<256x128xf32, #tpu.memory_space<vmem>>, vector<256x128xf32>,
    } else {
    }
    %c0 = arith.constant 0 : index
    %c0_1 = arith.constant 0 : index
    %3 = vector.load %arg7[%c0, %c0_1] : memref<256x128xf32, #tpu.memory_space<vmem>>, vector<256x128xf32>
    %c0_2 = arith.constant 0 : index
    %c0_3 = arith.constant 0 : index
    %4 = vector.load %arg3[%c0_2, %c0_3] : memref<256x128xbf16, #tpu.memory_space<vmem>>, vector<256x128xbf16>
    %c0_4 = arith.constant 0 : index
    %c0_5 = arith.constant 0 : index
    %5 = vector.load %arg4[%c0_4, %c0_5] : memref<128x128xbf16, #tpu.memory_space<vmem>>, vector<128x128xbf16>
    %cst = arith.constant dense<0.000000e+00> : vector<256x128xf32>
    %6 = tpu.matmul %4, %5, %cst {dimension_numbers = #tpu.dot_dimension_numbers<[1], [0], [0], [1], [0, 0, 1, 1], [], []>} : vector<256x128xbf16>, vector<128x128xbf16>, vector<256x128xf32> -> vector<256x128xf32>
    %7 = arith.addf %3, %6 : vector<256x128xf32>
    %c0_6 = arith.constant 0 : index
    %c0_7 = arith.constant 0 : index
    %8 = vector.load %arg7[%c0_6, %c0_7] : memref<256x128xf32, #tpu.memory_space<vmem>>, vector<256x128xf32>
    tpu.vector_store %arg7[%c0_6, %c0_7], %7 {strides = array<i32>} : memref<256x128xf32, #tpu.memory_space<vmem>>, vector<256x128xf32>,
    %c0_i32_8 = arith.constant 0 : i32
    %9 = arith.cmpi eq, %arg2, %c0_i32_8 : i32
    %10 = arith.extui %9 : i1 to i32
    %c0_i32_9 = arith.constant 0 : i32
    %11 = arith.cmpi ne, %10, %c0_i32_9 : i32
    scf.if %11 {
      %c0_10 = arith.constant 0 : index
      %c0_11 = arith.constant 0 : index
      %12 = vector.load %arg7[%c0_10, %c0_11] : memref<256x128xf32, #tpu.memory_space<vmem>>, vector<256x128xf32>
      %c0_12 = arith.constant 0 : index
      %c0_13 = arith.constant 0 : index
      %13 = vector.load %arg5[%c0_12, %c0_13] : memref<1x128xf32, #tpu.memory_space<vmem>>, vector<1x128xf32>
      %14 = vector.broadcast %13 : vector<1x128xf32> to vector<256x128xf32>
      %15 = arith.addf %12, %14 : vector<256x128xf32>
      %cst_14 = arith.constant 0.000000e+00 : f32
      %16 = vector.broadcast %cst_14 : f32 to vector<256x128xf32>
      %17 = arith.maximumf %15, %16 : vector<256x128xf32>
      %18 = arith.truncf %17 : vector<256x128xf32> to vector<256x128xbf16>
      %c0_15 = arith.constant 0 : index
      %c0_16 = arith.constant 0 : index
      %19 = vector.load %arg6[%c0_15, %c0_16] : memref<256x128xbf16, #tpu.memory_space<vmem>>, vector<256x128xbf16>
      tpu.vector_store %arg6[%c0_15, %c0_16], %18 {strides = array<i32>} : memref<256x128xbf16, #tpu.memory_space<vmem>>, vector<256x128xbf16>,
    } else {
    }
    return
  }
  func.func @transform_0(%arg0: i32, %arg1: i32, %arg2: i32) -> (i32, i32) {
    %c0_i32 = arith.constant 0 : i32
    return %arg0, %arg2 : i32, i32
  }
  func.func @transform_1(%arg0: i32, %arg1: i32, %arg2: i32) -> (i32, i32) {
    %c0_i32 = arith.constant 0 : i32
    return %arg2, %arg1 : i32, i32
  }
  func.func @transform_2(%arg0: i32, %arg1: i32, %arg2: i32) -> (i32, i32) {
    %c0_i32 = arith.constant 0 : i32
    %c0_i32_0 = arith.constant 0 : i32
    return %c0_i32, %arg1 : i32, i32
  }
  func.func @transform_3(%arg0: i32, %arg1: i32, %arg2: i32) -> (i32, i32) {
    %c0_i32 = arith.constant 0 : i32
    return %arg0, %arg1 : i32, i32
  }
}

module attributes {stable_mosaic.version = 11 : i64} {
  func.func @_conv3x3_kernel(%arg0: i32, %arg1: i32, %arg2: memref<1x4x9x9x128xbf16, #tpu.memory_space<vmem>>, %arg3: memref<9x128x128xbf16, #tpu.memory_space<vmem>>, %arg4: memref<1x128xf32, #tpu.memory_space<vmem>>, %arg5: memref<1x64x128xbf16, #tpu.memory_space<vmem>>) attributes {dimension_semantics = [#tpu.dimension_semantics<parallel>, #tpu.dimension_semantics<parallel>], iteration_bounds = array<i64: 2, 1>, scalar_prefetch = 0 : i64, scratch_operands = 0 : i64, tpu.core_type = #tpu.core_type<tc>, window_params = [{transform_indices = @transform_0, window_bounds = array<i64: 1, 4, 9, 9, 128>}, {transform_indices = @transform_1, window_bounds = array<i64: 9, 128, 128>}, {transform_indices = @transform_2, window_bounds = array<i64: 1, 128>}, {transform_indices = @transform_3, window_bounds = array<i64: 1, 64, 128>}]} {
    %cst = arith.constant 0.000000e+00 : f32
    %0 = vector.broadcast %cst : f32 to vector<64x128xf32>
    %c0 = arith.constant 0 : index
    %c0_0 = arith.constant 0 : index
    %c0_1 = arith.constant 0 : index
    %c0_2 = arith.constant 0 : index
    %c0_3 = arith.constant 0 : index
    %1 = vector.load %arg2[%c0, %c0_0, %c0_1, %c0_2, %c0_3] : memref<1x4x9x9x128xbf16, #tpu.memory_space<vmem>>, vector<1x1x8x9x128xbf16>
    %2 = vector.shape_cast %1 : vector<1x1x8x9x128xbf16> to vector<8x9x128xbf16>
    %3 = arith.extf %2 : vector<8x9x128xbf16> to vector<8x9x128xf32>
    %4 = vector.extract_strided_slice %3 {offsets = [0, 0, 0], sizes = [8, 8, 128], strides = [1, 1, 1]} : vector<8x9x128xf32> to vector<8x8x128xf32>
    %5 = vector.shape_cast %4 : vector<8x8x128xf32> to vector<64x128xf32>
    %6 = arith.truncf %5 : vector<64x128xf32> to vector<64x128xbf16>
    %c0_4 = arith.constant 0 : index
    %c0_5 = arith.constant 0 : index
    %c0_6 = arith.constant 0 : index
    %7 = vector.load %arg3[%c0_4, %c0_5, %c0_6] : memref<9x128x128xbf16, #tpu.memory_space<vmem>>, vector<1x128x128xbf16>
    %8 = vector.shape_cast %7 : vector<1x128x128xbf16> to vector<128x128xbf16>
    %cst_7 = arith.constant dense<0.000000e+00> : vector<64x128xf32>
    %9 = tpu.matmul %6, %8, %cst_7 {dimension_numbers = #tpu.dot_dimension_numbers<[1], [0], [0], [1], [0, 0, 1, 1], [], []>} : vector<64x128xbf16>, vector<128x128xbf16>, vector<64x128xf32> -> vector<64x128xf32>
    %10 = arith.addf %0, %9 : vector<64x128xf32>
    %c0_8 = arith.constant 0 : index
    %c1 = arith.constant 1 : index
    %c0_9 = arith.constant 0 : index
    %c0_10 = arith.constant 0 : index
    %c0_11 = arith.constant 0 : index
    %11 = vector.load %arg2[%c0_8, %c1, %c0_9, %c0_10, %c0_11] : memref<1x4x9x9x128xbf16, #tpu.memory_space<vmem>>, vector<1x1x8x9x128xbf16>
    %12 = vector.shape_cast %11 : vector<1x1x8x9x128xbf16> to vector<8x9x128xbf16>
    %13 = arith.extf %12 : vector<8x9x128xbf16> to vector<8x9x128xf32>
    %14 = vector.extract_strided_slice %13 {offsets = [0, 0, 0], sizes = [8, 8, 128], strides = [1, 1, 1]} : vector<8x9x128xf32> to vector<8x8x128xf32>
    %15 = vector.shape_cast %14 : vector<8x8x128xf32> to vector<64x128xf32>
    %16 = arith.truncf %15 : vector<64x128xf32> to vector<64x128xbf16>
    %c1_12 = arith.constant 1 : index
    %c0_13 = arith.constant 0 : index
    %c0_14 = arith.constant 0 : index
    %17 = vector.load %arg3[%c1_12, %c0_13, %c0_14] : memref<9x128x128xbf16, #tpu.memory_space<vmem>>, vector<1x128x128xbf16>
    %18 = vector.shape_cast %17 : vector<1x128x128xbf16> to vector<128x128xbf16>
    %cst_15 = arith.constant dense<0.000000e+00> : vector<64x128xf32>
    %19 = tpu.matmul %16, %18, %cst_15 {dimension_numbers = #tpu.dot_dimension_numbers<[1], [0], [0], [1], [0, 0, 1, 1], [], []>} : vector<64x128xbf16>, vector<128x128xbf16>, vector<64x128xf32> -> vector<64x128xf32>
    %20 = arith.addf %10, %19 : vector<64x128xf32>
    %c0_16 = arith.constant 0 : index
    %c0_17 = arith.constant 0 : index
    %c0_18 = arith.constant 0 : index
    %c0_19 = arith.constant 0 : index
    %c0_20 = arith.constant 0 : index
    %21 = vector.load %arg2[%c0_16, %c0_17, %c0_18, %c0_19, %c0_20] : memref<1x4x9x9x128xbf16, #tpu.memory_space<vmem>>, vector<1x1x8x9x128xbf16>
    %22 = vector.shape_cast %21 : vector<1x1x8x9x128xbf16> to vector<8x9x128xbf16>
    %23 = arith.extf %22 : vector<8x9x128xbf16> to vector<8x9x128xf32>
    %24 = vector.extract_strided_slice %23 {offsets = [0, 1, 0], sizes = [8, 8, 128], strides = [1, 1, 1]} : vector<8x9x128xf32> to vector<8x8x128xf32>
    %25 = vector.shape_cast %24 : vector<8x8x128xf32> to vector<64x128xf32>
    %26 = arith.truncf %25 : vector<64x128xf32> to vector<64x128xbf16>
    %c2 = arith.constant 2 : index
    %c0_21 = arith.constant 0 : index
    %c0_22 = arith.constant 0 : index
    %27 = vector.load %arg3[%c2, %c0_21, %c0_22] : memref<9x128x128xbf16, #tpu.memory_space<vmem>>, vector<1x128x128xbf16>
    %28 = vector.shape_cast %27 : vector<1x128x128xbf16> to vector<128x128xbf16>
    %cst_23 = arith.constant dense<0.000000e+00> : vector<64x128xf32>
    %29 = tpu.matmul %26, %28, %cst_23 {dimension_numbers = #tpu.dot_dimension_numbers<[1], [0], [0], [1], [0, 0, 1, 1], [], []>} : vector<64x128xbf16>, vector<128x128xbf16>, vector<64x128xf32> -> vector<64x128xf32>
    %30 = arith.addf %20, %29 : vector<64x128xf32>
    %c0_24 = arith.constant 0 : index
    %c2_25 = arith.constant 2 : index
    %c0_26 = arith.constant 0 : index
    %c0_27 = arith.constant 0 : index
    %c0_28 = arith.constant 0 : index
    %31 = vector.load %arg2[%c0_24, %c2_25, %c0_26, %c0_27, %c0_28] : memref<1x4x9x9x128xbf16, #tpu.memory_space<vmem>>, vector<1x1x8x9x128xbf16>
    %32 = vector.shape_cast %31 : vector<1x1x8x9x128xbf16> to vector<8x9x128xbf16>
    %33 = arith.extf %32 : vector<8x9x128xbf16> to vector<8x9x128xf32>
    %34 = vector.extract_strided_slice %33 {offsets = [0, 0, 0], sizes = [8, 8, 128], strides = [1, 1, 1]} : vector<8x9x128xf32> to vector<8x8x128xf32>
    %35 = vector.shape_cast %34 : vector<8x8x128xf32> to vector<64x128xf32>
    %36 = arith.truncf %35 : vector<64x128xf32> to vector<64x128xbf16>
    %c3 = arith.constant 3 : index
    %c0_29 = arith.constant 0 : index
    %c0_30 = arith.constant 0 : index
    %37 = vector.load %arg3[%c3, %c0_29, %c0_30] : memref<9x128x128xbf16, #tpu.memory_space<vmem>>, vector<1x128x128xbf16>
    %38 = vector.shape_cast %37 : vector<1x128x128xbf16> to vector<128x128xbf16>
    %cst_31 = arith.constant dense<0.000000e+00> : vector<64x128xf32>
    %39 = tpu.matmul %36, %38, %cst_31 {dimension_numbers = #tpu.dot_dimension_numbers<[1], [0], [0], [1], [0, 0, 1, 1], [], []>} : vector<64x128xbf16>, vector<128x128xbf16>, vector<64x128xf32> -> vector<64x128xf32>
    %40 = arith.addf %30, %39 : vector<64x128xf32>
    %c0_32 = arith.constant 0 : index
    %c3_33 = arith.constant 3 : index
    %c0_34 = arith.constant 0 : index
    %c0_35 = arith.constant 0 : index
    %c0_36 = arith.constant 0 : index
    %41 = vector.load %arg2[%c0_32, %c3_33, %c0_34, %c0_35, %c0_36] : memref<1x4x9x9x128xbf16, #tpu.memory_space<vmem>>, vector<1x1x8x9x128xbf16>
    %42 = vector.shape_cast %41 : vector<1x1x8x9x128xbf16> to vector<8x9x128xbf16>
    %43 = arith.extf %42 : vector<8x9x128xbf16> to vector<8x9x128xf32>
    %44 = vector.extract_strided_slice %43 {offsets = [0, 0, 0], sizes = [8, 8, 128], strides = [1, 1, 1]} : vector<8x9x128xf32> to vector<8x8x128xf32>
    %45 = vector.shape_cast %44 : vector<8x8x128xf32> to vector<64x128xf32>
    %46 = arith.truncf %45 : vector<64x128xf32> to vector<64x128xbf16>
    %c4 = arith.constant 4 : index
    %c0_37 = arith.constant 0 : index
    %c0_38 = arith.constant 0 : index
    %47 = vector.load %arg3[%c4, %c0_37, %c0_38] : memref<9x128x128xbf16, #tpu.memory_space<vmem>>, vector<1x128x128xbf16>
    %48 = vector.shape_cast %47 : vector<1x128x128xbf16> to vector<128x128xbf16>
    %cst_39 = arith.constant dense<0.000000e+00> : vector<64x128xf32>
    %49 = tpu.matmul %46, %48, %cst_39 {dimension_numbers = #tpu.dot_dimension_numbers<[1], [0], [0], [1], [0, 0, 1, 1], [], []>} : vector<64x128xbf16>, vector<128x128xbf16>, vector<64x128xf32> -> vector<64x128xf32>
    %50 = arith.addf %40, %49 : vector<64x128xf32>
    %c0_40 = arith.constant 0 : index
    %c2_41 = arith.constant 2 : index
    %c0_42 = arith.constant 0 : index
    %c0_43 = arith.constant 0 : index
    %c0_44 = arith.constant 0 : index
    %51 = vector.load %arg2[%c0_40, %c2_41, %c0_42, %c0_43, %c0_44] : memref<1x4x9x9x128xbf16, #tpu.memory_space<vmem>>, vector<1x1x8x9x128xbf16>
    %52 = vector.shape_cast %51 : vector<1x1x8x9x128xbf16> to vector<8x9x128xbf16>
    %53 = arith.extf %52 : vector<8x9x128xbf16> to vector<8x9x128xf32>
    %54 = vector.extract_strided_slice %53 {offsets = [0, 1, 0], sizes = [8, 8, 128], strides = [1, 1, 1]} : vector<8x9x128xf32> to vector<8x8x128xf32>
    %55 = vector.shape_cast %54 : vector<8x8x128xf32> to vector<64x128xf32>
    %56 = arith.truncf %55 : vector<64x128xf32> to vector<64x128xbf16>
    %c5 = arith.constant 5 : index
    %c0_45 = arith.constant 0 : index
    %c0_46 = arith.constant 0 : index
    %57 = vector.load %arg3[%c5, %c0_45, %c0_46] : memref<9x128x128xbf16, #tpu.memory_space<vmem>>, vector<1x128x128xbf16>
    %58 = vector.shape_cast %57 : vector<1x128x128xbf16> to vector<128x128xbf16>
    %cst_47 = arith.constant dense<0.000000e+00> : vector<64x128xf32>
    %59 = tpu.matmul %56, %58, %cst_47 {dimension_numbers = #tpu.dot_dimension_numbers<[1], [0], [0], [1], [0, 0, 1, 1], [], []>} : vector<64x128xbf16>, vector<128x128xbf16>, vector<64x128xf32> -> vector<64x128xf32>
    %60 = arith.addf %50, %59 : vector<64x128xf32>
    %c0_48 = arith.constant 0 : index
    %c0_49 = arith.constant 0 : index
    %c1_50 = arith.constant 1 : index
    %c0_51 = arith.constant 0 : index
    %c0_52 = arith.constant 0 : index
    %61 = vector.load %arg2[%c0_48, %c0_49, %c1_50, %c0_51, %c0_52] : memref<1x4x9x9x128xbf16, #tpu.memory_space<vmem>>, vector<1x1x8x9x128xbf16>
    %62 = vector.shape_cast %61 : vector<1x1x8x9x128xbf16> to vector<8x9x128xbf16>
    %63 = arith.extf %62 : vector<8x9x128xbf16> to vector<8x9x128xf32>
    %64 = vector.extract_strided_slice %63 {offsets = [0, 0, 0], sizes = [8, 8, 128], strides = [1, 1, 1]} : vector<8x9x128xf32> to vector<8x8x128xf32>
    %65 = vector.shape_cast %64 : vector<8x8x128xf32> to vector<64x128xf32>
    %66 = arith.truncf %65 : vector<64x128xf32> to vector<64x128xbf16>
    %c6 = arith.constant 6 : index
    %c0_53 = arith.constant 0 : index
    %c0_54 = arith.constant 0 : index
    %67 = vector.load %arg3[%c6, %c0_53, %c0_54] : memref<9x128x128xbf16, #tpu.memory_space<vmem>>, vector<1x128x128xbf16>
    %68 = vector.shape_cast %67 : vector<1x128x128xbf16> to vector<128x128xbf16>
    %cst_55 = arith.constant dense<0.000000e+00> : vector<64x128xf32>
    %69 = tpu.matmul %66, %68, %cst_55 {dimension_numbers = #tpu.dot_dimension_numbers<[1], [0], [0], [1], [0, 0, 1, 1], [], []>} : vector<64x128xbf16>, vector<128x128xbf16>, vector<64x128xf32> -> vector<64x128xf32>
    %70 = arith.addf %60, %69 : vector<64x128xf32>
    %c0_56 = arith.constant 0 : index
    %c1_57 = arith.constant 1 : index
    %c1_58 = arith.constant 1 : index
    %c0_59 = arith.constant 0 : index
    %c0_60 = arith.constant 0 : index
    %71 = vector.load %arg2[%c0_56, %c1_57, %c1_58, %c0_59, %c0_60] : memref<1x4x9x9x128xbf16, #tpu.memory_space<vmem>>, vector<1x1x8x9x128xbf16>
    %72 = vector.shape_cast %71 : vector<1x1x8x9x128xbf16> to vector<8x9x128xbf16>
    %73 = arith.extf %72 : vector<8x9x128xbf16> to vector<8x9x128xf32>
    %74 = vector.extract_strided_slice %73 {offsets = [0, 0, 0], sizes = [8, 8, 128], strides = [1, 1, 1]} : vector<8x9x128xf32> to vector<8x8x128xf32>
    %75 = vector.shape_cast %74 : vector<8x8x128xf32> to vector<64x128xf32>
    %76 = arith.truncf %75 : vector<64x128xf32> to vector<64x128xbf16>
    %c7 = arith.constant 7 : index
    %c0_61 = arith.constant 0 : index
    %c0_62 = arith.constant 0 : index
    %77 = vector.load %arg3[%c7, %c0_61, %c0_62] : memref<9x128x128xbf16, #tpu.memory_space<vmem>>, vector<1x128x128xbf16>
    %78 = vector.shape_cast %77 : vector<1x128x128xbf16> to vector<128x128xbf16>
    %cst_63 = arith.constant dense<0.000000e+00> : vector<64x128xf32>
    %79 = tpu.matmul %76, %78, %cst_63 {dimension_numbers = #tpu.dot_dimension_numbers<[1], [0], [0], [1], [0, 0, 1, 1], [], []>} : vector<64x128xbf16>, vector<128x128xbf16>, vector<64x128xf32> -> vector<64x128xf32>
    %80 = arith.addf %70, %79 : vector<64x128xf32>
    %c0_64 = arith.constant 0 : index
    %c0_65 = arith.constant 0 : index
    %c1_66 = arith.constant 1 : index
    %c0_67 = arith.constant 0 : index
    %c0_68 = arith.constant 0 : index
    %81 = vector.load %arg2[%c0_64, %c0_65, %c1_66, %c0_67, %c0_68] : memref<1x4x9x9x128xbf16, #tpu.memory_space<vmem>>, vector<1x1x8x9x128xbf16>
    %82 = vector.shape_cast %81 : vector<1x1x8x9x128xbf16> to vector<8x9x128xbf16>
    %83 = arith.extf %82 : vector<8x9x128xbf16> to vector<8x9x128xf32>
    %84 = vector.extract_strided_slice %83 {offsets = [0, 1, 0], sizes = [8, 8, 128], strides = [1, 1, 1]} : vector<8x9x128xf32> to vector<8x8x128xf32>
    %85 = vector.shape_cast %84 : vector<8x8x128xf32> to vector<64x128xf32>
    %86 = arith.truncf %85 : vector<64x128xf32> to vector<64x128xbf16>
    %c8 = arith.constant 8 : index
    %c0_69 = arith.constant 0 : index
    %c0_70 = arith.constant 0 : index
    %87 = vector.load %arg3[%c8, %c0_69, %c0_70] : memref<9x128x128xbf16, #tpu.memory_space<vmem>>, vector<1x128x128xbf16>
    %88 = vector.shape_cast %87 : vector<1x128x128xbf16> to vector<128x128xbf16>
    %cst_71 = arith.constant dense<0.000000e+00> : vector<64x128xf32>
    %89 = tpu.matmul %86, %88, %cst_71 {dimension_numbers = #tpu.dot_dimension_numbers<[1], [0], [0], [1], [0, 0, 1, 1], [], []>} : vector<64x128xbf16>, vector<128x128xbf16>, vector<64x128xf32> -> vector<64x128xf32>
    %90 = arith.addf %80, %89 : vector<64x128xf32>
    %c0_72 = arith.constant 0 : index
    %c0_73 = arith.constant 0 : index
    %91 = vector.load %arg4[%c0_72, %c0_73] : memref<1x128xf32, #tpu.memory_space<vmem>>, vector<1x128xf32>
    %92 = vector.broadcast %91 : vector<1x128xf32> to vector<64x128xf32>
    %93 = arith.addf %90, %92 : vector<64x128xf32>
    %cst_74 = arith.constant 0.000000e+00 : f32
    %94 = vector.broadcast %cst_74 : f32 to vector<64x128xf32>
    %95 = arith.maximumf %93, %94 : vector<64x128xf32>
    %96 = arith.truncf %95 : vector<64x128xf32> to vector<64x128xbf16>
    %c0_75 = arith.constant 0 : index
    %c0_76 = arith.constant 0 : index
    %c0_77 = arith.constant 0 : index
    %97 = vector.load %arg5[%c0_75, %c0_76, %c0_77] : memref<1x64x128xbf16, #tpu.memory_space<vmem>>, vector<1x64x128xbf16>
    %98 = vector.shape_cast %97 : vector<1x64x128xbf16> to vector<64x128xbf16>
    %99 = vector.shape_cast %96 : vector<64x128xbf16> to vector<1x64x128xbf16>
    tpu.vector_store %arg5[%c0_75, %c0_76, %c0_77], %99 {strides = array<i32>} : memref<1x64x128xbf16, #tpu.memory_space<vmem>>, vector<1x64x128xbf16>,
    return
  }
  func.func @transform_0(%arg0: i32, %arg1: i32) -> (i32, i32, i32, i32, i32) {
    %c0_i32 = arith.constant 0 : i32
    %c0_i32_0 = arith.constant 0 : i32
    %c0_i32_1 = arith.constant 0 : i32
    %c0_i32_2 = arith.constant 0 : i32
    %c0_i32_3 = arith.constant 0 : i32
    return %arg0, %c0_i32, %c0_i32_0, %c0_i32_1, %c0_i32_2 : i32, i32, i32, i32, i32
  }
  func.func @transform_1(%arg0: i32, %arg1: i32) -> (i32, i32, i32) {
    %c0_i32 = arith.constant 0 : i32
    %c0_i32_0 = arith.constant 0 : i32
    %c0_i32_1 = arith.constant 0 : i32
    return %c0_i32, %c0_i32_0, %arg1 : i32, i32, i32
  }
  func.func @transform_2(%arg0: i32, %arg1: i32) -> (i32, i32) {
    %c0_i32 = arith.constant 0 : i32
    %c0_i32_0 = arith.constant 0 : i32
    return %c0_i32, %arg1 : i32, i32
  }
  func.func @transform_3(%arg0: i32, %arg1: i32) -> (i32, i32, i32) {
    %c0_i32 = arith.constant 0 : i32
    %c0_i32_0 = arith.constant 0 : i32
    return %arg0, %c0_i32, %arg1 : i32, i32, i32
  }
}

module attributes {stable_mosaic.version = 11 : i64} {
  func.func @_gemm_kernel(%arg0: i32, %arg1: i32, %arg2: i32, %arg3: memref<128x128xbf16, #tpu.memory_space<vmem>>, %arg4: memref<128x128xbf16, #tpu.memory_space<vmem>>, %arg5: memref<1x128xf32, #tpu.memory_space<vmem>>, %arg6: memref<128x128xbf16, #tpu.memory_space<vmem>>, %arg7: memref<128x128xf32, #tpu.memory_space<vmem>>) attributes {dimension_semantics = [#tpu.dimension_semantics<parallel>, #tpu.dimension_semantics<parallel>, #tpu.dimension_semantics<arbitrary>], iteration_bounds = array<i64: 1, 1, 1>, scalar_prefetch = 0 : i64, scratch_operands = 1 : i64, tpu.core_type = #tpu.core_type<tc>, window_params = [{transform_indices = @transform_0, window_bounds = array<i64: 128, 128>}, {transform_indices = @transform_1, window_bounds = array<i64: 128, 128>}, {transform_indices = @transform_2, window_bounds = array<i64: 1, 128>}, {transform_indices = @transform_3, window_bounds = array<i64: 128, 128>}]} {
    %c0_i32 = arith.constant 0 : i32
    %0 = arith.cmpi eq, %arg2, %c0_i32 : i32
    %1 = arith.extui %0 : i1 to i32
    %c0_i32_0 = arith.constant 0 : i32
    %2 = arith.cmpi ne, %1, %c0_i32_0 : i32
    scf.if %2 {
      %cst_10 = arith.constant 0.000000e+00 : f32
      %12 = vector.broadcast %cst_10 : f32 to vector<128x128xf32>
      %c0_11 = arith.constant 0 : index
      %c0_12 = arith.constant 0 : index
      %13 = vector.load %arg7[%c0_11, %c0_12] : memref<128x128xf32, #tpu.memory_space<vmem>>, vector<128x128xf32>
      tpu.vector_store %arg7[%c0_11, %c0_12], %12 {strides = array<i32>} : memref<128x128xf32, #tpu.memory_space<vmem>>, vector<128x128xf32>,
    } else {
    }
    %c0 = arith.constant 0 : index
    %c0_1 = arith.constant 0 : index
    %3 = vector.load %arg7[%c0, %c0_1] : memref<128x128xf32, #tpu.memory_space<vmem>>, vector<128x128xf32>
    %c0_2 = arith.constant 0 : index
    %c0_3 = arith.constant 0 : index
    %4 = vector.load %arg3[%c0_2, %c0_3] : memref<128x128xbf16, #tpu.memory_space<vmem>>, vector<128x128xbf16>
    %c0_4 = arith.constant 0 : index
    %c0_5 = arith.constant 0 : index
    %5 = vector.load %arg4[%c0_4, %c0_5] : memref<128x128xbf16, #tpu.memory_space<vmem>>, vector<128x128xbf16>
    %cst = arith.constant dense<0.000000e+00> : vector<128x128xf32>
    %6 = tpu.matmul %4, %5, %cst {dimension_numbers = #tpu.dot_dimension_numbers<[1], [0], [0], [1], [0, 0, 1, 1], [], []>} : vector<128x128xbf16>, vector<128x128xbf16>, vector<128x128xf32> -> vector<128x128xf32>
    %7 = arith.addf %3, %6 : vector<128x128xf32>
    %c0_6 = arith.constant 0 : index
    %c0_7 = arith.constant 0 : index
    %8 = vector.load %arg7[%c0_6, %c0_7] : memref<128x128xf32, #tpu.memory_space<vmem>>, vector<128x128xf32>
    tpu.vector_store %arg7[%c0_6, %c0_7], %7 {strides = array<i32>} : memref<128x128xf32, #tpu.memory_space<vmem>>, vector<128x128xf32>,
    %c0_i32_8 = arith.constant 0 : i32
    %9 = arith.cmpi eq, %arg2, %c0_i32_8 : i32
    %10 = arith.extui %9 : i1 to i32
    %c0_i32_9 = arith.constant 0 : i32
    %11 = arith.cmpi ne, %10, %c0_i32_9 : i32
    scf.if %11 {
      %c0_10 = arith.constant 0 : index
      %c0_11 = arith.constant 0 : index
      %12 = vector.load %arg7[%c0_10, %c0_11] : memref<128x128xf32, #tpu.memory_space<vmem>>, vector<128x128xf32>
      %c0_12 = arith.constant 0 : index
      %c0_13 = arith.constant 0 : index
      %13 = vector.load %arg5[%c0_12, %c0_13] : memref<1x128xf32, #tpu.memory_space<vmem>>, vector<1x128xf32>
      %14 = vector.broadcast %13 : vector<1x128xf32> to vector<128x128xf32>
      %15 = arith.addf %12, %14 : vector<128x128xf32>
      %16 = arith.truncf %15 : vector<128x128xf32> to vector<128x128xbf16>
      %c0_14 = arith.constant 0 : index
      %c0_15 = arith.constant 0 : index
      %17 = vector.load %arg6[%c0_14, %c0_15] : memref<128x128xbf16, #tpu.memory_space<vmem>>, vector<128x128xbf16>
      tpu.vector_store %arg6[%c0_14, %c0_15], %16 {strides = array<i32>} : memref<128x128xbf16, #tpu.memory_space<vmem>>, vector<128x128xbf16>,
    } else {
    }
    return
  }
  func.func @transform_0(%arg0: i32, %arg1: i32, %arg2: i32) -> (i32, i32) {
    %c0_i32 = arith.constant 0 : i32
    return %arg0, %arg2 : i32, i32
  }
  func.func @transform_1(%arg0: i32, %arg1: i32, %arg2: i32) -> (i32, i32) {
    %c0_i32 = arith.constant 0 : i32
    return %arg2, %arg1 : i32, i32
  }
  func.func @transform_2(%arg0: i32, %arg1: i32, %arg2: i32) -> (i32, i32) {
    %c0_i32 = arith.constant 0 : i32
    %c0_i32_0 = arith.constant 0 : i32
    return %c0_i32, %arg1 : i32, i32
  }
  func.func @transform_3(%arg0: i32, %arg1: i32, %arg2: i32) -> (i32, i32) {
    %c0_i32 = arith.constant 0 : i32
    return %arg0, %arg1 : i32, i32
  }
}

module attributes {stable_mosaic.version = 11 : i64} {
  func.func @_gemm_res_kernel(%arg0: i32, %arg1: i32, %arg2: i32, %arg3: memref<128x128xbf16, #tpu.memory_space<vmem>>, %arg4: memref<128x128xbf16, #tpu.memory_space<vmem>>, %arg5: memref<1x128xf32, #tpu.memory_space<vmem>>, %arg6: memref<128x128xbf16, #tpu.memory_space<vmem>>, %arg7: memref<128x128xf32, #tpu.memory_space<vmem>>, %arg8: memref<128x128xf32, #tpu.memory_space<vmem>>) attributes {dimension_semantics = [#tpu.dimension_semantics<parallel>, #tpu.dimension_semantics<parallel>, #tpu.dimension_semantics<arbitrary>], iteration_bounds = array<i64: 1, 1, 1>, scalar_prefetch = 0 : i64, scratch_operands = 1 : i64, tpu.core_type = #tpu.core_type<tc>, window_params = [{transform_indices = @transform_0, window_bounds = array<i64: 128, 128>}, {transform_indices = @transform_1, window_bounds = array<i64: 128, 128>}, {transform_indices = @transform_2, window_bounds = array<i64: 1, 128>}, {transform_indices = @transform_3, window_bounds = array<i64: 128, 128>}, {transform_indices = @transform_4, window_bounds = array<i64: 128, 128>}]} {
    %c0_i32 = arith.constant 0 : i32
    %0 = arith.cmpi eq, %arg2, %c0_i32 : i32
    %1 = arith.extui %0 : i1 to i32
    %c0_i32_0 = arith.constant 0 : i32
    %2 = arith.cmpi ne, %1, %c0_i32_0 : i32
    scf.if %2 {
      %cst_10 = arith.constant 0.000000e+00 : f32
      %12 = vector.broadcast %cst_10 : f32 to vector<128x128xf32>
      %c0_11 = arith.constant 0 : index
      %c0_12 = arith.constant 0 : index
      %13 = vector.load %arg8[%c0_11, %c0_12] : memref<128x128xf32, #tpu.memory_space<vmem>>, vector<128x128xf32>
      tpu.vector_store %arg8[%c0_11, %c0_12], %12 {strides = array<i32>} : memref<128x128xf32, #tpu.memory_space<vmem>>, vector<128x128xf32>,
    } else {
    }
    %c0 = arith.constant 0 : index
    %c0_1 = arith.constant 0 : index
    %3 = vector.load %arg8[%c0, %c0_1] : memref<128x128xf32, #tpu.memory_space<vmem>>, vector<128x128xf32>
    %c0_2 = arith.constant 0 : index
    %c0_3 = arith.constant 0 : index
    %4 = vector.load %arg3[%c0_2, %c0_3] : memref<128x128xbf16, #tpu.memory_space<vmem>>, vector<128x128xbf16>
    %c0_4 = arith.constant 0 : index
    %c0_5 = arith.constant 0 : index
    %5 = vector.load %arg4[%c0_4, %c0_5] : memref<128x128xbf16, #tpu.memory_space<vmem>>, vector<128x128xbf16>
    %cst = arith.constant dense<0.000000e+00> : vector<128x128xf32>
    %6 = tpu.matmul %4, %5, %cst {dimension_numbers = #tpu.dot_dimension_numbers<[1], [0], [0], [1], [0, 0, 1, 1], [], []>} : vector<128x128xbf16>, vector<128x128xbf16>, vector<128x128xf32> -> vector<128x128xf32>
    %7 = arith.addf %3, %6 : vector<128x128xf32>
    %c0_6 = arith.constant 0 : index
    %c0_7 = arith.constant 0 : index
    %8 = vector.load %arg8[%c0_6, %c0_7] : memref<128x128xf32, #tpu.memory_space<vmem>>, vector<128x128xf32>
    tpu.vector_store %arg8[%c0_6, %c0_7], %7 {strides = array<i32>} : memref<128x128xf32, #tpu.memory_space<vmem>>, vector<128x128xf32>,
    %c0_i32_8 = arith.constant 0 : i32
    %9 = arith.cmpi eq, %arg2, %c0_i32_8 : i32
    %10 = arith.extui %9 : i1 to i32
    %c0_i32_9 = arith.constant 0 : i32
    %11 = arith.cmpi ne, %10, %c0_i32_9 : i32
    scf.if %11 {
      %c0_10 = arith.constant 0 : index
      %c0_11 = arith.constant 0 : index
      %12 = vector.load %arg8[%c0_10, %c0_11] : memref<128x128xf32, #tpu.memory_space<vmem>>, vector<128x128xf32>
      %c0_12 = arith.constant 0 : index
      %c0_13 = arith.constant 0 : index
      %13 = vector.load %arg5[%c0_12, %c0_13] : memref<1x128xf32, #tpu.memory_space<vmem>>, vector<1x128xf32>
      %14 = vector.broadcast %13 : vector<1x128xf32> to vector<128x128xf32>
      %15 = arith.addf %12, %14 : vector<128x128xf32>
      %c0_14 = arith.constant 0 : index
      %c0_15 = arith.constant 0 : index
      %16 = vector.load %arg6[%c0_14, %c0_15] : memref<128x128xbf16, #tpu.memory_space<vmem>>, vector<128x128xbf16>
      %17 = arith.extf %16 : vector<128x128xbf16> to vector<128x128xf32>
      %18 = arith.addf %15, %17 : vector<128x128xf32>
      %cst_16 = arith.constant 0.000000e+00 : f32
      %19 = vector.broadcast %cst_16 : f32 to vector<128x128xf32>
      %20 = arith.maximumf %18, %19 : vector<128x128xf32>
      %c0_17 = arith.constant 0 : index
      %c0_18 = arith.constant 0 : index
      %21 = vector.load %arg7[%c0_17, %c0_18] : memref<128x128xf32, #tpu.memory_space<vmem>>, vector<128x128xf32>
      tpu.vector_store %arg7[%c0_17, %c0_18], %20 {strides = array<i32>} : memref<128x128xf32, #tpu.memory_space<vmem>>, vector<128x128xf32>,
    } else {
    }
    return
  }
  func.func @transform_0(%arg0: i32, %arg1: i32, %arg2: i32) -> (i32, i32) {
    %c0_i32 = arith.constant 0 : i32
    return %arg0, %arg2 : i32, i32
  }
  func.func @transform_1(%arg0: i32, %arg1: i32, %arg2: i32) -> (i32, i32) {
    %c0_i32 = arith.constant 0 : i32
    return %arg2, %arg1 : i32, i32
  }
  func.func @transform_2(%arg0: i32, %arg1: i32, %arg2: i32) -> (i32, i32) {
    %c0_i32 = arith.constant 0 : i32
    %c0_i32_0 = arith.constant 0 : i32
    return %c0_i32, %arg1 : i32, i32
  }
  func.func @transform_3(%arg0: i32, %arg1: i32, %arg2: i32) -> (i32, i32) {
    %c0_i32 = arith.constant 0 : i32
    return %arg0, %arg1 : i32, i32
  }
  func.func @transform_4(%arg0: i32, %arg1: i32, %arg2: i32) -> (i32, i32) {
    %c0_i32 = arith.constant 0 : i32
    return %arg0, %arg1 : i32, i32
  }
}

</mosaic_0001>

<llo_original>
// kernel: bottleneck_forward.5
$region0: #{bottleneck_forward.5}
  #allocation0 [shape = 'u32[]', space=smem, size = 0x4, offset = 0x4, fixed_abs, tag = 'smem constant byte address 0x4 - core index']
  #allocation1 [shape = 'u32[144,128]{1,0:T(1,128)}', space=vmem, size = 0x12000, scoped, tag = 'internal scratch']
  #allocation2 [shape = 'f32[256,128]{1,0:T(8,128)}', space=vmem, size = 0x20000, scoped, tag = 'scratch operand']
  %s0 = inlined_call_operand.vmem [shape: bf16[512,128], index: 0, kind: input, shape index: {}]
  %s1 = inlined_call_operand.vmem [shape: bf16[128,128], index: 1, kind: input, shape index: {}]
  %s2 = inlined_call_operand.vmem [shape: f32[1,128], index: 2, kind: input, shape index: {}]
  %s3 = inlined_call_operand.vmem [shape: bf16[512,128], index: 3, kind: output, shape index: {}]
  %s4 = sld [smem:[#allocation0]]
  $region53: #{bottleneck_forward.5} parent=0
    _
  %s6 = ssub.s32 1, %s4
  %s7 = scalar_select 0, %s6, %s4
  loop: start=0, step=1, limit=4
  $region2: #{bottleneck_forward.5} parent=0 // loop_pre_header
    _
  $region3: #{bottleneck_forward.5} parent=0 // loop_header
    %s9 = sphi 0, %s13
    %p10 = scmp.ge.s32.totalorder %s9, 4
    %s16 = sphi 0, %s35
    %s17 = sphi 0, %s31
    %s18 = sphi 0, %s27
    %s19 = sphi 0, %s16
    %s20 = sphi 0, %s17
    %s21 = sphi 0, %s18
    %s22 = sphi 0, %s19
    %s23 = sphi 0, %s20
    %s24 = sphi 0, %s21
    %s40 = sphi 0, %s42
    %s43 = sphi 0, %s40
    %s44 = sphi 0, %s43
    %s60 = sphi 0, %s44
    %s68 = sphi 0, %s70
    %s71 = sphi 0, %s68
    %s72 = sphi 0, %s71
    %s88 = sphi 0, %s72
    %s94 = sphi 0, %s96
    %s97 = sphi 0, %s94
    %s98 = sphi 0, %s97
    %s114 = sphi 0, %s98
    %s122 = sphi 0, %s124
    %s125 = sphi 0, %s122
    %s126 = sphi 0, %s125
    %s142 = sphi 0, %s126
  $region4: #{bottleneck_forward.5} parent=0 // loop_header_branch
    %12 = sbr.rel (%p10) target = $region8
  $region5: #{bottleneck_forward.5} parent=0 // loop_body
    %s14 = ssub.s32 %s9, 1
    %s15 = ssub.s32 %s9, 2
    %s25 = sadd.s32 1, %s18
    %p26 = scmp.ge.s32.totalorder %s25, 1
    %s27 = scalar_select %p26, 0, %s25
    %s28 = sadd.s32 1, %s17
    %s29 = scalar_select %p26, %s28, %s17
    %p30 = scmp.ge.s32.totalorder %s29, 1
    %s31 = scalar_select %p30, 0, %s29
    %s32 = sadd.s32 1, %s16
    %s33 = scalar_select %p30, %s32, %s16
    %p34 = scmp.ge.s32.totalorder %s33, 2
    %s35 = scalar_select %p34, 0, %s33
    %s36 = ssub.s32 %s16, %s35
    %s37 = ssub.s32 %s18, %s27
    %s38 = sor.u32 %s36, %s37
    %p39 = scmp.eq.s32.totalorder %s38, 0
    %s41 = sadd.s32 %s40, 1
    %s42 = scalar_select %p39, %s40, %s41
    %p45 = pneg %p39
    %p46 = scmp.eq.s32.totalorder %s9, 1
    %p47 = por %p45, %p46
    %p48 = scmp.ne.s32.totalorder %s40, %s43
    %p49 = scmp.eq.s32.totalorder %s9, 0
    %p50 = por %p48, %p49
    %p51 = scmp.ne.s32.totalorder %s40, %s43
    %p52 = scmp.eq.s32.totalorder %s14, 1
    %p53 = por %p51, %p52
    %p54 = scmp.ne.s32.totalorder %s43, %s44
    %p55 = scmp.eq.s32.totalorder %s14, 0
    %p56 = por %p54, %p55
    %p57 = scmp.ne.s32.totalorder %s43, %s44
    %p58 = scmp.eq.s32.totalorder %s15, 1
    %p59 = por %p57, %p58
    %p61 = scmp.ne.s32.totalorder %s44, %s60
    %p62 = scmp.eq.s32.totalorder %s15, 0
    %p63 = por %p61, %p62
    %s64 = ssub.s32 %s18, %s27
    %s65 = ssub.s32 %s17, %s31
    %s66 = sor.u32 %s64, %s65
    %p67 = scmp.eq.s32.totalorder %s66, 0
    %s69 = sadd.s32 %s68, 1
    %s70 = scalar_select %p67, %s68, %s69
    %p73 = pneg %p67
    %p74 = scmp.eq.s32.totalorder %s9, 1
    %p75 = por %p73, %p74
    %p76 = scmp.ne.s32.totalorder %s68, %s71
    %p77 = scmp.eq.s32.totalorder %s9, 0
    %p78 = por %p76, %p77
    %p79 = scmp.ne.s32.totalorder %s68, %s71
    %p80 = scmp.eq.s32.totalorder %s14, 1
    %p81 = por %p79, %p80
    %p82 = scmp.ne.s32.totalorder %s71, %s72
    %p83 = scmp.eq.s32.totalorder %s14, 0
    %p84 = por %p82, %p83
    %p85 = scmp.ne.s32.totalorder %s71, %s72
    %p86 = scmp.eq.s32.totalorder %s15, 1
    %p87 = por %p85, %p86
    %p89 = scmp.ne.s32.totalorder %s72, %s88
    %p90 = scmp.eq.s32.totalorder %s15, 0
    %p91 = por %p89, %p90
    %s92 = ssub.s32 %s17, %s31
    %p93 = scmp.eq.s32.totalorder %s92, 0
    %s95 = sadd.s32 %s94, 1
    %s96 = scalar_select %p93, %s94, %s95
    %p99 = pneg %p93
    %p100 = scmp.eq.s32.totalorder %s9, 1
    %p101 = por %p99, %p100
    %p102 = scmp.ne.s32.totalorder %s94, %s97
    %p103 = scmp.eq.s32.totalorder %s9, 0
    %p104 = por %p102, %p103
    %p105 = scmp.ne.s32.totalorder %s94, %s97
    %p106 = scmp.eq.s32.totalorder %s14, 1
    %p107 = por %p105, %p106
    %p108 = scmp.ne.s32.totalorder %s97, %s98
    %p109 = scmp.eq.s32.totalorder %s14, 0
    %p110 = por %p108, %p109
    %p111 = scmp.ne.s32.totalorder %s97, %s98
    %p112 = scmp.eq.s32.totalorder %s15, 1
    %p113 = por %p111, %p112
    %p115 = scmp.ne.s32.totalorder %s98, %s114
    %p116 = scmp.eq.s32.totalorder %s15, 0
    %p117 = por %p115, %p116
    %s118 = ssub.s32 %s16, %s35
    %s119 = ssub.s32 %s17, %s31
    %s120 = sor.u32 %s118, %s119
    %p121 = scmp.eq.s32.totalorder %s120, 0
    %s123 = sadd.s32 %s122, 1
    %s124 = scalar_select %p121, %s122, %s123
    %p127 = pneg %p121
    %p128 = scmp.eq.s32.totalorder %s9, 1
    %p129 = por %p127, %p128
    %p130 = scmp.ne.s32.totalorder %s122, %s125
    %p131 = scmp.eq.s32.totalorder %s9, 0
    %p132 = por %p130, %p131
    %p133 = scmp.ne.s32.totalorder %s122, %s125
    %p134 = scmp.eq.s32.totalorder %s14, 1
    %p135 = por %p133, %p134
    %p136 = scmp.ne.s32.totalorder %s125, %s126
    %p137 = scmp.eq.s32.totalorder %s14, 0
    %p138 = por %p136, %p137
    %p139 = scmp.ne.s32.totalorder %s125, %s126
    %p140 = scmp.eq.s32.totalorder %s15, 1
    %p141 = por %p139, %p140
    %p143 = scmp.ne.s32.totalorder %s126, %s142
    %p144 = scmp.eq.s32.totalorder %s15, 0
    %p145 = por %p143, %p144
    %p146 = scmp.le.s32.totalorder 1, %s9
    %p147 = scmp.lt.s32.totalorder %s9, 3
    %p148 = pnand %p146, %p147
    %p149 = pneg %p148
    // Predicated region
    $region9: #{bottleneck_forward.5} parent=5 // pred_check
      _
    $region10: #{bottleneck_forward.5} parent=5 // pred_check_branch
      %151 = sbr.rel (%p148) target = $region12
    $region11: #{bottleneck_forward.5} parent=5 // pred_region
      %s152 = ssub.s32 %s9, 1
      // Predicated region
      $region13: #{bottleneck_forward.5} parent=11 // pred_check
        %p153 = pneg %p84
      $region14: #{bottleneck_forward.5} parent=11 // pred_check_branch
        %155 = sbr.rel (%p153) target = $region16
      $region15: #{bottleneck_forward.5} parent=11 // pred_region
        %s156 = smul.u32 16, %s21
        %p157 = scmp.lt.s32.totalorder %s156, 15
        %s158 = scalar_select %p157, %s156, 15
        %p159 = scmp.lt.s32.totalorder %s20, 0
        %s160 = scalar_select %p159, %s20, 0
        %s161 = sadd.s32 %s160, %s158
        %s162 = smul.addr %s161, 4
        %s163 = scalar_lea.vmem %s1, %s162
        %s164 = smul.u32 16, %s21
      $region16: #{bottleneck_forward.5} parent=11 // pred_fallthru
        _
      // Predicated region
      $region17: #{bottleneck_forward.5} parent=11 // pred_check
        %p165 = pneg %p110
      $region18: #{bottleneck_forward.5} parent=11 // pred_check_branch
        %167 = sbr.rel (%p165) target = $region20
      $region19: #{bottleneck_forward.5} parent=11 // pred_region
        %p168 = scmp.lt.s32.totalorder %s20, 0
        %s169 = scalar_select %p168, %s20, 0
        %s170 = scalar_lea.vmem %s2, %s169
      $region20: #{bottleneck_forward.5} parent=11 // pred_fallthru
        _
    $region12: #{bottleneck_forward.5} parent=5 // pred_fallthru
      _
    %p171 = scmp.lt.s32.totalorder %s9, 2
    // Predicated region
    $region21: #{bottleneck_forward.5} parent=5 // pred_check
      %p172 = pneg %p171
    $region22: #{bottleneck_forward.5} parent=5 // pred_check_branch
      %174 = sbr.rel (%p172) target = $region24
    $region23: #{bottleneck_forward.5} parent=5 // pred_region
      // Predicated region
      $region25: #{bottleneck_forward.5} parent=23 // pred_check
        %p175 = pneg %p50
      $region26: #{bottleneck_forward.5} parent=23 // pred_check_branch
        %177 = sbr.rel (%p175) target = $region28
      $region27: #{bottleneck_forward.5} parent=23 // pred_region
        %s178 = smul.u32 32, %s16
        %p179 = scmp.lt.s32.totalorder %s178, 63
        %s180 = scalar_select %p179, %s178, 63
        %p181 = scmp.lt.s32.totalorder %s18, 0
        %s182 = scalar_select %p181, %s18, 0
        %s183 = sadd.s32 %s182, %s180
        %s184 = smul.addr %s183, 4
        %s185 = scalar_lea.vmem %s0, %s184
        %s186 = smul.u32 32, %s16
      $region28: #{bottleneck_forward.5} parent=23 // pred_fallthru
        _
    $region24: #{bottleneck_forward.5} parent=5 // pred_fallthru
      _
    %p187 = scmp.le.s32.totalorder 1, %s9
    %p188 = scmp.lt.s32.totalorder %s9, 3
    %p189 = pnand %p187, %p188
    %p190 = pneg %p189
    // Predicated region
    $region29: #{bottleneck_forward.5} parent=5 // pred_check
      _
    $region30: #{bottleneck_forward.5} parent=5 // pred_check_branch
      %192 = sbr.rel (%p189) target = $region32
    $region31: #{bottleneck_forward.5} parent=5 // pred_region
      %s193 = ssub.s32 %s9, 1
      %s194 = smul.u32 32, %s19
      %p195 = scmp.lt.s32.totalorder %s194, 63
      %s196 = scalar_select %p195, %s194, 63
      %p197 = scmp.lt.s32.totalorder %s21, 0
      %s198 = scalar_select %p197, %s21, 0
      %s199 = sadd.s32 %s198, %s196
      %s200 = smul.addr %s199, 4
      %s201 = scalar_lea.vmem %s0, %s200
      %p202 = pneg %p56
      %p203 = pneg %p53
      %s204 = smul.u32 16, %s21
      %p205 = scmp.lt.s32.totalorder %s204, 15
      %s206 = scalar_select %p205, %s204, 15
      %p207 = scmp.lt.s32.totalorder %s20, 0
      %s208 = scalar_select %p207, %s20, 0
      %s209 = sadd.s32 %s208, %s206
      %s210 = smul.addr %s209, 4
      %s211 = scalar_lea.vmem %s1, %s210
      %p212 = pneg %p84
      %p213 = pneg %p81
      %p214 = scmp.lt.s32.totalorder %s20, 0
      %s215 = scalar_select %p214, %s20, 0
      %s216 = scalar_lea.vmem %s2, %s215
      %p217 = pneg %p110
      %p218 = pneg %p107
      %p219 = pneg %p138
      %p220 = pneg %p135
      %s221 = smul.u32 32, %s19
      %p222 = scmp.lt.s32.totalorder %s221, 63
      %s223 = scalar_select %p222, %s221, 63
      %p224 = scmp.lt.s32.totalorder %s20, 0
      %s225 = scalar_select %p224, %s20, 0
      %s226 = sadd.s32 %s225, %s223
      %s227 = smul.addr %s226, 4
      %s228 = scalar_lea.vmem %s3, %s227
      %s229 = smul.u32 32, %s19
      %p230 = scmp.lt.s32.totalorder %s229, 63
      %s231 = scalar_select %p230, %s229, 63
      %p232 = scmp.lt.s32.totalorder %s21, 0
      %s233 = scalar_select %p232, %s21, 0
      %s234 = sadd.s32 %s233, %s231
      %s235 = smul.addr %s234, 4
      %s236 = scalar_lea.vmem %s0, %s235
      %s237 = smul.u32 32, %s19
      %s238 = smul.u32 16, %s21
      %p239 = scmp.lt.s32.totalorder %s238, 15
      %s240 = scalar_select %p239, %s238, 15
      %p241 = scmp.lt.s32.totalorder %s20, 0
      %s242 = scalar_select %p241, %s20, 0
      %s243 = sadd.s32 %s242, %s240
      %s244 = smul.addr %s243, 4
      %s245 = scalar_lea.vmem %s1, %s244
      %s246 = smul.u32 16, %s21
      %p247 = scmp.lt.s32.totalorder %s20, 0
      %s248 = scalar_select %p247, %s20, 0
      %s249 = scalar_lea.vmem %s2, %s248
      %s250 = smul.u32 32, %s19
      %p251 = scmp.lt.s32.totalorder %s250, 63
      %s252 = scalar_select %p251, %s250, 63
      %p253 = scmp.lt.s32.totalorder %s20, 0
      %s254 = scalar_select %p253, %s20, 0
      %s255 = sadd.s32 %s254, %s252
      %s256 = smul.addr %s255, 4
      %s257 = scalar_lea.vmem %s3, %s256
      %s258 = smul.u32 32, %s19
      %p260 = scmp.eq.s32.totalorder %s21, 0
      // Predicated region
      $region33: #{bottleneck_forward.5} parent=31 // pred_check
        %p261 = pneg %p260
      $region34: #{bottleneck_forward.5} parent=31 // pred_check_branch
        %263 = sbr.rel (%p261) target = $region36
      $region35: #{bottleneck_forward.5} parent=31 // pred_region
        %264 = vst [vmem:[#allocation2] sm:$0xff] 0.0
        %265 = vst [vmem:[#allocation2 + $0x8] sm:$0xff] 0.0
        %266 = vst [vmem:[#allocation2 + $0x10] sm:$0xff] 0.0
        %267 = vst [vmem:[#allocation2 + $0x18] sm:$0xff] 0.0
        %268 = vst [vmem:[#allocation2 + $0x20] sm:$0xff] 0.0
        %269 = vst [vmem:[#allocation2 + $0x28] sm:$0xff] 0.0
        %270 = vst [vmem:[#allocation2 + $0x30] sm:$0xff] 0.0
        %271 = vst [vmem:[#allocation2 + $0x38] sm:$0xff] 0.0
        %272 = vst [vmem:[#allocation2 + $0x40] sm:$0xff] 0.0
        %273 = vst [vmem:[#allocation2 + $0x48] sm:$0xff] 0.0
        %274 = vst [vmem:[#allocation2 + $0x50] sm:$0xff] 0.0
        %275 = vst [vmem:[#allocation2 + $0x58] sm:$0xff] 0.0
        %276 = vst [vmem:[#allocation2 + $0x60] sm:$0xff] 0.0
        %277 = vst [vmem:[#allocation2 + $0x68] sm:$0xff] 0.0
        %278 = vst [vmem:[#allocation2 + $0x70] sm:$0xff] 0.0
        %279 = vst [vmem:[#allocation2 + $0x78] sm:$0xff] 0.0
        %280 = vst [vmem:[#allocation2 + $0x80] sm:$0xff] 0.0
        %281 = vst [vmem:[#allocation2 + $0x88] sm:$0xff] 0.0
        %282 = vst [vmem:[#allocation2 + $0x90] sm:$0xff] 0.0
        %283 = vst [vmem:[#allocation2 + $0x98] sm:$0xff] 0.0
        %284 = vst [vmem:[#allocation2 + $0xa0] sm:$0xff] 0.0
        %285 = vst [vmem:[#allocation2 + $0xa8] sm:$0xff] 0.0
        %286 = vst [vmem:[#allocation2 + $0xb0] sm:$0xff] 0.0
        %287 = vst [vmem:[#allocation2 + $0xb8] sm:$0xff] 0.0
        %288 = vst [vmem:[#allocation2 + $0xc0] sm:$0xff] 0.0
        %289 = vst [vmem:[#allocation2 + $0xc8] sm:$0xff] 0.0
        %290 = vst [vmem:[#allocation2 + $0xd0] sm:$0xff] 0.0
        %291 = vst [vmem:[#allocation2 + $0xd8] sm:$0xff] 0.0
        %292 = vst [vmem:[#allocation2 + $0xe0] sm:$0xff] 0.0
        %293 = vst [vmem:[#allocation2 + $0xe8] sm:$0xff] 0.0
        %294 = vst [vmem:[#allocation2 + $0xf0] sm:$0xff] 0.0
        %295 = vst [vmem:[#allocation2 + $0xf8] sm:$0xff] 0.0
      $region36: #{bottleneck_forward.5} parent=31 // pred_fallthru
        _
      %v296 = vld [vmem:[#allocation2] sm:$0xff]
      %v297 = vld [vmem:[#allocation2 + $0x8] sm:$0xff]
      %v298 = vld [vmem:[#allocation2 + $0x10] sm:$0xff]
      %v299 = vld [vmem:[#allocation2 + $0x18] sm:$0xff]
      %v300 = vld [vmem:[#allocation2 + $0x20] sm:$0xff]
      %v301 = vld [vmem:[#allocation2 + $0x28] sm:$0xff]
      %v302 = vld [vmem:[#allocation2 + $0x30] sm:$0xff]
      %v303 = vld [vmem:[#allocation2 + $0x38] sm:$0xff]
      %v304 = vld [vmem:[#allocation2 + $0x40] sm:$0xff]
      %v305 = vld [vmem:[#allocation2 + $0x48] sm:$0xff]
      %v306 = vld [vmem:[#allocation2 + $0x50] sm:$0xff]
      %v307 = vld [vmem:[#allocation2 + $0x58] sm:$0xff]
      %v308 = vld [vmem:[#allocation2 + $0x60] sm:$0xff]
      %v309 = vld [vmem:[#allocation2 + $0x68] sm:$0xff]
      %v310 = vld [vmem:[#allocation2 + $0x70] sm:$0xff]
      %v311 = vld [vmem:[#allocation2 + $0x78] sm:$0xff]
      %v312 = vld [vmem:[#allocation2 + $0x80] sm:$0xff]
      %v313 = vld [vmem:[#allocation2 + $0x88] sm:$0xff]
      %v314 = vld [vmem:[#allocation2 + $0x90] sm:$0xff]
      %v315 = vld [vmem:[#allocation2 + $0x98] sm:$0xff]
      %v316 = vld [vmem:[#allocation2 + $0xa0] sm:$0xff]
      %v317 = vld [vmem:[#allocation2 + $0xa8] sm:$0xff]
      %v318 = vld [vmem:[#allocation2 + $0xb0] sm:$0xff]
      %v319 = vld [vmem:[#allocation2 + $0xb8] sm:$0xff]
      %v320 = vld [vmem:[#allocation2 + $0xc0] sm:$0xff]
      %v321 = vld [vmem:[#allocation2 + $0xc8] sm:$0xff]
      %v322 = vld [vmem:[#allocation2 + $0xd0] sm:$0xff]
      %v323 = vld [vmem:[#allocation2 + $0xd8] sm:$0xff]
      %v324 = vld [vmem:[#allocation2 + $0xe0] sm:$0xff]
      %v325 = vld [vmem:[#allocation2 + $0xe8] sm:$0xff]
      %v326 = vld [vmem:[#allocation2 + $0xf0] sm:$0xff]
      %v327 = vld [vmem:[#allocation2 + $0xf8] sm:$0xff]
      %v328 = vld [vmem:[%s236] sm:$0xf]
      %v329 = vld [vmem:[%s236 + $0x4] sm:$0xf]
      %v330 = vld [vmem:[%s236 + $0x8] sm:$0xf]
      %v331 = vld [vmem:[%s236 + $0xc] sm:$0xf]
      %v332 = vld [vmem:[%s236 + $0x10] sm:$0xf]
      %v333 = vld [vmem:[%s236 + $0x14] sm:$0xf]
      %v334 = vld [vmem:[%s236 + $0x18] sm:$0xf]
      %v335 = vld [vmem:[%s236 + $0x1c] sm:$0xf]
      %v336 = vld [vmem:[%s236 + $0x20] sm:$0xf]
      %v337 = vld [vmem:[%s236 + $0x24] sm:$0xf]
      %v338 = vld [vmem:[%s236 + $0x28] sm:$0xf]
      %v339 = vld [vmem:[%s236 + $0x2c] sm:$0xf]
      %v340 = vld [vmem:[%s236 + $0x30] sm:$0xf]
      %v341 = vld [vmem:[%s236 + $0x34] sm:$0xf]
      %v342 = vld [vmem:[%s236 + $0x38] sm:$0xf]
      %v343 = vld [vmem:[%s236 + $0x3c] sm:$0xf]
      %v344 = vld [vmem:[%s236 + $0x40] sm:$0xf]
      %v345 = vld [vmem:[%s236 + $0x44] sm:$0xf]
      %v346 = vld [vmem:[%s236 + $0x48] sm:$0xf]
      %v347 = vld [vmem:[%s236 + $0x4c] sm:$0xf]
      %v348 = vld [vmem:[%s236 + $0x50] sm:$0xf]
      %v349 = vld [vmem:[%s236 + $0x54] sm:$0xf]
      %v350 = vld [vmem:[%s236 + $0x58] sm:$0xf]
      %v351 = vld [vmem:[%s236 + $0x5c] sm:$0xf]
      %v352 = vld [vmem:[%s236 + $0x60] sm:$0xf]
      %v353 = vld [vmem:[%s236 + $0x64] sm:$0xf]
      %v354 = vld [vmem:[%s236 + $0x68] sm:$0xf]
      %v355 = vld [vmem:[%s236 + $0x6c] sm:$0xf]
      %v356 = vld [vmem:[%s236 + $0x70] sm:$0xf]
      %v357 = vld [vmem:[%s236 + $0x74] sm:$0xf]
      %v358 = vld [vmem:[%s236 + $0x78] sm:$0xf]
      %v359 = vld [vmem:[%s236 + $0x7c] sm:$0xf]
      %v360 = vld [vmem:[%s245] sm:$0xf]
      %v361 = vld [vmem:[%s245 + $0x4] sm:$0xf]
      %v362 = vld [vmem:[%s245 + $0x8] sm:$0xf]
      %v363 = vld [vmem:[%s245 + $0xc] sm:$0xf]
      %v364 = vld [vmem:[%s245 + $0x10] sm:$0xf]
      %v365 = vld [vmem:[%s245 + $0x14] sm:$0xf]
      %v366 = vld [vmem:[%s245 + $0x18] sm:$0xf]
      %v367 = vld [vmem:[%s245 + $0x1c] sm:$0xf]
      %v368 = vld [vmem:[%s245 + $0x20] sm:$0xf]
      %v369 = vld [vmem:[%s245 + $0x24] sm:$0xf]
      %v370 = vld [vmem:[%s245 + $0x28] sm:$0xf]
      %v371 = vld [vmem:[%s245 + $0x2c] sm:$0xf]
      %v372 = vld [vmem:[%s245 + $0x30] sm:$0xf]
      %v373 = vld [vmem:[%s245 + $0x34] sm:$0xf]
      %v374 = vld [vmem:[%s245 + $0x38] sm:$0xf]
      %v375 = vld [vmem:[%s245 + $0x3c] sm:$0xf]
      %v408 = vunpack.c.l.b16 %v328
      %v409 = vunpack.c.l.b16 %v329
      %v410 = vunpack.c.l.b16 %v330
      %v411 = vunpack.c.l.b16 %v331
      %v412 = vunpack.c.l.b16 %v332
      %v413 = vunpack.c.l.b16 %v333
      %v414 = vunpack.c.l.b16 %v334
      %v415 = vunpack.c.l.b16 %v335
      %v416 = vunpack.c.l.b16 %v336
      %v417 = vunpack.c.l.b16 %v337
      %v418 = vunpack.c.l.b16 %v338
      %v419 = vunpack.c.l.b16 %v339
      %v420 = vunpack.c.l.b16 %v340
      %v421 = vunpack.c.l.b16 %v341
      %v422 = vunpack.c.l.b16 %v342
      %v423 = vunpack.c.l.b16 %v343
      %v424 = vunpack.c.l.b16 %v344
      %v425 = vunpack.c.l.b16 %v345
      %v426 = vunpack.c.l.b16 %v346
      %v427 = vunpack.c.l.b16 %v347
      %v428 = vunpack.c.l.b16 %v348
      %v429 = vunpack.c.l.b16 %v349
      %v430 = vunpack.c.l.b16 %v350
      %v431 = vunpack.c.l.b16 %v351
      %v432 = vunpack.c.l.b16 %v352
      %v433 = vunpack.c.l.b16 %v353
      %v434 = vunpack.c.l.b16 %v354
      %v435 = vunpack.c.l.b16 %v355
      %v436 = vunpack.c.l.b16 %v356
      %v437 = vunpack.c.l.b16 %v357
      %v438 = vunpack.c.l.b16 %v358
      %v439 = vunpack.c.l.b16 %v359
      %v440 = vpack.c.b16 %v409, %v408
      %v441 = vpack.c.b16 %v411, %v410
      %v442 = vpack.c.b16 %v413, %v412
      %v443 = vpack.c.b16 %v415, %v414
      %v444 = vpack.c.b16 %v417, %v416
      %v445 = vpack.c.b16 %v419, %v418
      %v446 = vpack.c.b16 %v421, %v420
      %v447 = vpack.c.b16 %v423, %v422
      %v448 = vpack.c.b16 %v425, %v424
      %v449 = vpack.c.b16 %v427, %v426
      %v450 = vpack.c.b16 %v429, %v428
      %v451 = vpack.c.b16 %v431, %v430
      %v452 = vpack.c.b16 %v433, %v432
      %v453 = vpack.c.b16 %v435, %v434
      %v454 = vpack.c.b16 %v437, %v436
      %v455 = vpack.c.b16 %v439, %v438
      %v488 = vunpack.c.l.b16 %v360
      %v489 = vunpack.c.l.b16 %v361
      %v490 = vunpack.c.l.b16 %v362
      %v491 = vunpack.c.l.b16 %v363
      %v492 = vunpack.c.l.b16 %v364
      %v493 = vunpack.c.l.b16 %v365
      %v494 = vunpack.c.l.b16 %v366
      %v495 = vunpack.c.l.b16 %v367
      %v496 = vunpack.c.l.b16 %v368
      %v497 = vunpack.c.l.b16 %v369
      %v498 = vunpack.c.l.b16 %v370
      %v499 = vunpack.c.l.b16 %v371
      %v500 = vunpack.c.l.b16 %v372
      %v501 = vunpack.c.l.b16 %v373
      %v502 = vunpack.c.l.b16 %v374
      %v503 = vunpack.c.l.b16 %v375
      %v504 = vpack.c.b16 %v489, %v488
      %v505 = vpack.c.b16 %v491, %v490
      %v506 = vpack.c.b16 %v493, %v492
      %v507 = vpack.c.b16 %v495, %v494
      %v508 = vpack.c.b16 %v497, %v496
      %v509 = vpack.c.b16 %v499, %v498
      %v510 = vpack.c.b16 %v501, %v500
      %v511 = vpack.c.b16 %v503, %v502
      %520 = vmatprep.subr.bf16.mxu0 0
      %521 = vmatpush1.bf16.msra.mxu0 %v504
      %522 = vmatprep.subr.bf16.mxu0 0
      %523 = vmatpush1.bf16.msra.mxu0 %v505
      %524 = vmatprep.subr.bf16.mxu0 0
      %525 = vmatpush1.bf16.msra.mxu0 %v506
      %526 = vmatprep.subr.bf16.mxu0 0
      %527 = vmatpush1.bf16.msra.mxu0 %v507
      %528 = vmatprep.subr.bf16.mxu0 0
      %529 = vmatpush1.bf16.msra.mxu0 %v508
      %530 = vmatprep.subr.bf16.mxu0 0
      %531 = vmatpush1.bf16.msra.mxu0 %v509
      %532 = vmatprep.subr.bf16.mxu0 0
      %533 = vmatpush1.bf16.msra.mxu0 %v510
      %534 = vmatprep.subr.bf16.mxu0 0
      %535 = vmatpush1.bf16.msra.mxu0 %v511
      %536 = vmatprep.subr.bf16.mxu0 0
      %537 = vmatpush1.bf16.msra.mxu0 0
      %538 = vmatprep.subr.bf16.mxu0 0
      %539 = vmatpush1.bf16.msra.mxu0 0
      %540 = vmatprep.subr.bf16.mxu0 0
      %541 = vmatpush1.bf16.msra.mxu0 0
      %542 = vmatprep.subr.bf16.mxu0 0
      %543 = vmatpush1.bf16.msra.mxu0 0
      %544 = vmatprep.subr.bf16.mxu0 0
      %545 = vmatpush1.bf16.msra.mxu0 0
      %546 = vmatprep.subr.bf16.mxu0 0
      %547 = vmatpush1.bf16.msra.mxu0 0
      %548 = vmatprep.subr.bf16.mxu0 0
      %549 = vmatpush1.bf16.msra.mxu0 0
      %550 = vmatprep.subr.bf16.mxu0 0
      %551 = vmatpush1.bf16.msra.mxu0 0
      %552 = vmatprep.mubr.bf16.mxu0 0
      %553 = vmatmul.mubr.bf16.gmra.mrb[0].mxu0 %v440
      %v554 = vpop.f32.mrb[0].mxu0
      %v555 = vadd.f32 0.0, %v554
      %v556 = vpop.f32.mrb[0].mxu0
      %v557 = vpop.f32.mrb[0].mxu0
      %v558 = vadd.f32 0.0, %v557
      %v559 = vpop.f32.mrb[0].mxu0
      %560 = vmatprep.mubr.bf16.mxu0 0
      %561 = vmatmul.mubr.bf16.gmra.mrb[0].mxu0 %v441
      %v562 = vpop.f32.mrb[0].mxu0
      %v563 = vadd.f32 0.0, %v562
      %v564 = vpop.f32.mrb[0].mxu0
      %v565 = vpop.f32.mrb[0].mxu0
      %v566 = vadd.f32 0.0, %v565
      %v567 = vpop.f32.mrb[0].mxu0
      %568 = vmatprep.mubr.bf16.mxu0 0
      %569 = vmatmul.mubr.bf16.gmra.mrb[0].mxu0 %v442
      %v570 = vpop.f32.mrb[0].mxu0
      %v571 = vadd.f32 0.0, %v570
      %v572 = vpop.f32.mrb[0].mxu0
      %v573 = vpop.f32.mrb[0].mxu0
      %v574 = vadd.f32 0.0, %v573
      %v575 = vpop.f32.mrb[0].mxu0
      %576 = vmatprep.mubr.bf16.mxu0 0
      %577 = vmatmul.mubr.bf16.gmra.mrb[0].mxu0 %v443
      %v578 = vpop.f32.mrb[0].mxu0
      %v579 = vadd.f32 0.0, %v578
      %v580 = vpop.f32.mrb[0].mxu0
      %v581 = vpop.f32.mrb[0].mxu0
      %v582 = vadd.f32 0.0, %v581
      %v583 = vpop.f32.mrb[0].mxu0
      %584 = vmatprep.mubr.bf16.mxu0 0
      %585 = vmatmul.mubr.bf16.gmra.mrb[0].mxu0 %v444
      %v586 = vpop.f32.mrb[0].mxu0
      %v587 = vadd.f32 0.0, %v586
      %v588 = vpop.f32.mrb[0].mxu0
      %v589 = vpop.f32.mrb[0].mxu0
      %v590 = vadd.f32 0.0, %v589
      %v591 = vpop.f32.mrb[0].mxu0
      %592 = vmatprep.mubr.bf16.mxu0 0
      %593 = vmatmul.mubr.bf16.gmra.mrb[0].mxu0 %v445
      %v594 = vpop.f32.mrb[0].mxu0
      %v595 = vadd.f32 0.0, %v594
      %v596 = vpop.f32.mrb[0].mxu0
      %v597 = vpop.f32.mrb[0].mxu0
      %v598 = vadd.f32 0.0, %v597
      %v599 = vpop.f32.mrb[0].mxu0
      %600 = vmatprep.mubr.bf16.mxu0 0
      %601 = vmatmul.mubr.bf16.gmra.mrb[0].mxu0 %v446
      %v602 = vpop.f32.mrb[0].mxu0
      %v603 = vadd.f32 0.0, %v602
      %v604 = vpop.f32.mrb[0].mxu0
      %v605 = vpop.f32.mrb[0].mxu0
      %v606 = vadd.f32 0.0, %v605
      %v607 = vpop.f32.mrb[0].mxu0
      %608 = vmatprep.mubr.bf16.mxu0 0
      %609 = vmatmul.mubr.bf16.gmra.mrb[0].mxu0 %v447
      %v610 = vpop.f32.mrb[0].mxu0
      %v611 = vadd.f32 0.0, %v610
      %v612 = vpop.f32.mrb[0].mxu0
      %v613 = vpop.f32.mrb[0].mxu0
      %v614 = vadd.f32 0.0, %v613
      %v615 = vpop.f32.mrb[0].mxu0
      %616 = vmatprep.mubr.bf16.mxu0 0
      %617 = vmatmul.mubr.bf16.gmra.mrb[0].mxu0 %v448
      %v618 = vpop.f32.mrb[0].mxu0
      %v619 = vadd.f32 0.0, %v618
      %v620 = vpop.f32.mrb[0].mxu0
      %v621 = vpop.f32.mrb[0].mxu0
      %v622 = vadd.f32 0.0, %v621
      %v623 = vpop.f32.mrb[0].mxu0
      %624 = vmatprep.mubr.bf16.mxu0 0
      %625 = vmatmul.mubr.bf16.gmra.mrb[0].mxu0 %v449
      %v626 = vpop.f32.mrb[0].mxu0
      %v627 = vadd.f32 0.0, %v626
      %v628 = vpop.f32.mrb[0].mxu0
      %v629 = vpop.f32.mrb[0].mxu0
      %v630 = vadd.f32 0.0, %v629
      %v631 = vpop.f32.mrb[0].mxu0
      %632 = vmatprep.mubr.bf16.mxu0 0
      %633 = vmatmul.mubr.bf16.gmra.mrb[0].mxu0 %v450
      %v634 = vpop.f32.mrb[0].mxu0
      %v635 = vadd.f32 0.0, %v634
      %v636 = vpop.f32.mrb[0].mxu0
      %v637 = vpop.f32.mrb[0].mxu0
      %v638 = vadd.f32 0.0, %v637
      %v639 = vpop.f32.mrb[0].mxu0
      %640 = vmatprep.mubr.bf16.mxu0 0
      %641 = vmatmul.mubr.bf16.gmra.mrb[0].mxu0 %v451
      %v642 = vpop.f32.mrb[0].mxu0
      %v643 = vadd.f32 0.0, %v642
      %v644 = vpop.f32.mrb[0].mxu0
      %v645 = vpop.f32.mrb[0].mxu0
      %v646 = vadd.f32 0.0, %v645
      %v647 = vpop.f32.mrb[0].mxu0
      %648 = vmatprep.mubr.bf16.mxu0 0
      %649 = vmatmul.mubr.bf16.gmra.mrb[0].mxu0 %v452
      %v650 = vpop.f32.mrb[0].mxu0
      %v651 = vadd.f32 0.0, %v650
      %v652 = vpop.f32.mrb[0].mxu0
      %v653 = vpop.f32.mrb[0].mxu0
      %v654 = vadd.f32 0.0, %v653
      %v655 = vpop.f32.mrb[0].mxu0
      %656 = vmatprep.mubr.bf16.mxu0 0
      %657 = vmatmul.mubr.bf16.gmra.mrb[0].mxu0 %v453
      %v658 = vpop.f32.mrb[0].mxu0
      %v659 = vadd.f32 0.0, %v658
      %v660 = vpop.f32.mrb[0].mxu0
      %v661 = vpop.f32.mrb[0].mxu0
      %v662 = vadd.f32 0.0, %v661
      %v663 = vpop.f32.mrb[0].mxu0
      %664 = vmatprep.mubr.bf16.mxu0 0
      %665 = vmatmul.mubr.bf16.gmra.mrb[0].mxu0 %v454
      %v666 = vpop.f32.mrb[0].mxu0
      %v667 = vadd.f32 0.0, %v666
      %v668 = vpop.f32.mrb[0].mxu0
      %v669 = vpop.f32.mrb[0].mxu0
      %v670 = vadd.f32 0.0, %v669
      %v671 = vpop.f32.mrb[0].mxu0
      %672 = vmatprep.mubr.bf16.mxu0 0
      %673 = vmatmul.mubr.bf16.gmra.mrb[0].mxu0 %v455
      %v674 = vpop.f32.mrb[0].mxu0
      %v675 = vadd.f32 0.0, %v674
      %v676 = vpop.f32.mrb[0].mxu0
      %v677 = vpop.f32.mrb[0].mxu0
      %v678 = vadd.f32 0.0, %v677
      %v679 = vpop.f32.mrb[0].mxu0
      %680 = vdwg.mxu0
      %v681 = vadd.f32 %v296, %v555
      %v682 = vadd.f32 %v297, %v558
      %v683 = vadd.f32 %v298, %v563
      %v684 = vadd.f32 %v299, %v566
      %v685 = vadd.f32 %v300, %v571
      %v686 = vadd.f32 %v301, %v574
      %v687 = vadd.f32 %v302, %v579
      %v688 = vadd.f32 %v303, %v582
      %v689 = vadd.f32 %v304, %v587
      %v690 = vadd.f32 %v305, %v590
      %v691 = vadd.f32 %v306, %v595
      %v692 = vadd.f32 %v307, %v598
      %v693 = vadd.f32 %v308, %v603
      %v694 = vadd.f32 %v309, %v606
      %v695 = vadd.f32 %v310, %v611
      %v696 = vadd.f32 %v311, %v614
      %v697 = vadd.f32 %v312, %v619
      %v698 = vadd.f32 %v313, %v622
      %v699 = vadd.f32 %v314, %v627
      %v700 = vadd.f32 %v315, %v630
      %v701 = vadd.f32 %v316, %v635
      %v702 = vadd.f32 %v317, %v638
      %v703 = vadd.f32 %v318, %v643
      %v704 = vadd.f32 %v319, %v646
      %v705 = vadd.f32 %v320, %v651
      %v706 = vadd.f32 %v321, %v654
      %v707 = vadd.f32 %v322, %v659
      %v708 = vadd.f32 %v323, %v662
      %v709 = vadd.f32 %v324, %v667
      %v710 = vadd.f32 %v325, %v670
      %v711 = vadd.f32 %v326, %v675
      %v712 = vadd.f32 %v327, %v678
      %713 = vst [vmem:[#allocation2] sm:$0xff] %v681
      %714 = vst [vmem:[#allocation2 + $0x8] sm:$0xff] %v682
      %715 = vst [vmem:[#allocation2 + $0x10] sm:$0xff] %v683
      %716 = vst [vmem:[#allocation2 + $0x18] sm:$0xff] %v684
      %717 = vst [vmem:[#allocation2 + $0x20] sm:$0xff] %v685
      %718 = vst [vmem:[#allocation2 + $0x28] sm:$0xff] %v686
      %719 = vst [vmem:[#allocation2 + $0x30] sm:$0xff] %v687
      %720 = vst [vmem:[#allocation2 + $0x38] sm:$0xff] %v688
      %721 = vst [vmem:[#allocation2 + $0x40] sm:$0xff] %v689
      %722 = vst [vmem:[#allocation2 + $0x48] sm:$0xff] %v690
      %723 = vst [vmem:[#allocation2 + $0x50] sm:$0xff] %v691
      %724 = vst [vmem:[#allocation2 + $0x58] sm:$0xff] %v692
      %725 = vst [vmem:[#allocation2 + $0x60] sm:$0xff] %v693
      %726 = vst [vmem:[#allocation2 + $0x68] sm:$0xff] %v694
      %727 = vst [vmem:[#allocation2 + $0x70] sm:$0xff] %v695
      %728 = vst [vmem:[#allocation2 + $0x78] sm:$0xff] %v696
      %729 = vst [vmem:[#allocation2 + $0x80] sm:$0xff] %v697
      %730 = vst [vmem:[#allocation2 + $0x88] sm:$0xff] %v698
      %731 = vst [vmem:[#allocation2 + $0x90] sm:$0xff] %v699
      %732 = vst [vmem:[#allocation2 + $0x98] sm:$0xff] %v700
      %733 = vst [vmem:[#allocation2 + $0xa0] sm:$0xff] %v701
      %734 = vst [vmem:[#allocation2 + $0xa8] sm:$0xff] %v702
      %735 = vst [vmem:[#allocation2 + $0xb0] sm:$0xff] %v703
      %736 = vst [vmem:[#allocation2 + $0xb8] sm:$0xff] %v704
      %737 = vst [vmem:[#allocation2 + $0xc0] sm:$0xff] %v705
      %738 = vst [vmem:[#allocation2 + $0xc8] sm:$0xff] %v706
      %739 = vst [vmem:[#allocation2 + $0xd0] sm:$0xff] %v707
      %740 = vst [vmem:[#allocation2 + $0xd8] sm:$0xff] %v708
      %741 = vst [vmem:[#allocation2 + $0xe0] sm:$0xff] %v709
      %742 = vst [vmem:[#allocation2 + $0xe8] sm:$0xff] %v710
      %743 = vst [vmem:[#allocation2 + $0xf0] sm:$0xff] %v711
      %744 = vst [vmem:[#allocation2 + $0xf8] sm:$0xff] %v712
      // Predicated region
      $region37: #{bottleneck_forward.5} parent=31 // pred_check
        %p745 = pneg %p260
      $region38: #{bottleneck_forward.5} parent=31 // pred_check_branch
        %747 = sbr.rel (%p745) target = $region40
      $region39: #{bottleneck_forward.5} parent=31 // pred_region
        %v748 = vld [vmem:[#allocation2] sm:$0xff]
        %v749 = vld [vmem:[#allocation2 + $0x8] sm:$0xff]
        %v750 = vld [vmem:[#allocation2 + $0x10] sm:$0xff]
        %v751 = vld [vmem:[#allocation2 + $0x18] sm:$0xff]
        %v752 = vld [vmem:[#allocation2 + $0x20] sm:$0xff]
        %v753 = vld [vmem:[#allocation2 + $0x28] sm:$0xff]
        %v754 = vld [vmem:[#allocation2 + $0x30] sm:$0xff]
        %v755 = vld [vmem:[#allocation2 + $0x38] sm:$0xff]
        %v756 = vld [vmem:[#allocation2 + $0x40] sm:$0xff]
        %v757 = vld [vmem:[#allocation2 + $0x48] sm:$0xff]
        %v758 = vld [vmem:[#allocation2 + $0x50] sm:$0xff]
        %v759 = vld [vmem:[#allocation2 + $0x58] sm:$0xff]
        %v760 = vld [vmem:[#allocation2 + $0x60] sm:$0xff]
        %v761 = vld [vmem:[#allocation2 + $0x68] sm:$0xff]
        %v762 = vld [vmem:[#allocation2 + $0x70] sm:$0xff]
        %v763 = vld [vmem:[#allocation2 + $0x78] sm:$0xff]
        %v764 = vld [vmem:[#allocation2 + $0x80] sm:$0xff]
        %v765 = vld [vmem:[#allocation2 + $0x88] sm:$0xff]
        %v766 = vld [vmem:[#allocation2 + $0x90] sm:$0xff]
        %v767 = vld [vmem:[#allocation2 + $0x98] sm:$0xff]
        %v768 = vld [vmem:[#allocation2 + $0xa0] sm:$0xff]
        %v769 = vld [vmem:[#allocation2 + $0xa8] sm:$0xff]
        %v770 = vld [vmem:[#allocation2 + $0xb0] sm:$0xff]
        %v771 = vld [vmem:[#allocation2 + $0xb8] sm:$0xff]
        %v772 = vld [vmem:[#allocation2 + $0xc0] sm:$0xff]
        %v773 = vld [vmem:[#allocation2 + $0xc8] sm:$0xff]
        %v774 = vld [vmem:[#allocation2 + $0xd0] sm:$0xff]
        %v775 = vld [vmem:[#allocation2 + $0xd8] sm:$0xff]
        %v776 = vld [vmem:[#allocation2 + $0xe0] sm:$0xff]
        %v777 = vld [vmem:[#allocation2 + $0xe8] sm:$0xff]
        %v778 = vld [vmem:[#allocation2 + $0xf0] sm:$0xff]
        %v779 = vld [vmem:[#allocation2 + $0xf8] sm:$0xff]
        %v780 = vld [vmem:[%s249] sm:$0x1]
        %v782 = vlaneseq
        %v783 = vshrl.u32 %v782, 7
        %v784 = vsub.s32 0, %v783
        %v785 = vrot.slane %v780, %v784
        %v787 = vadd.f32 %v748, %v785
        %v788 = vadd.f32 %v749, %v785
        %v789 = vadd.f32 %v750, %v785
        %v790 = vadd.f32 %v751, %v785
        %v791 = vadd.f32 %v752, %v785
        %v792 = vadd.f32 %v753, %v785
        %v793 = vadd.f32 %v754, %v785
        %v794 = vadd.f32 %v755, %v785
        %v795 = vadd.f32 %v756, %v785
        %v796 = vadd.f32 %v757, %v785
        %v797 = vadd.f32 %v758, %v785
        %v798 = vadd.f32 %v759, %v785
        %v799 = vadd.f32 %v760, %v785
        %v800 = vadd.f32 %v761, %v785
        %v801 = vadd.f32 %v762, %v785
        %v802 = vadd.f32 %v763, %v785
        %v803 = vadd.f32 %v764, %v785
        %v804 = vadd.f32 %v765, %v785
        %v805 = vadd.f32 %v766, %v785
        %v806 = vadd.f32 %v767, %v785
        %v807 = vadd.f32 %v768, %v785
        %v808 = vadd.f32 %v769, %v785
        %v809 = vadd.f32 %v770, %v785
        %v810 = vadd.f32 %v771, %v785
        %v811 = vadd.f32 %v772, %v785
        %v812 = vadd.f32 %v773, %v785
        %v813 = vadd.f32 %v774, %v785
        %v814 = vadd.f32 %v775, %v785
        %v815 = vadd.f32 %v776, %v785
        %v816 = vadd.f32 %v777, %v785
        %v817 = vadd.f32 %v778, %v785
        %v818 = vadd.f32 %v779, %v785
        %v819 = vmax.f32 %v787, 0.0
        %v820 = vmax.f32 %v788, 0.0
        %v821 = vmax.f32 %v789, 0.0
        %v822 = vmax.f32 %v790, 0.0
        %v823 = vmax.f32 %v791, 0.0
        %v824 = vmax.f32 %v792, 0.0
        %v825 = vmax.f32 %v793, 0.0
        %v826 = vmax.f32 %v794, 0.0
        %v827 = vmax.f32 %v795, 0.0
        %v828 = vmax.f32 %v796, 0.0
        %v829 = vmax.f32 %v797, 0.0
        %v830 = vmax.f32 %v798, 0.0
        %v831 = vmax.f32 %v799, 0.0
        %v832 = vmax.f32 %v800, 0.0
        %v833 = vmax.f32 %v801, 0.0
        %v834 = vmax.f32 %v802, 0.0
        %v835 = vmax.f32 %v803, 0.0
        %v836 = vmax.f32 %v804, 0.0
        %v837 = vmax.f32 %v805, 0.0
        %v838 = vmax.f32 %v806, 0.0
        %v839 = vmax.f32 %v807, 0.0
        %v840 = vmax.f32 %v808, 0.0
        %v841 = vmax.f32 %v809, 0.0
        %v842 = vmax.f32 %v810, 0.0
        %v843 = vmax.f32 %v811, 0.0
        %v844 = vmax.f32 %v812, 0.0
        %v845 = vmax.f32 %v813, 0.0
        %v846 = vmax.f32 %v814, 0.0
        %v847 = vmax.f32 %v815, 0.0
        %v848 = vmax.f32 %v816, 0.0
        %v849 = vmax.f32 %v817, 0.0
        %v850 = vmax.f32 %v818, 0.0
        %v851 = vpack.c.bf16 %v820, %v819
        %v852 = vpack.c.bf16 %v822, %v821
        %v853 = vpack.c.bf16 %v824, %v823
        %v854 = vpack.c.bf16 %v826, %v825
        %v855 = vpack.c.bf16 %v828, %v827
        %v856 = vpack.c.bf16 %v830, %v829
        %v857 = vpack.c.bf16 %v832, %v831
        %v858 = vpack.c.bf16 %v834, %v833
        %v859 = vpack.c.bf16 %v836, %v835
        %v860 = vpack.c.bf16 %v838, %v837
        %v861 = vpack.c.bf16 %v840, %v839
        %v862 = vpack.c.bf16 %v842, %v841
        %v863 = vpack.c.bf16 %v844, %v843
        %v864 = vpack.c.bf16 %v846, %v845
        %v865 = vpack.c.bf16 %v848, %v847
        %v866 = vpack.c.bf16 %v850, %v849
        %v883 = vunpack.c.l.b16 %v851
        %v884 = vunpack.c.h.b16 %v851
        %v885 = vunpack.c.l.b16 %v852
        %v886 = vunpack.c.h.b16 %v852
        %v887 = vunpack.c.l.b16 %v853
        %v888 = vunpack.c.h.b16 %v853
        %v889 = vunpack.c.l.b16 %v854
        %v890 = vunpack.c.h.b16 %v854
        %v891 = vunpack.c.l.b16 %v855
        %v892 = vunpack.c.h.b16 %v855
        %v893 = vunpack.c.l.b16 %v856
        %v894 = vunpack.c.h.b16 %v856
        %v895 = vunpack.c.l.b16 %v857
        %v896 = vunpack.c.h.b16 %v857
        %v897 = vunpack.c.l.b16 %v858
        %v898 = vunpack.c.h.b16 %v858
        %v899 = vunpack.c.l.b16 %v859
        %v900 = vunpack.c.h.b16 %v859
        %v901 = vunpack.c.l.b16 %v860
        %v902 = vunpack.c.h.b16 %v860
        %v903 = vunpack.c.l.b16 %v861
        %v904 = vunpack.c.h.b16 %v861
        %v905 = vunpack.c.l.b16 %v862
        %v906 = vunpack.c.h.b16 %v862
        %v907 = vunpack.c.l.b16 %v863
        %v908 = vunpack.c.h.b16 %v863
        %v909 = vunpack.c.l.b16 %v864
        %v910 = vunpack.c.h.b16 %v864
        %v911 = vunpack.c.l.b16 %v865
        %v912 = vunpack.c.h.b16 %v865
        %v913 = vunpack.c.l.b16 %v866
        %v914 = vunpack.c.h.b16 %v866
        %v915 = vpack.c.b16 %v883, %v883
        %v916 = vpack.c.b16 %v884, %v884
        %v917 = vpack.c.b16 %v885, %v885
        %v918 = vpack.c.b16 %v886, %v886
        %v919 = vpack.c.b16 %v887, %v887
        %v920 = vpack.c.b16 %v888, %v888
        %v921 = vpack.c.b16 %v889, %v889
        %v922 = vpack.c.b16 %v890, %v890
        %v923 = vpack.c.b16 %v891, %v891
        %v924 = vpack.c.b16 %v892, %v892
        %v925 = vpack.c.b16 %v893, %v893
        %v926 = vpack.c.b16 %v894, %v894
        %v927 = vpack.c.b16 %v895, %v895
        %v928 = vpack.c.b16 %v896, %v896
        %v929 = vpack.c.b16 %v897, %v897
        %v930 = vpack.c.b16 %v898, %v898
        %v931 = vpack.c.b16 %v899, %v899
        %v932 = vpack.c.b16 %v900, %v900
        %v933 = vpack.c.b16 %v901, %v901
        %v934 = vpack.c.b16 %v902, %v902
        %v935 = vpack.c.b16 %v903, %v903
        %v936 = vpack.c.b16 %v904, %v904
        %v937 = vpack.c.b16 %v905, %v905
        %v938 = vpack.c.b16 %v906, %v906
        %v939 = vpack.c.b16 %v907, %v907
        %v940 = vpack.c.b16 %v908, %v908
        %v941 = vpack.c.b16 %v909, %v909
        %v942 = vpack.c.b16 %v910, %v910
        %v943 = vpack.c.b16 %v911, %v911
        %v944 = vpack.c.b16 %v912, %v912
        %v945 = vpack.c.b16 %v913, %v913
        %v946 = vpack.c.b16 %v914, %v914
        %979 = vst [vmem:[%s257] sm:$0xf] %v915
        %980 = vst [vmem:[%s257 + $0x4] sm:$0xf] %v916
        %981 = vst [vmem:[%s257 + $0x8] sm:$0xf] %v917
        %982 = vst [vmem:[%s257 + $0xc] sm:$0xf] %v918
        %983 = vst [vmem:[%s257 + $0x10] sm:$0xf] %v919
        %984 = vst [vmem:[%s257 + $0x14] sm:$0xf] %v920
        %985 = vst [vmem:[%s257 + $0x18] sm:$0xf] %v921
        %986 = vst [vmem:[%s257 + $0x1c] sm:$0xf] %v922
        %987 = vst [vmem:[%s257 + $0x20] sm:$0xf] %v923
        %988 = vst [vmem:[%s257 + $0x24] sm:$0xf] %v924
        %989 = vst [vmem:[%s257 + $0x28] sm:$0xf] %v925
        %990 = vst [vmem:[%s257 + $0x2c] sm:$0xf] %v926
        %991 = vst [vmem:[%s257 + $0x30] sm:$0xf] %v927
        %992 = vst [vmem:[%s257 + $0x34] sm:$0xf] %v928
        %993 = vst [vmem:[%s257 + $0x38] sm:$0xf] %v929
        %994 = vst [vmem:[%s257 + $0x3c] sm:$0xf] %v930
        %995 = vst [vmem:[%s257 + $0x40] sm:$0xf] %v931
        %996 = vst [vmem:[%s257 + $0x44] sm:$0xf] %v932
        %997 = vst [vmem:[%s257 + $0x48] sm:$0xf] %v933
        %998 = vst [vmem:[%s257 + $0x4c] sm:$0xf] %v934
        %999 = vst [vmem:[%s257 + $0x50] sm:$0xf] %v935
        %1000 = vst [vmem:[%s257 + $0x54] sm:$0xf] %v936
        %1001 = vst [vmem:[%s257 + $0x58] sm:$0xf] %v937
        %1002 = vst [vmem:[%s257 + $0x5c] sm:$0xf] %v938
        %1003 = vst [vmem:[%s257 + $0x60] sm:$0xf] %v939
        %1004 = vst [vmem:[%s257 + $0x64] sm:$0xf] %v940
        %1005 = vst [vmem:[%s257 + $0x68] sm:$0xf] %v941
        %1006 = vst [vmem:[%s257 + $0x6c] sm:$0xf] %v942
        %1007 = vst [vmem:[%s257 + $0x70] sm:$0xf] %v943
        %1008 = vst [vmem:[%s257 + $0x74] sm:$0xf] %v944
        %1009 = vst [vmem:[%s257 + $0x78] sm:$0xf] %v945
        %1010 = vst [vmem:[%s257 + $0x7c] sm:$0xf] %v946
      $region40: #{bottleneck_forward.5} parent=31 // pred_fallthru
        _
      %s1011 = smul.u32 32, %s19
      %p1012 = scmp.lt.s32.totalorder %s1011, 63
      %s1013 = scalar_select %p1012, %s1011, 63
      %p1014 = scmp.lt.s32.totalorder %s20, 0
      %s1015 = scalar_select %p1014, %s20, 0
      %s1016 = sadd.s32 %s1015, %s1013
      %s1017 = smul.addr %s1016, 4
      %s1018 = scalar_lea.vmem %s3, %s1017
      // Predicated region
      $region41: #{bottleneck_forward.5} parent=31 // pred_check
        %p1019 = pneg %p135
      $region42: #{bottleneck_forward.5} parent=31 // pred_check_branch
        %1021 = sbr.rel (%p1019) target = $region44
      $region43: #{bottleneck_forward.5} parent=31 // pred_region
        %s1022 = smul.u32 32, %s19
      $region44: #{bottleneck_forward.5} parent=31 // pred_fallthru
        _
    $region32: #{bottleneck_forward.5} parent=5 // pred_fallthru
      _
    %p1023 = scmp.le.s32.totalorder 2, %s9
    // Predicated region
    $region45: #{bottleneck_forward.5} parent=5 // pred_check
      %p1024 = pneg %p1023
    $region46: #{bottleneck_forward.5} parent=5 // pred_check_branch
      %1026 = sbr.rel (%p1024) target = $region48
    $region47: #{bottleneck_forward.5} parent=5 // pred_region
      %s1027 = ssub.s32 %s9, 2
      // Predicated region
      $region49: #{bottleneck_forward.5} parent=47 // pred_check
        %p1028 = pneg %p141
      $region50: #{bottleneck_forward.5} parent=47 // pred_check_branch
        %1030 = sbr.rel (%p1028) target = $region52
      $region51: #{bottleneck_forward.5} parent=47 // pred_region
        %s1031 = smul.u32 32, %s22
        %p1032 = scmp.lt.s32.totalorder %s1031, 63
        %s1033 = scalar_select %p1032, %s1031, 63
        %p1034 = scmp.lt.s32.totalorder %s23, 0
        %s1035 = scalar_select %p1034, %s23, 0
        %s1036 = sadd.s32 %s1035, %s1033
        %s1037 = smul.addr %s1036, 4
        %s1038 = scalar_lea.vmem %s3, %s1037
      $region52: #{bottleneck_forward.5} parent=47 // pred_fallthru
        _
    $region48: #{bottleneck_forward.5} parent=5 // pred_fallthru
      _
  $region6: #{bottleneck_forward.5} parent=0 // loop_footer
    %s13 = sadd.s32 1, %s9
  $region7: #{bottleneck_forward.5} parent=0 // loop_footer_branch
    %8 = sbr.rel target = $region3
  $region8: #{bottleneck_forward.5} parent=0 // loop_exit
    _

// kernel: bottleneck_forward.6
$region0: #{bottleneck_forward.6}
  #allocation0 [shape = 'u32[]', space=smem, size = 0x4, offset = 0x4, fixed_abs, tag = 'smem constant byte address 0x4 - core index']
  #allocation1 [shape = 'u32[144,128]{1,0:T(1,128)}', space=vmem, size = 0x12000, scoped, tag = 'internal scratch']
  %s0 = inlined_call_operand.vmem [shape: bf16[2,4,9,9,128], index: 0, kind: input, shape index: {}]
  %s1 = inlined_call_operand.vmem [shape: bf16[9,128,128], index: 1, kind: input, shape index: {}]
  %s2 = inlined_call_operand.vmem [shape: f32[1,128], index: 2, kind: input, shape index: {}]
  %s3 = inlined_call_operand.vmem [shape: bf16[2,64,128], index: 3, kind: output, shape index: {}]
  %s4 = sld [smem:[#allocation0]]
  $region45: #{bottleneck_forward.6} parent=0
    _
  %s6 = ssub.s32 1, %s4
  %s7 = scalar_select 0, %s6, %s4
  loop: start=0, step=1, limit=4
  $region2: #{bottleneck_forward.6} parent=0 // loop_pre_header
    _
  $region3: #{bottleneck_forward.6} parent=0 // loop_header
    %s9 = sphi 0, %s13
    %p10 = scmp.ge.s32.totalorder %s9, 4
    %s16 = sphi 0, %s28
    %s17 = sphi 0, %s24
    %s18 = sphi 0, %s16
    %s19 = sphi 0, %s17
    %s20 = sphi 0, %s18
    %s21 = sphi 0, %s19
    %s31 = sphi 0, %s33
    %s34 = sphi 0, %s31
    %s35 = sphi 0, %s34
    %s51 = sphi 0, %s35
    %s57 = sphi 0, %s59
    %s60 = sphi 0, %s57
    %s61 = sphi 0, %s60
    %s77 = sphi 0, %s61
    %s83 = sphi 0, %s85
    %s86 = sphi 0, %s83
    %s87 = sphi 0, %s86
    %s103 = sphi 0, %s87
    %s111 = sphi 0, %s113
    %s114 = sphi 0, %s111
    %s115 = sphi 0, %s114
    %s131 = sphi 0, %s115
  $region4: #{bottleneck_forward.6} parent=0 // loop_header_branch
    %12 = sbr.rel (%p10) target = $region8
  $region5: #{bottleneck_forward.6} parent=0 // loop_body
    %s14 = ssub.s32 %s9, 1
    %s15 = ssub.s32 %s9, 2
    %s22 = sadd.s32 1, %s17
    %p23 = scmp.ge.s32.totalorder %s22, 1
    %s24 = scalar_select %p23, 0, %s22
    %s25 = sadd.s32 1, %s16
    %s26 = scalar_select %p23, %s25, %s16
    %p27 = scmp.ge.s32.totalorder %s26, 2
    %s28 = scalar_select %p27, 0, %s26
    %s29 = ssub.s32 %s16, %s28
    %p30 = scmp.eq.s32.totalorder %s29, 0
    %s32 = sadd.s32 %s31, 1
    %s33 = scalar_select %p30, %s31, %s32
    %p36 = pneg %p30
    %p37 = scmp.eq.s32.totalorder %s9, 1
    %p38 = por %p36, %p37
    %p39 = scmp.ne.s32.totalorder %s31, %s34
    %p40 = scmp.eq.s32.totalorder %s9, 0
    %p41 = por %p39, %p40
    %p42 = scmp.ne.s32.totalorder %s31, %s34
    %p43 = scmp.eq.s32.totalorder %s14, 1
    %p44 = por %p42, %p43
    %p45 = scmp.ne.s32.totalorder %s34, %s35
    %p46 = scmp.eq.s32.totalorder %s14, 0
    %p47 = por %p45, %p46
    %p48 = scmp.ne.s32.totalorder %s34, %s35
    %p49 = scmp.eq.s32.totalorder %s15, 1
    %p50 = por %p48, %p49
    %p52 = scmp.ne.s32.totalorder %s35, %s51
    %p53 = scmp.eq.s32.totalorder %s15, 0
    %p54 = por %p52, %p53
    %s55 = ssub.s32 %s17, %s24
    %p56 = scmp.eq.s32.totalorder %s55, 0
    %s58 = sadd.s32 %s57, 1
    %s59 = scalar_select %p56, %s57, %s58
    %p62 = pneg %p56
    %p63 = scmp.eq.s32.totalorder %s9, 1
    %p64 = por %p62, %p63
    %p65 = scmp.ne.s32.totalorder %s57, %s60
    %p66 = scmp.eq.s32.totalorder %s9, 0
    %p67 = por %p65, %p66
    %p68 = scmp.ne.s32.totalorder %s57, %s60
    %p69 = scmp.eq.s32.totalorder %s14, 1
    %p70 = por %p68, %p69
    %p71 = scmp.ne.s32.totalorder %s60, %s61
    %p72 = scmp.eq.s32.totalorder %s14, 0
    %p73 = por %p71, %p72
    %p74 = scmp.ne.s32.totalorder %s60, %s61
    %p75 = scmp.eq.s32.totalorder %s15, 1
    %p76 = por %p74, %p75
    %p78 = scmp.ne.s32.totalorder %s61, %s77
    %p79 = scmp.eq.s32.totalorder %s15, 0
    %p80 = por %p78, %p79
    %s81 = ssub.s32 %s17, %s24
    %p82 = scmp.eq.s32.totalorder %s81, 0
    %s84 = sadd.s32 %s83, 1
    %s85 = scalar_select %p82, %s83, %s84
    %p88 = pneg %p82
    %p89 = scmp.eq.s32.totalorder %s9, 1
    %p90 = por %p88, %p89
    %p91 = scmp.ne.s32.totalorder %s83, %s86
    %p92 = scmp.eq.s32.totalorder %s9, 0
    %p93 = por %p91, %p92
    %p94 = scmp.ne.s32.totalorder %s83, %s86
    %p95 = scmp.eq.s32.totalorder %s14, 1
    %p96 = por %p94, %p95
    %p97 = scmp.ne.s32.totalorder %s86, %s87
    %p98 = scmp.eq.s32.totalorder %s14, 0
    %p99 = por %p97, %p98
    %p100 = scmp.ne.s32.totalorder %s86, %s87
    %p101 = scmp.eq.s32.totalorder %s15, 1
    %p102 = por %p100, %p101
    %p104 = scmp.ne.s32.totalorder %s87, %s103
    %p105 = scmp.eq.s32.totalorder %s15, 0
    %p106 = por %p104, %p105
    %s107 = ssub.s32 %s16, %s28
    %s108 = ssub.s32 %s17, %s24
    %s109 = sor.u32 %s107, %s108
    %p110 = scmp.eq.s32.totalorder %s109, 0
    %s112 = sadd.s32 %s111, 1
    %s113 = scalar_select %p110, %s111, %s112
    %p116 = pneg %p110
    %p117 = scmp.eq.s32.totalorder %s9, 1
    %p118 = por %p116, %p117
    %p119 = scmp.ne.s32.totalorder %s111, %s114
    %p120 = scmp.eq.s32.totalorder %s9, 0
    %p121 = por %p119, %p120
    %p122 = scmp.ne.s32.totalorder %s111, %s114
    %p123 = scmp.eq.s32.totalorder %s14, 1
    %p124 = por %p122, %p123
    %p125 = scmp.ne.s32.totalorder %s114, %s115
    %p126 = scmp.eq.s32.totalorder %s14, 0
    %p127 = por %p125, %p126
    %p128 = scmp.ne.s32.totalorder %s114, %s115
    %p129 = scmp.eq.s32.totalorder %s15, 1
    %p130 = por %p128, %p129
    %p132 = scmp.ne.s32.totalorder %s115, %s131
    %p133 = scmp.eq.s32.totalorder %s15, 0
    %p134 = por %p132, %p133
    %p135 = scmp.le.s32.totalorder 1, %s9
    %p136 = scmp.lt.s32.totalorder %s9, 3
    %p137 = pnand %p135, %p136
    %p138 = pneg %p137
    // Predicated region
    $region9: #{bottleneck_forward.6} parent=5 // pred_check
      _
    $region10: #{bottleneck_forward.6} parent=5 // pred_check_branch
      %140 = sbr.rel (%p137) target = $region12
    $region11: #{bottleneck_forward.6} parent=5 // pred_region
      %s141 = ssub.s32 %s9, 1
      // Predicated region
      $region13: #{bottleneck_forward.6} parent=11 // pred_check
        %p142 = pneg %p73
      $region14: #{bottleneck_forward.6} parent=11 // pred_check_branch
        %144 = sbr.rel (%p142) target = $region16
      $region15: #{bottleneck_forward.6} parent=11 // pred_region
        %p145 = scmp.lt.s32.totalorder %s19, 0
        %s146 = scalar_select %p145, %s19, 0
        %s147 = smul.addr %s146, 4
        %s148 = scalar_lea.vmem %s1, %s147
      $region16: #{bottleneck_forward.6} parent=11 // pred_fallthru
        _
      // Predicated region
      $region17: #{bottleneck_forward.6} parent=11 // pred_check
        %p149 = pneg %p99
      $region18: #{bottleneck_forward.6} parent=11 // pred_check_branch
        %151 = sbr.rel (%p149) target = $region20
      $region19: #{bottleneck_forward.6} parent=11 // pred_region
        %p152 = scmp.lt.s32.totalorder %s19, 0
        %s153 = scalar_select %p152, %s19, 0
        %s154 = scalar_lea.vmem %s2, %s153
      $region20: #{bottleneck_forward.6} parent=11 // pred_fallthru
        _
    $region12: #{bottleneck_forward.6} parent=5 // pred_fallthru
      _
    %p155 = scmp.lt.s32.totalorder %s9, 2
    // Predicated region
    $region21: #{bottleneck_forward.6} parent=5 // pred_check
      %p156 = pneg %p155
    $region22: #{bottleneck_forward.6} parent=5 // pred_check_branch
      %158 = sbr.rel (%p156) target = $region24
    $region23: #{bottleneck_forward.6} parent=5 // pred_region
      // Predicated region
      $region25: #{bottleneck_forward.6} parent=23 // pred_check
        %p159 = pneg %p41
      $region26: #{bottleneck_forward.6} parent=23 // pred_check_branch
        %161 = sbr.rel (%p159) target = $region28
      $region27: #{bottleneck_forward.6} parent=23 // pred_region
        %p162 = scmp.lt.s32.totalorder %s16, 1
        %s163 = scalar_select %p162, %s16, 1
        %s164 = smul.addr %s163, 72
        %s165 = smul.addr %s164, 4
        %s166 = scalar_lea.vmem %s0, %s165
      $region28: #{bottleneck_forward.6} parent=23 // pred_fallthru
        _
    $region24: #{bottleneck_forward.6} parent=5 // pred_fallthru
      _
    %p167 = scmp.le.s32.totalorder 1, %s9
    %p168 = scmp.lt.s32.totalorder %s9, 3
    %p169 = pnand %p167, %p168
    %p170 = pneg %p169
    // Predicated region
    $region29: #{bottleneck_forward.6} parent=5 // pred_check
      _
    $region30: #{bottleneck_forward.6} parent=5 // pred_check_branch
      %172 = sbr.rel (%p169) target = $region32
    $region31: #{bottleneck_forward.6} parent=5 // pred_region
      %s173 = ssub.s32 %s9, 1
      %p174 = scmp.lt.s32.totalorder %s18, 1
      %s175 = scalar_select %p174, %s18, 1
      %s176 = smul.addr %s175, 72
      %s177 = smul.addr %s176, 4
      %s178 = scalar_lea.vmem %s0, %s177
      %p179 = pneg %p47
      %p180 = pneg %p44
      %p181 = scmp.lt.s32.totalorder %s19, 0
      %s182 = scalar_select %p181, %s19, 0
      %s183 = smul.addr %s182, 4
      %s184 = scalar_lea.vmem %s1, %s183
      %p185 = pneg %p73
      %p186 = pneg %p70
      %p187 = scmp.lt.s32.totalorder %s19, 0
      %s188 = scalar_select %p187, %s19, 0
      %s189 = scalar_lea.vmem %s2, %s188
      %p190 = pneg %p99
      %p191 = pneg %p96
      %p192 = pneg %p127
      %p193 = pneg %p124
      %p194 = scmp.lt.s32.totalorder %s18, 1
      %s195 = scalar_select %p194, %s18, 1
      %p196 = scmp.lt.s32.totalorder %s19, 0
      %s197 = scalar_select %p196, %s19, 0
      %s198 = smul.addr %s195, 8
      %s199 = sadd.s32 %s197, %s198
      %s200 = smul.addr %s199, 4
      %s201 = scalar_lea.vmem %s3, %s200
      %p202 = scmp.lt.s32.totalorder %s18, 1
      %s203 = scalar_select %p202, %s18, 1
      %s204 = smul.addr %s203, 72
      %s205 = smul.addr %s204, 4
      %s206 = scalar_lea.vmem %s0, %s205
      %p207 = scmp.lt.s32.totalorder %s19, 0
      %s208 = scalar_select %p207, %s19, 0
      %s209 = smul.addr %s208, 4
      %s210 = scalar_lea.vmem %s1, %s209
      %p211 = scmp.lt.s32.totalorder %s19, 0
      %s212 = scalar_select %p211, %s19, 0
      %s213 = scalar_lea.vmem %s2, %s212
      %p214 = scmp.lt.s32.totalorder %s18, 1
      %s215 = scalar_select %p214, %s18, 1
      %p216 = scmp.lt.s32.totalorder %s19, 0
      %s217 = scalar_select %p216, %s19, 0
      %s218 = smul.addr %s215, 8
      %s219 = sadd.s32 %s217, %s218
      %s220 = smul.addr %s219, 4
      %s221 = scalar_lea.vmem %s3, %s220
      %v223 = vld [vmem:[%s206] sm:$0xf]
      %v224 = vld [vmem:[%s206 + $0x4] sm:$0x1]
      %v225 = vld [vmem:[%s206 + $0x8] sm:$0xf]
      %v226 = vld [vmem:[%s206 + $0xc] sm:$0x1]
      %v227 = vld [vmem:[%s206 + $0x10] sm:$0xf]
      %v228 = vld [vmem:[%s206 + $0x14] sm:$0x1]
      %v229 = vld [vmem:[%s206 + $0x18] sm:$0xf]
      %v230 = vld [vmem:[%s206 + $0x1c] sm:$0x1]
      %v231 = vld [vmem:[%s206 + $0x20] sm:$0xf]
      %v232 = vld [vmem:[%s206 + $0x24] sm:$0x1]
      %v233 = vld [vmem:[%s206 + $0x28] sm:$0xf]
      %v234 = vld [vmem:[%s206 + $0x2c] sm:$0x1]
      %v235 = vld [vmem:[%s206 + $0x30] sm:$0xf]
      %v236 = vld [vmem:[%s206 + $0x34] sm:$0x1]
      %v237 = vld [vmem:[%s206 + $0x38] sm:$0xf]
      %v238 = vld [vmem:[%s206 + $0x3c] sm:$0x1]
      %v239 = vunpack.c.l.bf16 %v223
      %v240 = vunpack.c.l.bf16 %v224
      %v241 = vunpack.c.l.bf16 %v225
      %v242 = vunpack.c.l.bf16 %v226
      %v243 = vunpack.c.l.bf16 %v227
      %v244 = vunpack.c.l.bf16 %v228
      %v245 = vunpack.c.l.bf16 %v229
      %v246 = vunpack.c.l.bf16 %v230
      %v247 = vunpack.c.l.bf16 %v231
      %v248 = vunpack.c.l.bf16 %v232
      %v249 = vunpack.c.l.bf16 %v233
      %v250 = vunpack.c.l.bf16 %v234
      %v251 = vunpack.c.l.bf16 %v235
      %v252 = vunpack.c.l.bf16 %v236
      %v253 = vunpack.c.l.bf16 %v237
      %v254 = vunpack.c.l.bf16 %v238
      %v255 = vpack.c.bf16 %v241, %v239
      %v256 = vpack.c.bf16 %v245, %v243
      %v257 = vpack.c.bf16 %v249, %v247
      %v258 = vpack.c.bf16 %v253, %v251
      %v259 = vld [vmem:[%s210] sm:$0xf]
      %v260 = vld [vmem:[%s210 + $0x4] sm:$0xf]
      %v261 = vld [vmem:[%s210 + $0x8] sm:$0xf]
      %v262 = vld [vmem:[%s210 + $0xc] sm:$0xf]
      %v263 = vld [vmem:[%s210 + $0x10] sm:$0xf]
      %v264 = vld [vmem:[%s210 + $0x14] sm:$0xf]
      %v265 = vld [vmem:[%s210 + $0x18] sm:$0xf]
      %v266 = vld [vmem:[%s210 + $0x1c] sm:$0xf]
      %v267 = vld [vmem:[%s210 + $0x20] sm:$0xf]
      %v268 = vld [vmem:[%s210 + $0x24] sm:$0xf]
      %v269 = vld [vmem:[%s210 + $0x28] sm:$0xf]
      %v270 = vld [vmem:[%s210 + $0x2c] sm:$0xf]
      %v271 = vld [vmem:[%s210 + $0x30] sm:$0xf]
      %v272 = vld [vmem:[%s210 + $0x34] sm:$0xf]
      %v273 = vld [vmem:[%s210 + $0x38] sm:$0xf]
      %v274 = vld [vmem:[%s210 + $0x3c] sm:$0xf]
      %s275 = scalar_lea.vmem %s206, 72
      %v276 = vld [vmem:[%s275] sm:$0xf]
      %v277 = vld [vmem:[%s275 + $0x8] sm:$0xf]
      %v278 = vld [vmem:[%s275 + $0x10] sm:$0xf]
      %v279 = vld [vmem:[%s275 + $0x18] sm:$0xf]
      %v280 = vld [vmem:[%s275 + $0x20] sm:$0xf]
      %v281 = vld [vmem:[%s275 + $0x28] sm:$0xf]
      %v282 = vld [vmem:[%s275 + $0x30] sm:$0xf]
      %v283 = vld [vmem:[%s275 + $0x38] sm:$0xf]
      %v284 = vunpack.c.l.bf16 %v276
      %v285 = vunpack.c.l.bf16 %v277
      %v286 = vunpack.c.l.bf16 %v278
      %v287 = vunpack.c.l.bf16 %v279
      %v288 = vunpack.c.l.bf16 %v280
      %v289 = vunpack.c.l.bf16 %v281
      %v290 = vunpack.c.l.bf16 %v282
      %v291 = vunpack.c.l.bf16 %v283
      %v292 = vpack.c.bf16 %v285, %v284
      %v293 = vpack.c.bf16 %v287, %v286
      %v294 = vpack.c.bf16 %v289, %v288
      %v295 = vpack.c.bf16 %v291, %v290
      %s296 = scalar_lea.vmem %s210, 64
      %v297 = vld [vmem:[%s296] sm:$0xf]
      %v298 = vld [vmem:[%s296 + $0x4] sm:$0xf]
      %v299 = vld [vmem:[%s296 + $0x8] sm:$0xf]
      %v300 = vld [vmem:[%s296 + $0xc] sm:$0xf]
      %v301 = vld [vmem:[%s296 + $0x10] sm:$0xf]
      %v302 = vld [vmem:[%s296 + $0x14] sm:$0xf]
      %v303 = vld [vmem:[%s296 + $0x18] sm:$0xf]
      %v304 = vld [vmem:[%s296 + $0x1c] sm:$0xf]
      %v305 = vld [vmem:[%s296 + $0x20] sm:$0xf]
      %v306 = vld [vmem:[%s296 + $0x24] sm:$0xf]
      %v307 = vld [vmem:[%s296 + $0x28] sm:$0xf]
      %v308 = vld [vmem:[%s296 + $0x2c] sm:$0xf]
      %v309 = vld [vmem:[%s296 + $0x30] sm:$0xf]
      %v310 = vld [vmem:[%s296 + $0x34] sm:$0xf]
      %v311 = vld [vmem:[%s296 + $0x38] sm:$0xf]
      %v312 = vld [vmem:[%s296 + $0x3c] sm:$0xf]
      %v329 = vunpack.c.l.b16 %v297
      %v330 = vunpack.c.l.b16 %v298
      %v331 = vunpack.c.l.b16 %v299
      %v332 = vunpack.c.l.b16 %v300
      %v333 = vunpack.c.l.b16 %v301
      %v334 = vunpack.c.l.b16 %v302
      %v335 = vunpack.c.l.b16 %v303
      %v336 = vunpack.c.l.b16 %v304
      %v337 = vunpack.c.l.b16 %v305
      %v338 = vunpack.c.l.b16 %v306
      %v339 = vunpack.c.l.b16 %v307
      %v340 = vunpack.c.l.b16 %v308
      %v341 = vunpack.c.l.b16 %v309
      %v342 = vunpack.c.l.b16 %v310
      %v343 = vunpack.c.l.b16 %v311
      %v344 = vunpack.c.l.b16 %v312
      %v345 = vpack.c.b16 %v330, %v329
      %v346 = vpack.c.b16 %v332, %v331
      %v347 = vpack.c.b16 %v334, %v333
      %v348 = vpack.c.b16 %v336, %v335
      %v349 = vpack.c.b16 %v338, %v337
      %v350 = vpack.c.b16 %v340, %v339
      %v351 = vpack.c.b16 %v342, %v341
      %v352 = vpack.c.b16 %v344, %v343
      %361 = vmatprep.subr.bf16.mxu0 0
      %362 = vmatpush1.bf16.msra.mxu0 %v345
      %363 = vmatprep.subr.bf16.mxu0 0
      %364 = vmatpush1.bf16.msra.mxu0 %v346
      %365 = vmatprep.subr.bf16.mxu0 0
      %366 = vmatpush1.bf16.msra.mxu0 %v347
      %367 = vmatprep.subr.bf16.mxu0 0
      %368 = vmatpush1.bf16.msra.mxu0 %v348
      %369 = vmatprep.subr.bf16.mxu0 0
      %370 = vmatpush1.bf16.msra.mxu0 %v349
      %371 = vmatprep.subr.bf16.mxu0 0
      %372 = vmatpush1.bf16.msra.mxu0 %v350
      %373 = vmatprep.subr.bf16.mxu0 0
      %374 = vmatpush1.bf16.msra.mxu0 %v351
      %375 = vmatprep.subr.bf16.mxu0 0
      %376 = vmatpush1.bf16.msra.mxu0 %v352
      %377 = vmatprep.subr.bf16.mxu0 0
      %378 = vmatpush1.bf16.msra.mxu0 0
      %379 = vmatprep.subr.bf16.mxu0 0
      %380 = vmatpush1.bf16.msra.mxu0 0
      %381 = vmatprep.subr.bf16.mxu0 0
      %382 = vmatpush1.bf16.msra.mxu0 0
      %383 = vmatprep.subr.bf16.mxu0 0
      %384 = vmatpush1.bf16.msra.mxu0 0
      %385 = vmatprep.subr.bf16.mxu0 0
      %386 = vmatpush1.bf16.msra.mxu0 0
      %387 = vmatprep.subr.bf16.mxu0 0
      %388 = vmatpush1.bf16.msra.mxu0 0
      %389 = vmatprep.subr.bf16.mxu0 0
      %390 = vmatpush1.bf16.msra.mxu0 0
      %391 = vmatprep.subr.bf16.mxu0 0
      %392 = vmatpush1.bf16.msra.mxu0 0
      %393 = vmatprep.mubr.bf16.mxu0 0
      %394 = vmatmul.mubr.bf16.gmra.mrb[0].mxu0 %v292
      %v395 = vpop.f32.mrb[0].mxu0
      %v396 = vadd.f32 0.0, %v395
      %v397 = vpop.f32.mrb[0].mxu0
      %v398 = vpop.f32.mrb[0].mxu0
      %v399 = vadd.f32 0.0, %v398
      %v400 = vpop.f32.mrb[0].mxu0
      %401 = vmatprep.mubr.bf16.mxu0 0
      %402 = vmatmul.mubr.bf16.gmra.mrb[0].mxu0 %v293
      %v403 = vpop.f32.mrb[0].mxu0
      %v404 = vadd.f32 0.0, %v403
      %v405 = vpop.f32.mrb[0].mxu0
      %v406 = vpop.f32.mrb[0].mxu0
      %v407 = vadd.f32 0.0, %v406
      %v408 = vpop.f32.mrb[0].mxu0
      %409 = vmatprep.mubr.bf16.mxu0 0
      %410 = vmatmul.mubr.bf16.gmra.mrb[0].mxu0 %v294
      %v411 = vpop.f32.mrb[0].mxu0
      %v412 = vadd.f32 0.0, %v411
      %v413 = vpop.f32.mrb[0].mxu0
      %v414 = vpop.f32.mrb[0].mxu0
      %v415 = vadd.f32 0.0, %v414
      %v416 = vpop.f32.mrb[0].mxu0
      %417 = vmatprep.mubr.bf16.mxu0 0
      %418 = vmatmul.mubr.bf16.gmra.mrb[0].mxu0 %v295
      %v419 = vpop.f32.mrb[0].mxu0
      %v420 = vadd.f32 0.0, %v419
      %v421 = vpop.f32.mrb[0].mxu0
      %v422 = vpop.f32.mrb[0].mxu0
      %v423 = vadd.f32 0.0, %v422
      %v424 = vpop.f32.mrb[0].mxu0
      %425 = vdwg.mxu0
      %v442 = vunpack.c.l.b16 %v259
      %v443 = vunpack.c.l.b16 %v260
      %v444 = vunpack.c.l.b16 %v261
      %v445 = vunpack.c.l.b16 %v262
      %v446 = vunpack.c.l.b16 %v263
      %v447 = vunpack.c.l.b16 %v264
      %v448 = vunpack.c.l.b16 %v265
      %v449 = vunpack.c.l.b16 %v266
      %v450 = vunpack.c.l.b16 %v267
      %v451 = vunpack.c.l.b16 %v268
      %v452 = vunpack.c.l.b16 %v269
      %v453 = vunpack.c.l.b16 %v270
      %v454 = vunpack.c.l.b16 %v271
      %v455 = vunpack.c.l.b16 %v272
      %v456 = vunpack.c.l.b16 %v273
      %v457 = vunpack.c.l.b16 %v274
      %v458 = vpack.c.b16 %v443, %v442
      %v459 = vpack.c.b16 %v445, %v444
      %v460 = vpack.c.b16 %v447, %v446
      %v461 = vpack.c.b16 %v449, %v448
      %v462 = vpack.c.b16 %v451, %v450
      %v463 = vpack.c.b16 %v453, %v452
      %v464 = vpack.c.b16 %v455, %v454
      %v465 = vpack.c.b16 %v457, %v456
      %474 = vmatprep.subr.bf16.mxu0 0
      %475 = vmatpush1.bf16.msra.mxu0 %v458
      %476 = vmatprep.subr.bf16.mxu0 0
      %477 = vmatpush1.bf16.msra.mxu0 %v459
      %478 = vmatprep.subr.bf16.mxu0 0
      %479 = vmatpush1.bf16.msra.mxu0 %v460
      %480 = vmatprep.subr.bf16.mxu0 0
      %481 = vmatpush1.bf16.msra.mxu0 %v461
      %482 = vmatprep.subr.bf16.mxu0 0
      %483 = vmatpush1.bf16.msra.mxu0 %v462
      %484 = vmatprep.subr.bf16.mxu0 0
      %485 = vmatpush1.bf16.msra.mxu0 %v463
      %486 = vmatprep.subr.bf16.mxu0 0
      %487 = vmatpush1.bf16.msra.mxu0 %v464
      %488 = vmatprep.subr.bf16.mxu0 0
      %489 = vmatpush1.bf16.msra.mxu0 %v465
      %490 = vmatprep.subr.bf16.mxu0 0
      %491 = vmatpush1.bf16.msra.mxu0 0
      %492 = vmatprep.subr.bf16.mxu0 0
      %493 = vmatpush1.bf16.msra.mxu0 0
      %494 = vmatprep.subr.bf16.mxu0 0
      %495 = vmatpush1.bf16.msra.mxu0 0
      %496 = vmatprep.subr.bf16.mxu0 0
      %497 = vmatpush1.bf16.msra.mxu0 0
      %498 = vmatprep.subr.bf16.mxu0 0
      %499 = vmatpush1.bf16.msra.mxu0 0
      %500 = vmatprep.subr.bf16.mxu0 0
      %501 = vmatpush1.bf16.msra.mxu0 0
      %502 = vmatprep.subr.bf16.mxu0 0
      %503 = vmatpush1.bf16.msra.mxu0 0
      %504 = vmatprep.subr.bf16.mxu0 0
      %505 = vmatpush1.bf16.msra.mxu0 0
      %506 = vmatprep.mubr.bf16.mxu0 0
      %507 = vmatmul.mubr.bf16.gmra.mrb[0].mxu0 %v255
      %v508 = vpop.f32.mrb[0].mxu0
      %v509 = vadd.f32 %v396, %v508
      %v510 = vpop.f32.mrb[0].mxu0
      %v511 = vpop.f32.mrb[0].mxu0
      %v512 = vadd.f32 %v399, %v511
      %v513 = vpop.f32.mrb[0].mxu0
      %514 = vmatprep.mubr.bf16.mxu0 0
      %515 = vmatmul.mubr.bf16.gmra.mrb[0].mxu0 %v256
      %v516 = vpop.f32.mrb[0].mxu0
      %v517 = vadd.f32 %v404, %v516
      %v518 = vpop.f32.mrb[0].mxu0
      %v519 = vpop.f32.mrb[0].mxu0
      %v520 = vadd.f32 %v407, %v519
      %v521 = vpop.f32.mrb[0].mxu0
      %522 = vmatprep.mubr.bf16.mxu0 0
      %523 = vmatmul.mubr.bf16.gmra.mrb[0].mxu0 %v257
      %v524 = vpop.f32.mrb[0].mxu0
      %v525 = vadd.f32 %v412, %v524
      %v526 = vpop.f32.mrb[0].mxu0
      %v527 = vpop.f32.mrb[0].mxu0
      %v528 = vadd.f32 %v415, %v527
      %v529 = vpop.f32.mrb[0].mxu0
      %530 = vmatprep.mubr.bf16.mxu0 0
      %531 = vmatmul.mubr.bf16.gmra.mrb[0].mxu0 %v258
      %v532 = vpop.f32.mrb[0].mxu0
      %v533 = vadd.f32 %v420, %v532
      %v534 = vpop.f32.mrb[0].mxu0
      %v535 = vpop.f32.mrb[0].mxu0
      %v536 = vadd.f32 %v423, %v535
      %v537 = vpop.f32.mrb[0].mxu0
      %538 = vdwg.mxu0
      %vm555 = vcmask 1046528
      %v556 = vrot.slane %v239, 1
      %v557 = vrot.slane %v240, 1
      %v558 = vsel %vm555, %v556, %v557
      %v559 = vrot.slane %v241, 1
      %v560 = vrot.slane %v242, 1
      %v561 = vsel %vm555, %v559, %v560
      %v562 = vrot.slane %v243, 1
      %v563 = vrot.slane %v244, 1
      %v564 = vsel %vm555, %v562, %v563
      %v565 = vrot.slane %v245, 1
      %v566 = vrot.slane %v246, 1
      %v567 = vsel %vm555, %v565, %v566
      %v568 = vrot.slane %v247, 1
      %v569 = vrot.slane %v248, 1
      %v570 = vsel %vm555, %v568, %v569
      %v571 = vrot.slane %v249, 1
      %v572 = vrot.slane %v250, 1
      %v573 = vsel %vm555, %v571, %v572
      %v574 = vrot.slane %v251, 1
      %v575 = vrot.slane %v252, 1
      %v576 = vsel %vm555, %v574, %v575
      %v577 = vrot.slane %v253, 1
      %v578 = vrot.slane %v254, 1
      %v579 = vsel %vm555, %v577, %v578
      %v588 = vpack.c.bf16 %v561, %v558
      %v589 = vpack.c.bf16 %v567, %v564
      %v590 = vpack.c.bf16 %v573, %v570
      %v591 = vpack.c.bf16 %v579, %v576
      %s592 = scalar_lea.vmem %s210, 128
      %v593 = vld [vmem:[%s592] sm:$0xf]
      %v594 = vld [vmem:[%s592 + $0x4] sm:$0xf]
      %v595 = vld [vmem:[%s592 + $0x8] sm:$0xf]
      %v596 = vld [vmem:[%s592 + $0xc] sm:$0xf]
      %v597 = vld [vmem:[%s592 + $0x10] sm:$0xf]
      %v598 = vld [vmem:[%s592 + $0x14] sm:$0xf]
      %v599 = vld [vmem:[%s592 + $0x18] sm:$0xf]
      %v600 = vld [vmem:[%s592 + $0x1c] sm:$0xf]
      %v601 = vld [vmem:[%s592 + $0x20] sm:$0xf]
      %v602 = vld [vmem:[%s592 + $0x24] sm:$0xf]
      %v603 = vld [vmem:[%s592 + $0x28] sm:$0xf]
      %v604 = vld [vmem:[%s592 + $0x2c] sm:$0xf]
      %v605 = vld [vmem:[%s592 + $0x30] sm:$0xf]
      %v606 = vld [vmem:[%s592 + $0x34] sm:$0xf]
      %v607 = vld [vmem:[%s592 + $0x38] sm:$0xf]
      %v608 = vld [vmem:[%s592 + $0x3c] sm:$0xf]
      %v625 = vunpack.c.l.b16 %v593
      %v626 = vunpack.c.l.b16 %v594
      %v627 = vunpack.c.l.b16 %v595
      %v628 = vunpack.c.l.b16 %v596
      %v629 = vunpack.c.l.b16 %v597
      %v630 = vunpack.c.l.b16 %v598
      %v631 = vunpack.c.l.b16 %v599
      %v632 = vunpack.c.l.b16 %v600
      %v633 = vunpack.c.l.b16 %v601
      %v634 = vunpack.c.l.b16 %v602
      %v635 = vunpack.c.l.b16 %v603
      %v636 = vunpack.c.l.b16 %v604
      %v637 = vunpack.c.l.b16 %v605
      %v638 = vunpack.c.l.b16 %v606
      %v639 = vunpack.c.l.b16 %v607
      %v640 = vunpack.c.l.b16 %v608
      %v641 = vpack.c.b16 %v626, %v625
      %v642 = vpack.c.b16 %v628, %v627
      %v643 = vpack.c.b16 %v630, %v629
      %v644 = vpack.c.b16 %v632, %v631
      %v645 = vpack.c.b16 %v634, %v633
      %v646 = vpack.c.b16 %v636, %v635
      %v647 = vpack.c.b16 %v638, %v637
      %v648 = vpack.c.b16 %v640, %v639
      %657 = vmatprep.subr.bf16.mxu0 0
      %658 = vmatpush1.bf16.msra.mxu0 %v641
      %659 = vmatprep.subr.bf16.mxu0 0
      %660 = vmatpush1.bf16.msra.mxu0 %v642
      %661 = vmatprep.subr.bf16.mxu0 0
      %662 = vmatpush1.bf16.msra.mxu0 %v643
      %663 = vmatprep.subr.bf16.mxu0 0
      %664 = vmatpush1.bf16.msra.mxu0 %v644
      %665 = vmatprep.subr.bf16.mxu0 0
      %666 = vmatpush1.bf16.msra.mxu0 %v645
      %667 = vmatprep.subr.bf16.mxu0 0
      %668 = vmatpush1.bf16.msra.mxu0 %v646
      %669 = vmatprep.subr.bf16.mxu0 0
      %670 = vmatpush1.bf16.msra.mxu0 %v647
      %671 = vmatprep.subr.bf16.mxu0 0
      %672 = vmatpush1.bf16.msra.mxu0 %v648
      %673 = vmatprep.subr.bf16.mxu0 0
      %674 = vmatpush1.bf16.msra.mxu0 0
      %675 = vmatprep.subr.bf16.mxu0 0
      %676 = vmatpush1.bf16.msra.mxu0 0
      %677 = vmatprep.subr.bf16.mxu0 0
      %678 = vmatpush1.bf16.msra.mxu0 0
      %679 = vmatprep.subr.bf16.mxu0 0
      %680 = vmatpush1.bf16.msra.mxu0 0
      %681 = vmatprep.subr.bf16.mxu0 0
      %682 = vmatpush1.bf16.msra.mxu0 0
      %683 = vmatprep.subr.bf16.mxu0 0
      %684 = vmatpush1.bf16.msra.mxu0 0
      %685 = vmatprep.subr.bf16.mxu0 0
      %686 = vmatpush1.bf16.msra.mxu0 0
      %687 = vmatprep.subr.bf16.mxu0 0
      %688 = vmatpush1.bf16.msra.mxu0 0
      %689 = vmatprep.mubr.bf16.mxu0 0
      %690 = vmatmul.mubr.bf16.gmra.mrb[0].mxu0 %v588
      %v691 = vpop.f32.mrb[0].mxu0
      %v692 = vadd.f32 0.0, %v691
      %v693 = vpop.f32.mrb[0].mxu0
      %v694 = vpop.f32.mrb[0].mxu0
      %v695 = vadd.f32 0.0, %v694
      %v696 = vpop.f32.mrb[0].mxu0
      %697 = vmatprep.mubr.bf16.mxu0 0
      %698 = vmatmul.mubr.bf16.gmra.mrb[0].mxu0 %v589
      %v699 = vpop.f32.mrb[0].mxu0
      %v700 = vadd.f32 0.0, %v699
      %v701 = vpop.f32.mrb[0].mxu0
      %v702 = vpop.f32.mrb[0].mxu0
      %v703 = vadd.f32 0.0, %v702
      %v704 = vpop.f32.mrb[0].mxu0
      %705 = vmatprep.mubr.bf16.mxu0 0
      %706 = vmatmul.mubr.bf16.gmra.mrb[0].mxu0 %v590
      %v707 = vpop.f32.mrb[0].mxu0
      %v708 = vadd.f32 0.0, %v707
      %v709 = vpop.f32.mrb[0].mxu0
      %v710 = vpop.f32.mrb[0].mxu0
      %v711 = vadd.f32 0.0, %v710
      %v712 = vpop.f32.mrb[0].mxu0
      %713 = vmatprep.mubr.bf16.mxu0 0
      %714 = vmatmul.mubr.bf16.gmra.mrb[0].mxu0 %v591
      %v715 = vpop.f32.mrb[0].mxu0
      %v716 = vadd.f32 0.0, %v715
      %v717 = vpop.f32.mrb[0].mxu0
      %v718 = vpop.f32.mrb[0].mxu0
      %v719 = vadd.f32 0.0, %v718
      %v720 = vpop.f32.mrb[0].mxu0
      %721 = vdwg.mxu0
      %v722 = vadd.f32 %v509, %v692
      %v723 = vadd.f32 %v512, %v695
      %v724 = vadd.f32 %v517, %v700
      %v725 = vadd.f32 %v520, %v703
      %v726 = vadd.f32 %v525, %v708
      %v727 = vadd.f32 %v528, %v711
      %v728 = vadd.f32 %v533, %v716
      %v729 = vadd.f32 %v536, %v719
      %s730 = scalar_lea.vmem %s206, 144
      %v731 = vld [vmem:[%s730] sm:$0xf]
      %v732 = vld [vmem:[%s730 + $0x4] sm:$0x1]
      %v733 = vld [vmem:[%s730 + $0x8] sm:$0xf]
      %v734 = vld [vmem:[%s730 + $0xc] sm:$0x1]
      %v735 = vld [vmem:[%s730 + $0x10] sm:$0xf]
      %v736 = vld [vmem:[%s730 + $0x14] sm:$0x1]
      %v737 = vld [vmem:[%s730 + $0x18] sm:$0xf]
      %v738 = vld [vmem:[%s730 + $0x1c] sm:$0x1]
      %v739 = vld [vmem:[%s730 + $0x20] sm:$0xf]
      %v740 = vld [vmem:[%s730 + $0x24] sm:$0x1]
      %v741 = vld [vmem:[%s730 + $0x28] sm:$0xf]
      %v742 = vld [vmem:[%s730 + $0x2c] sm:$0x1]
      %v743 = vld [vmem:[%s730 + $0x30] sm:$0xf]
      %v744 = vld [vmem:[%s730 + $0x34] sm:$0x1]
      %v745 = vld [vmem:[%s730 + $0x38] sm:$0xf]
      %v746 = vld [vmem:[%s730 + $0x3c] sm:$0x1]
      %v747 = vunpack.c.l.bf16 %v731
      %v748 = vunpack.c.l.bf16 %v732
      %v749 = vunpack.c.l.bf16 %v733
      %v750 = vunpack.c.l.bf16 %v734
      %v751 = vunpack.c.l.bf16 %v735
      %v752 = vunpack.c.l.bf16 %v736
      %v753 = vunpack.c.l.bf16 %v737
      %v754 = vunpack.c.l.bf16 %v738
      %v755 = vunpack.c.l.bf16 %v739
      %v756 = vunpack.c.l.bf16 %v740
      %v757 = vunpack.c.l.bf16 %v741
      %v758 = vunpack.c.l.bf16 %v742
      %v759 = vunpack.c.l.bf16 %v743
      %v760 = vunpack.c.l.bf16 %v744
      %v761 = vunpack.c.l.bf16 %v745
      %v762 = vunpack.c.l.bf16 %v746
      %v763 = vpack.c.bf16 %v749, %v747
      %v764 = vpack.c.bf16 %v753, %v751
      %v765 = vpack.c.bf16 %v757, %v755
      %v766 = vpack.c.bf16 %v761, %v759
      %s767 = scalar_lea.vmem %s210, 192
      %v768 = vld [vmem:[%s767] sm:$0xf]
      %v769 = vld [vmem:[%s767 + $0x4] sm:$0xf]
      %v770 = vld [vmem:[%s767 + $0x8] sm:$0xf]
      %v771 = vld [vmem:[%s767 + $0xc] sm:$0xf]
      %v772 = vld [vmem:[%s767 + $0x10] sm:$0xf]
      %v773 = vld [vmem:[%s767 + $0x14] sm:$0xf]
      %v774 = vld [vmem:[%s767 + $0x18] sm:$0xf]
      %v775 = vld [vmem:[%s767 + $0x1c] sm:$0xf]
      %v776 = vld [vmem:[%s767 + $0x20] sm:$0xf]
      %v777 = vld [vmem:[%s767 + $0x24] sm:$0xf]
      %v778 = vld [vmem:[%s767 + $0x28] sm:$0xf]
      %v779 = vld [vmem:[%s767 + $0x2c] sm:$0xf]
      %v780 = vld [vmem:[%s767 + $0x30] sm:$0xf]
      %v781 = vld [vmem:[%s767 + $0x34] sm:$0xf]
      %v782 = vld [vmem:[%s767 + $0x38] sm:$0xf]
      %v783 = vld [vmem:[%s767 + $0x3c] sm:$0xf]
      %v800 = vunpack.c.l.b16 %v768
      %v801 = vunpack.c.l.b16 %v769
      %v802 = vunpack.c.l.b16 %v770
      %v803 = vunpack.c.l.b16 %v771
      %v804 = vunpack.c.l.b16 %v772
      %v805 = vunpack.c.l.b16 %v773
      %v806 = vunpack.c.l.b16 %v774
      %v807 = vunpack.c.l.b16 %v775
      %v808 = vunpack.c.l.b16 %v776
      %v809 = vunpack.c.l.b16 %v777
      %v810 = vunpack.c.l.b16 %v778
      %v811 = vunpack.c.l.b16 %v779
      %v812 = vunpack.c.l.b16 %v780
      %v813 = vunpack.c.l.b16 %v781
      %v814 = vunpack.c.l.b16 %v782
      %v815 = vunpack.c.l.b16 %v783
      %v816 = vpack.c.b16 %v801, %v800
      %v817 = vpack.c.b16 %v803, %v802
      %v818 = vpack.c.b16 %v805, %v804
      %v819 = vpack.c.b16 %v807, %v806
      %v820 = vpack.c.b16 %v809, %v808
      %v821 = vpack.c.b16 %v811, %v810
      %v822 = vpack.c.b16 %v813, %v812
      %v823 = vpack.c.b16 %v815, %v814
      %832 = vmatprep.subr.bf16.mxu0 0
      %833 = vmatpush1.bf16.msra.mxu0 %v816
      %834 = vmatprep.subr.bf16.mxu0 0
      %835 = vmatpush1.bf16.msra.mxu0 %v817
      %836 = vmatprep.subr.bf16.mxu0 0
      %837 = vmatpush1.bf16.msra.mxu0 %v818
      %838 = vmatprep.subr.bf16.mxu0 0
      %839 = vmatpush1.bf16.msra.mxu0 %v819
      %840 = vmatprep.subr.bf16.mxu0 0
      %841 = vmatpush1.bf16.msra.mxu0 %v820
      %842 = vmatprep.subr.bf16.mxu0 0
      %843 = vmatpush1.bf16.msra.mxu0 %v821
      %844 = vmatprep.subr.bf16.mxu0 0
      %845 = vmatpush1.bf16.msra.mxu0 %v822
      %846 = vmatprep.subr.bf16.mxu0 0
      %847 = vmatpush1.bf16.msra.mxu0 %v823
      %848 = vmatprep.subr.bf16.mxu0 0
      %849 = vmatpush1.bf16.msra.mxu0 0
      %850 = vmatprep.subr.bf16.mxu0 0
      %851 = vmatpush1.bf16.msra.mxu0 0
      %852 = vmatprep.subr.bf16.mxu0 0
      %853 = vmatpush1.bf16.msra.mxu0 0
      %854 = vmatprep.subr.bf16.mxu0 0
      %855 = vmatpush1.bf16.msra.mxu0 0
      %856 = vmatprep.subr.bf16.mxu0 0
      %857 = vmatpush1.bf16.msra.mxu0 0
      %858 = vmatprep.subr.bf16.mxu0 0
      %859 = vmatpush1.bf16.msra.mxu0 0
      %860 = vmatprep.subr.bf16.mxu0 0
      %861 = vmatpush1.bf16.msra.mxu0 0
      %862 = vmatprep.subr.bf16.mxu0 0
      %863 = vmatpush1.bf16.msra.mxu0 0
      %864 = vmatprep.mubr.bf16.mxu0 0
      %865 = vmatmul.mubr.bf16.gmra.mrb[0].mxu0 %v763
      %v866 = vpop.f32.mrb[0].mxu0
      %v867 = vadd.f32 0.0, %v866
      %v868 = vpop.f32.mrb[0].mxu0
      %v869 = vpop.f32.mrb[0].mxu0
      %v870 = vadd.f32 0.0, %v869
      %v871 = vpop.f32.mrb[0].mxu0
      %872 = vmatprep.mubr.bf16.mxu0 0
      %873 = vmatmul.mubr.bf16.gmra.mrb[0].mxu0 %v764
      %v874 = vpop.f32.mrb[0].mxu0
      %v875 = vadd.f32 0.0, %v874
      %v876 = vpop.f32.mrb[0].mxu0
      %v877 = vpop.f32.mrb[0].mxu0
      %v878 = vadd.f32 0.0, %v877
      %v879 = vpop.f32.mrb[0].mxu0
      %880 = vmatprep.mubr.bf16.mxu0 0
      %881 = vmatmul.mubr.bf16.gmra.mrb[0].mxu0 %v765
      %v882 = vpop.f32.mrb[0].mxu0
      %v883 = vadd.f32 0.0, %v882
      %v884 = vpop.f32.mrb[0].mxu0
      %v885 = vpop.f32.mrb[0].mxu0
      %v886 = vadd.f32 0.0, %v885
      %v887 = vpop.f32.mrb[0].mxu0
      %888 = vmatprep.mubr.bf16.mxu0 0
      %889 = vmatmul.mubr.bf16.gmra.mrb[0].mxu0 %v766
      %v890 = vpop.f32.mrb[0].mxu0
      %v891 = vadd.f32 0.0, %v890
      %v892 = vpop.f32.mrb[0].mxu0
      %v893 = vpop.f32.mrb[0].mxu0
      %v894 = vadd.f32 0.0, %v893
      %v895 = vpop.f32.mrb[0].mxu0
      %896 = vdwg.mxu0
      %v897 = vadd.f32 %v722, %v867
      %v898 = vadd.f32 %v723, %v870
      %v899 = vadd.f32 %v724, %v875
      %v900 = vadd.f32 %v725, %v878
      %v901 = vadd.f32 %v726, %v883
      %v902 = vadd.f32 %v727, %v886
      %v903 = vadd.f32 %v728, %v891
      %v904 = vadd.f32 %v729, %v894
      %s905 = scalar_lea.vmem %s206, 216
      %v906 = vld [vmem:[%s905] sm:$0xf]
      %v907 = vld [vmem:[%s905 + $0x8] sm:$0xf]
      %v908 = vld [vmem:[%s905 + $0x10] sm:$0xf]
      %v909 = vld [vmem:[%s905 + $0x18] sm:$0xf]
      %v910 = vld [vmem:[%s905 + $0x20] sm:$0xf]
      %v911 = vld [vmem:[%s905 + $0x28] sm:$0xf]
      %v912 = vld [vmem:[%s905 + $0x30] sm:$0xf]
      %v913 = vld [vmem:[%s905 + $0x38] sm:$0xf]
      %v914 = vunpack.c.l.bf16 %v906
      %v915 = vunpack.c.l.bf16 %v907
      %v916 = vunpack.c.l.bf16 %v908
      %v917 = vunpack.c.l.bf16 %v909
      %v918 = vunpack.c.l.bf16 %v910
      %v919 = vunpack.c.l.bf16 %v911
      %v920 = vunpack.c.l.bf16 %v912
      %v921 = vunpack.c.l.bf16 %v913
      %v922 = vpack.c.bf16 %v915, %v914
      %v923 = vpack.c.bf16 %v917, %v916
      %v924 = vpack.c.bf16 %v919, %v918
      %v925 = vpack.c.bf16 %v921, %v920
      %s926 = scalar_lea.vmem %s210, 256
      %v927 = vld [vmem:[%s926] sm:$0xf]
      %v928 = vld [vmem:[%s926 + $0x4] sm:$0xf]
      %v929 = vld [vmem:[%s926 + $0x8] sm:$0xf]
      %v930 = vld [vmem:[%s926 + $0xc] sm:$0xf]
      %v931 = vld [vmem:[%s926 + $0x10] sm:$0xf]
      %v932 = vld [vmem:[%s926 + $0x14] sm:$0xf]
      %v933 = vld [vmem:[%s926 + $0x18] sm:$0xf]
      %v934 = vld [vmem:[%s926 + $0x1c] sm:$0xf]
      %v935 = vld [vmem:[%s926 + $0x20] sm:$0xf]
      %v936 = vld [vmem:[%s926 + $0x24] sm:$0xf]
      %v937 = vld [vmem:[%s926 + $0x28] sm:$0xf]
      %v938 = vld [vmem:[%s926 + $0x2c] sm:$0xf]
      %v939 = vld [vmem:[%s926 + $0x30] sm:$0xf]
      %v940 = vld [vmem:[%s926 + $0x34] sm:$0xf]
      %v941 = vld [vmem:[%s926 + $0x38] sm:$0xf]
      %v942 = vld [vmem:[%s926 + $0x3c] sm:$0xf]
      %v959 = vunpack.c.l.b16 %v927
      %v960 = vunpack.c.l.b16 %v928
      %v961 = vunpack.c.l.b16 %v929
      %v962 = vunpack.c.l.b16 %v930
      %v963 = vunpack.c.l.b16 %v931
      %v964 = vunpack.c.l.b16 %v932
      %v965 = vunpack.c.l.b16 %v933
      %v966 = vunpack.c.l.b16 %v934
      %v967 = vunpack.c.l.b16 %v935
      %v968 = vunpack.c.l.b16 %v936
      %v969 = vunpack.c.l.b16 %v937
      %v970 = vunpack.c.l.b16 %v938
      %v971 = vunpack.c.l.b16 %v939
      %v972 = vunpack.c.l.b16 %v940
      %v973 = vunpack.c.l.b16 %v941
      %v974 = vunpack.c.l.b16 %v942
      %v975 = vpack.c.b16 %v960, %v959
      %v976 = vpack.c.b16 %v962, %v961
      %v977 = vpack.c.b16 %v964, %v963
      %v978 = vpack.c.b16 %v966, %v965
      %v979 = vpack.c.b16 %v968, %v967
      %v980 = vpack.c.b16 %v970, %v969
      %v981 = vpack.c.b16 %v972, %v971
      %v982 = vpack.c.b16 %v974, %v973
      %991 = vmatprep.subr.bf16.mxu0 0
      %992 = vmatpush1.bf16.msra.mxu0 %v975
      %993 = vmatprep.subr.bf16.mxu0 0
      %994 = vmatpush1.bf16.msra.mxu0 %v976
      %995 = vmatprep.subr.bf16.mxu0 0
      %996 = vmatpush1.bf16.msra.mxu0 %v977
      %997 = vmatprep.subr.bf16.mxu0 0
      %998 = vmatpush1.bf16.msra.mxu0 %v978
      %999 = vmatprep.subr.bf16.mxu0 0
      %1000 = vmatpush1.bf16.msra.mxu0 %v979
      %1001 = vmatprep.subr.bf16.mxu0 0
      %1002 = vmatpush1.bf16.msra.mxu0 %v980
      %1003 = vmatprep.subr.bf16.mxu0 0
      %1004 = vmatpush1.bf16.msra.mxu0 %v981
      %1005 = vmatprep.subr.bf16.mxu0 0
      %1006 = vmatpush1.bf16.msra.mxu0 %v982
      %1007 = vmatprep.subr.bf16.mxu0 0
      %1008 = vmatpush1.bf16.msra.mxu0 0
      %1009 = vmatprep.subr.bf16.mxu0 0
      %1010 = vmatpush1.bf16.msra.mxu0 0
      %1011 = vmatprep.subr.bf16.mxu0 0
      %1012 = vmatpush1.bf16.msra.mxu0 0
      %1013 = vmatprep.subr.bf16.mxu0 0
      %1014 = vmatpush1.bf16.msra.mxu0 0
      %1015 = vmatprep.subr.bf16.mxu0 0
      %1016 = vmatpush1.bf16.msra.mxu0 0
      %1017 = vmatprep.subr.bf16.mxu0 0
      %1018 = vmatpush1.bf16.msra.mxu0 0
      %1019 = vmatprep.subr.bf16.mxu0 0
      %1020 = vmatpush1.bf16.msra.mxu0 0
      %1021 = vmatprep.subr.bf16.mxu0 0
      %1022 = vmatpush1.bf16.msra.mxu0 0
      %1023 = vmatprep.mubr.bf16.mxu0 0
      %1024 = vmatmul.mubr.bf16.gmra.mrb[0].mxu0 %v922
      %v1025 = vpop.f32.mrb[0].mxu0
      %v1026 = vadd.f32 0.0, %v1025
      %v1027 = vpop.f32.mrb[0].mxu0
      %v1028 = vpop.f32.mrb[0].mxu0
      %v1029 = vadd.f32 0.0, %v1028
      %v1030 = vpop.f32.mrb[0].mxu0
      %1031 = vmatprep.mubr.bf16.mxu0 0
      %1032 = vmatmul.mubr.bf16.gmra.mrb[0].mxu0 %v923
      %v1033 = vpop.f32.mrb[0].mxu0
      %v1034 = vadd.f32 0.0, %v1033
      %v1035 = vpop.f32.mrb[0].mxu0
      %v1036 = vpop.f32.mrb[0].mxu0
      %v1037 = vadd.f32 0.0, %v1036
      %v1038 = vpop.f32.mrb[0].mxu0
      %1039 = vmatprep.mubr.bf16.mxu0 0
      %1040 = vmatmul.mubr.bf16.gmra.mrb[0].mxu0 %v924
      %v1041 = vpop.f32.mrb[0].mxu0
      %v1042 = vadd.f32 0.0, %v1041
      %v1043 = vpop.f32.mrb[0].mxu0
      %v1044 = vpop.f32.mrb[0].mxu0
      %v1045 = vadd.f32 0.0, %v1044
      %v1046 = vpop.f32.mrb[0].mxu0
      %1047 = vmatprep.mubr.bf16.mxu0 0
      %1048 = vmatmul.mubr.bf16.gmra.mrb[0].mxu0 %v925
      %v1049 = vpop.f32.mrb[0].mxu0
      %v1050 = vadd.f32 0.0, %v1049
      %v1051 = vpop.f32.mrb[0].mxu0
      %v1052 = vpop.f32.mrb[0].mxu0
      %v1053 = vadd.f32 0.0, %v1052
      %v1054 = vpop.f32.mrb[0].mxu0
      %1055 = vdwg.mxu0
      %v1056 = vadd.f32 %v897, %v1026
      %v1057 = vadd.f32 %v898, %v1029
      %v1058 = vadd.f32 %v899, %v1034
      %v1059 = vadd.f32 %v900, %v1037
      %v1060 = vadd.f32 %v901, %v1042
      %v1061 = vadd.f32 %v902, %v1045
      %v1062 = vadd.f32 %v903, %v1050
      %v1063 = vadd.f32 %v904, %v1053
      %v1080 = vrot.slane %v747, 1
      %v1081 = vrot.slane %v748, 1
      %v1082 = vsel %vm555, %v1080, %v1081
      %v1083 = vrot.slane %v749, 1
      %v1084 = vrot.slane %v750, 1
      %v1085 = vsel %vm555, %v1083, %v1084
      %v1086 = vrot.slane %v751, 1
      %v1087 = vrot.slane %v752, 1
      %v1088 = vsel %vm555, %v1086, %v1087
      %v1089 = vrot.slane %v753, 1
      %v1090 = vrot.slane %v754, 1
      %v1091 = vsel %vm555, %v1089, %v1090
      %v1092 = vrot.slane %v755, 1
      %v1093 = vrot.slane %v756, 1
      %v1094 = vsel %vm555, %v1092, %v1093
      %v1095 = vrot.slane %v757, 1
      %v1096 = vrot.slane %v758, 1
      %v1097 = vsel %vm555, %v1095, %v1096
      %v1098 = vrot.slane %v759, 1
      %v1099 = vrot.slane %v760, 1
      %v1100 = vsel %vm555, %v1098, %v1099
      %v1101 = vrot.slane %v761, 1
      %v1102 = vrot.slane %v762, 1
      %v1103 = vsel %vm555, %v1101, %v1102
      %v1112 = vpack.c.bf16 %v1085, %v1082
      %v1113 = vpack.c.bf16 %v1091, %v1088
      %v1114 = vpack.c.bf16 %v1097, %v1094
      %v1115 = vpack.c.bf16 %v1103, %v1100
      %s1116 = scalar_lea.vmem %s210, 320
      %v1117 = vld [vmem:[%s1116] sm:$0xf]
      %v1118 = vld [vmem:[%s1116 + $0x4] sm:$0xf]
      %v1119 = vld [vmem:[%s1116 + $0x8] sm:$0xf]
      %v1120 = vld [vmem:[%s1116 + $0xc] sm:$0xf]
      %v1121 = vld [vmem:[%s1116 + $0x10] sm:$0xf]
      %v1122 = vld [vmem:[%s1116 + $0x14] sm:$0xf]
      %v1123 = vld [vmem:[%s1116 + $0x18] sm:$0xf]
      %v1124 = vld [vmem:[%s1116 + $0x1c] sm:$0xf]
      %v1125 = vld [vmem:[%s1116 + $0x20] sm:$0xf]
      %v1126 = vld [vmem:[%s1116 + $0x24] sm:$0xf]
      %v1127 = vld [vmem:[%s1116 + $0x28] sm:$0xf]
      %v1128 = vld [vmem:[%s1116 + $0x2c] sm:$0xf]
      %v1129 = vld [vmem:[%s1116 + $0x30] sm:$0xf]
      %v1130 = vld [vmem:[%s1116 + $0x34] sm:$0xf]
      %v1131 = vld [vmem:[%s1116 + $0x38] sm:$0xf]
      %v1132 = vld [vmem:[%s1116 + $0x3c] sm:$0xf]
      %v1149 = vunpack.c.l.b16 %v1117
      %v1150 = vunpack.c.l.b16 %v1118
      %v1151 = vunpack.c.l.b16 %v1119
      %v1152 = vunpack.c.l.b16 %v1120
      %v1153 = vunpack.c.l.b16 %v1121
      %v1154 = vunpack.c.l.b16 %v1122
      %v1155 = vunpack.c.l.b16 %v1123
      %v1156 = vunpack.c.l.b16 %v1124
      %v1157 = vunpack.c.l.b16 %v1125
      %v1158 = vunpack.c.l.b16 %v1126
      %v1159 = vunpack.c.l.b16 %v1127
      %v1160 = vunpack.c.l.b16 %v1128
      %v1161 = vunpack.c.l.b16 %v1129
      %v1162 = vunpack.c.l.b16 %v1130
      %v1163 = vunpack.c.l.b16 %v1131
      %v1164 = vunpack.c.l.b16 %v1132
      %v1165 = vpack.c.b16 %v1150, %v1149
      %v1166 = vpack.c.b16 %v1152, %v1151
      %v1167 = vpack.c.b16 %v1154, %v1153
      %v1168 = vpack.c.b16 %v1156, %v1155
      %v1169 = vpack.c.b16 %v1158, %v1157
      %v1170 = vpack.c.b16 %v1160, %v1159
      %v1171 = vpack.c.b16 %v1162, %v1161
      %v1172 = vpack.c.b16 %v1164, %v1163
      %1181 = vmatprep.subr.bf16.mxu0 0
      %1182 = vmatpush1.bf16.msra.mxu0 %v1165
      %1183 = vmatprep.subr.bf16.mxu0 0
      %1184 = vmatpush1.bf16.msra.mxu0 %v1166
      %1185 = vmatprep.subr.bf16.mxu0 0
      %1186 = vmatpush1.bf16.msra.mxu0 %v1167
      %1187 = vmatprep.subr.bf16.mxu0 0
      %1188 = vmatpush1.bf16.msra.mxu0 %v1168
      %1189 = vmatprep.subr.bf16.mxu0 0
      %1190 = vmatpush1.bf16.msra.mxu0 %v1169
      %1191 = vmatprep.subr.bf16.mxu0 0
      %1192 = vmatpush1.bf16.msra.mxu0 %v1170
      %1193 = vmatprep.subr.bf16.mxu0 0
      %1194 = vmatpush1.bf16.msra.mxu0 %v1171
      %1195 = vmatprep.subr.bf16.mxu0 0
      %1196 = vmatpush1.bf16.msra.mxu0 %v1172
      %1197 = vmatprep.subr.bf16.mxu0 0
      %1198 = vmatpush1.bf16.msra.mxu0 0
      %1199 = vmatprep.subr.bf16.mxu0 0
      %1200 = vmatpush1.bf16.msra.mxu0 0
      %1201 = vmatprep.subr.bf16.mxu0 0
      %1202 = vmatpush1.bf16.msra.mxu0 0
      %1203 = vmatprep.subr.bf16.mxu0 0
      %1204 = vmatpush1.bf16.msra.mxu0 0
      %1205 = vmatprep.subr.bf16.mxu0 0
      %1206 = vmatpush1.bf16.msra.mxu0 0
      %1207 = vmatprep.subr.bf16.mxu0 0
      %1208 = vmatpush1.bf16.msra.mxu0 0
      %1209 = vmatprep.subr.bf16.mxu0 0
      %1210 = vmatpush1.bf16.msra.mxu0 0
      %1211 = vmatprep.subr.bf16.mxu0 0
      %1212 = vmatpush1.bf16.msra.mxu0 0
      %1213 = vmatprep.mubr.bf16.mxu0 0
      %1214 = vmatmul.mubr.bf16.gmra.mrb[0].mxu0 %v1112
      %v1215 = vpop.f32.mrb[0].mxu0
      %v1216 = vadd.f32 0.0, %v1215
      %v1217 = vpop.f32.mrb[0].mxu0
      %v1218 = vpop.f32.mrb[0].mxu0
      %v1219 = vadd.f32 0.0, %v1218
      %v1220 = vpop.f32.mrb[0].mxu0
      %1221 = vmatprep.mubr.bf16.mxu0 0
      %1222 = vmatmul.mubr.bf16.gmra.mrb[0].mxu0 %v1113
      %v1223 = vpop.f32.mrb[0].mxu0
      %v1224 = vadd.f32 0.0, %v1223
      %v1225 = vpop.f32.mrb[0].mxu0
      %v1226 = vpop.f32.mrb[0].mxu0
      %v1227 = vadd.f32 0.0, %v1226
      %v1228 = vpop.f32.mrb[0].mxu0
      %1229 = vmatprep.mubr.bf16.mxu0 0
      %1230 = vmatmul.mubr.bf16.gmra.mrb[0].mxu0 %v1114
      %v1231 = vpop.f32.mrb[0].mxu0
      %v1232 = vadd.f32 0.0, %v1231
      %v1233 = vpop.f32.mrb[0].mxu0
      %v1234 = vpop.f32.mrb[0].mxu0
      %v1235 = vadd.f32 0.0, %v1234
      %v1236 = vpop.f32.mrb[0].mxu0
      %1237 = vmatprep.mubr.bf16.mxu0 0
      %1238 = vmatmul.mubr.bf16.gmra.mrb[0].mxu0 %v1115
      %v1239 = vpop.f32.mrb[0].mxu0
      %v1240 = vadd.f32 0.0, %v1239
      %v1241 = vpop.f32.mrb[0].mxu0
      %v1242 = vpop.f32.mrb[0].mxu0
      %v1243 = vadd.f32 0.0, %v1242
      %v1244 = vpop.f32.mrb[0].mxu0
      %1245 = vdwg.mxu0
      %v1246 = vadd.f32 %v1056, %v1216
      %v1247 = vadd.f32 %v1057, %v1219
      %v1248 = vadd.f32 %v1058, %v1224
      %v1249 = vadd.f32 %v1059, %v1227
      %v1250 = vadd.f32 %v1060, %v1232
      %v1251 = vadd.f32 %v1061, %v1235
      %v1252 = vadd.f32 %v1062, %v1240
      %v1253 = vadd.f32 %v1063, %v1243
      %s1254 = scalar_lea.vmem %s206, 8
      %v1255 = vld [vmem:[%s1254] sm:$0xf]
      %v1256 = vld [vmem:[%s1254 + $0x4] sm:$0x1]
      %v1257 = vld [vmem:[%s1254 + $0x8] sm:$0xf]
      %v1258 = vld [vmem:[%s1254 + $0xc] sm:$0x1]
      %v1259 = vld [vmem:[%s1254 + $0x10] sm:$0xf]
      %v1260 = vld [vmem:[%s1254 + $0x14] sm:$0x1]
      %v1261 = vld [vmem:[%s1254 + $0x18] sm:$0xf]
      %v1262 = vld [vmem:[%s1254 + $0x1c] sm:$0x1]
      %v1263 = vld [vmem:[%s1254 + $0x20] sm:$0xf]
      %v1264 = vld [vmem:[%s1254 + $0x24] sm:$0x1]
      %v1265 = vld [vmem:[%s1254 + $0x28] sm:$0xf]
      %v1266 = vld [vmem:[%s1254 + $0x2c] sm:$0x1]
      %v1267 = vld [vmem:[%s1254 + $0x30] sm:$0xf]
      %v1268 = vld [vmem:[%s1254 + $0x34] sm:$0x1]
      %v1269 = vld [vmem:[%s1254 + $0x38] sm:$0xf]
      %v1270 = vld [vmem:[%s1254 + $0x3c] sm:$0x1]
      %v1271 = vunpack.c.l.bf16 %v1255
      %v1272 = vunpack.c.l.bf16 %v1256
      %v1273 = vunpack.c.l.bf16 %v1257
      %v1274 = vunpack.c.l.bf16 %v1258
      %v1275 = vunpack.c.l.bf16 %v1259
      %v1276 = vunpack.c.l.bf16 %v1260
      %v1277 = vunpack.c.l.bf16 %v1261
      %v1278 = vunpack.c.l.bf16 %v1262
      %v1279 = vunpack.c.l.bf16 %v1263
      %v1280 = vunpack.c.l.bf16 %v1264
      %v1281 = vunpack.c.l.bf16 %v1265
      %v1282 = vunpack.c.l.bf16 %v1266
      %v1283 = vunpack.c.l.bf16 %v1267
      %v1284 = vunpack.c.l.bf16 %v1268
      %v1285 = vunpack.c.l.bf16 %v1269
      %v1286 = vunpack.c.l.bf16 %v1270
      %v1287 = vpack.c.bf16 %v1273, %v1271
      %v1288 = vpack.c.bf16 %v1277, %v1275
      %v1289 = vpack.c.bf16 %v1281, %v1279
      %v1290 = vpack.c.bf16 %v1285, %v1283
      %s1291 = scalar_lea.vmem %s210, 384
      %v1292 = vld [vmem:[%s1291] sm:$0xf]
      %v1293 = vld [vmem:[%s1291 + $0x4] sm:$0xf]
      %v1294 = vld [vmem:[%s1291 + $0x8] sm:$0xf]
      %v1295 = vld [vmem:[%s1291 + $0xc] sm:$0xf]
      %v1296 = vld [vmem:[%s1291 + $0x10] sm:$0xf]
      %v1297 = vld [vmem:[%s1291 + $0x14] sm:$0xf]
      %v1298 = vld [vmem:[%s1291 + $0x18] sm:$0xf]
      %v1299 = vld [vmem:[%s1291 + $0x1c] sm:$0xf]
      %v1300 = vld [vmem:[%s1291 + $0x20] sm:$0xf]
      %v1301 = vld [vmem:[%s1291 + $0x24] sm:$0xf]
      %v1302 = vld [vmem:[%s1291 + $0x28] sm:$0xf]
      %v1303 = vld [vmem:[%s1291 + $0x2c] sm:$0xf]
      %v1304 = vld [vmem:[%s1291 + $0x30] sm:$0xf]
      %v1305 = vld [vmem:[%s1291 + $0x34] sm:$0xf]
      %v1306 = vld [vmem:[%s1291 + $0x38] sm:$0xf]
      %v1307 = vld [vmem:[%s1291 + $0x3c] sm:$0xf]
      %v1324 = vunpack.c.l.b16 %v1292
      %v1325 = vunpack.c.l.b16 %v1293
      %v1326 = vunpack.c.l.b16 %v1294
      %v1327 = vunpack.c.l.b16 %v1295
      %v1328 = vunpack.c.l.b16 %v1296
      %v1329 = vunpack.c.l.b16 %v1297
      %v1330 = vunpack.c.l.b16 %v1298
      %v1331 = vunpack.c.l.b16 %v1299
      %v1332 = vunpack.c.l.b16 %v1300
      %v1333 = vunpack.c.l.b16 %v1301
      %v1334 = vunpack.c.l.b16 %v1302
      %v1335 = vunpack.c.l.b16 %v1303
      %v1336 = vunpack.c.l.b16 %v1304
      %v1337 = vunpack.c.l.b16 %v1305
      %v1338 = vunpack.c.l.b16 %v1306
      %v1339 = vunpack.c.l.b16 %v1307
      %v1340 = vpack.c.b16 %v1325, %v1324
      %v1341 = vpack.c.b16 %v1327, %v1326
      %v1342 = vpack.c.b16 %v1329, %v1328
      %v1343 = vpack.c.b16 %v1331, %v1330
      %v1344 = vpack.c.b16 %v1333, %v1332
      %v1345 = vpack.c.b16 %v1335, %v1334
      %v1346 = vpack.c.b16 %v1337, %v1336
      %v1347 = vpack.c.b16 %v1339, %v1338
      %1356 = vmatprep.subr.bf16.mxu0 0
      %1357 = vmatpush1.bf16.msra.mxu0 %v1340
      %1358 = vmatprep.subr.bf16.mxu0 0
      %1359 = vmatpush1.bf16.msra.mxu0 %v1341
      %1360 = vmatprep.subr.bf16.mxu0 0
      %1361 = vmatpush1.bf16.msra.mxu0 %v1342
      %1362 = vmatprep.subr.bf16.mxu0 0
      %1363 = vmatpush1.bf16.msra.mxu0 %v1343
      %1364 = vmatprep.subr.bf16.mxu0 0
      %1365 = vmatpush1.bf16.msra.mxu0 %v1344
      %1366 = vmatprep.subr.bf16.mxu0 0
      %1367 = vmatpush1.bf16.msra.mxu0 %v1345
      %1368 = vmatprep.subr.bf16.mxu0 0
      %1369 = vmatpush1.bf16.msra.mxu0 %v1346
      %1370 = vmatprep.subr.bf16.mxu0 0
      %1371 = vmatpush1.bf16.msra.mxu0 %v1347
      %1372 = vmatprep.subr.bf16.mxu0 0
      %1373 = vmatpush1.bf16.msra.mxu0 0
      %1374 = vmatprep.subr.bf16.mxu0 0
      %1375 = vmatpush1.bf16.msra.mxu0 0
      %1376 = vmatprep.subr.bf16.mxu0 0
      %1377 = vmatpush1.bf16.msra.mxu0 0
      %1378 = vmatprep.subr.bf16.mxu0 0
      %1379 = vmatpush1.bf16.msra.mxu0 0
      %1380 = vmatprep.subr.bf16.mxu0 0
      %1381 = vmatpush1.bf16.msra.mxu0 0
      %1382 = vmatprep.subr.bf16.mxu0 0
      %1383 = vmatpush1.bf16.msra.mxu0 0
      %1384 = vmatprep.subr.bf16.mxu0 0
      %1385 = vmatpush1.bf16.msra.mxu0 0
      %1386 = vmatprep.subr.bf16.mxu0 0
      %1387 = vmatpush1.bf16.msra.mxu0 0
      %1388 = vmatprep.mubr.bf16.mxu0 0
      %1389 = vmatmul.mubr.bf16.gmra.mrb[0].mxu0 %v1287
      %v1390 = vpop.f32.mrb[0].mxu0
      %v1391 = vadd.f32 0.0, %v1390
      %v1392 = vpop.f32.mrb[0].mxu0
      %v1393 = vpop.f32.mrb[0].mxu0
      %v1394 = vadd.f32 0.0, %v1393
      %v1395 = vpop.f32.mrb[0].mxu0
      %1396 = vmatprep.mubr.bf16.mxu0 0
      %1397 = vmatmul.mubr.bf16.gmra.mrb[0].mxu0 %v1288
      %v1398 = vpop.f32.mrb[0].mxu0
      %v1399 = vadd.f32 0.0, %v1398
      %v1400 = vpop.f32.mrb[0].mxu0
      %v1401 = vpop.f32.mrb[0].mxu0
      %v1402 = vadd.f32 0.0, %v1401
      %v1403 = vpop.f32.mrb[0].mxu0
      %1404 = vmatprep.mubr.bf16.mxu0 0
      %1405 = vmatmul.mubr.bf16.gmra.mrb[0].mxu0 %v1289
      %v1406 = vpop.f32.mrb[0].mxu0
      %v1407 = vadd.f32 0.0, %v1406
      %v1408 = vpop.f32.mrb[0].mxu0
      %v1409 = vpop.f32.mrb[0].mxu0
      %v1410 = vadd.f32 0.0, %v1409
      %v1411 = vpop.f32.mrb[0].mxu0
      %1412 = vmatprep.mubr.bf16.mxu0 0
      %1413 = vmatmul.mubr.bf16.gmra.mrb[0].mxu0 %v1290
      %v1414 = vpop.f32.mrb[0].mxu0
      %v1415 = vadd.f32 0.0, %v1414
      %v1416 = vpop.f32.mrb[0].mxu0
      %v1417 = vpop.f32.mrb[0].mxu0
      %v1418 = vadd.f32 0.0, %v1417
      %v1419 = vpop.f32.mrb[0].mxu0
      %1420 = vdwg.mxu0
      %v1421 = vadd.f32 %v1246, %v1391
      %v1422 = vadd.f32 %v1247, %v1394
      %v1423 = vadd.f32 %v1248, %v1399
      %v1424 = vadd.f32 %v1249, %v1402
      %v1425 = vadd.f32 %v1250, %v1407
      %v1426 = vadd.f32 %v1251, %v1410
      %v1427 = vadd.f32 %v1252, %v1415
      %v1428 = vadd.f32 %v1253, %v1418
      %s1429 = scalar_lea.vmem %s206, 80
      %v1430 = vld [vmem:[%s1429] sm:$0xf]
      %v1431 = vld [vmem:[%s1429 + $0x8] sm:$0xf]
      %v1432 = vld [vmem:[%s1429 + $0x10] sm:$0xf]
      %v1433 = vld [vmem:[%s1429 + $0x18] sm:$0xf]
      %v1434 = vld [vmem:[%s1429 + $0x20] sm:$0xf]
      %v1435 = vld [vmem:[%s1429 + $0x28] sm:$0xf]
      %v1436 = vld [vmem:[%s1429 + $0x30] sm:$0xf]
      %v1437 = vld [vmem:[%s1429 + $0x38] sm:$0xf]
      %v1438 = vunpack.c.l.bf16 %v1430
      %v1439 = vunpack.c.l.bf16 %v1431
      %v1440 = vunpack.c.l.bf16 %v1432
      %v1441 = vunpack.c.l.bf16 %v1433
      %v1442 = vunpack.c.l.bf16 %v1434
      %v1443 = vunpack.c.l.bf16 %v1435
      %v1444 = vunpack.c.l.bf16 %v1436
      %v1445 = vunpack.c.l.bf16 %v1437
      %v1446 = vpack.c.bf16 %v1439, %v1438
      %v1447 = vpack.c.bf16 %v1441, %v1440
      %v1448 = vpack.c.bf16 %v1443, %v1442
      %v1449 = vpack.c.bf16 %v1445, %v1444
      %s1450 = scalar_lea.vmem %s210, 448
      %v1451 = vld [vmem:[%s1450] sm:$0xf]
      %v1452 = vld [vmem:[%s1450 + $0x4] sm:$0xf]
      %v1453 = vld [vmem:[%s1450 + $0x8] sm:$0xf]
      %v1454 = vld [vmem:[%s1450 + $0xc] sm:$0xf]
      %v1455 = vld [vmem:[%s1450 + $0x10] sm:$0xf]
      %v1456 = vld [vmem:[%s1450 + $0x14] sm:$0xf]
      %v1457 = vld [vmem:[%s1450 + $0x18] sm:$0xf]
      %v1458 = vld [vmem:[%s1450 + $0x1c] sm:$0xf]
      %v1459 = vld [vmem:[%s1450 + $0x20] sm:$0xf]
      %v1460 = vld [vmem:[%s1450 + $0x24] sm:$0xf]
      %v1461 = vld [vmem:[%s1450 + $0x28] sm:$0xf]
      %v1462 = vld [vmem:[%s1450 + $0x2c] sm:$0xf]
      %v1463 = vld [vmem:[%s1450 + $0x30] sm:$0xf]
      %v1464 = vld [vmem:[%s1450 + $0x34] sm:$0xf]
      %v1465 = vld [vmem:[%s1450 + $0x38] sm:$0xf]
      %v1466 = vld [vmem:[%s1450 + $0x3c] sm:$0xf]
      %v1483 = vunpack.c.l.b16 %v1451
      %v1484 = vunpack.c.l.b16 %v1452
      %v1485 = vunpack.c.l.b16 %v1453
      %v1486 = vunpack.c.l.b16 %v1454
      %v1487 = vunpack.c.l.b16 %v1455
      %v1488 = vunpack.c.l.b16 %v1456
      %v1489 = vunpack.c.l.b16 %v1457
      %v1490 = vunpack.c.l.b16 %v1458
      %v1491 = vunpack.c.l.b16 %v1459
      %v1492 = vunpack.c.l.b16 %v1460
      %v1493 = vunpack.c.l.b16 %v1461
      %v1494 = vunpack.c.l.b16 %v1462
      %v1495 = vunpack.c.l.b16 %v1463
      %v1496 = vunpack.c.l.b16 %v1464
      %v1497 = vunpack.c.l.b16 %v1465
      %v1498 = vunpack.c.l.b16 %v1466
      %v1499 = vpack.c.b16 %v1484, %v1483
      %v1500 = vpack.c.b16 %v1486, %v1485
      %v1501 = vpack.c.b16 %v1488, %v1487
      %v1502 = vpack.c.b16 %v1490, %v1489
      %v1503 = vpack.c.b16 %v1492, %v1491
      %v1504 = vpack.c.b16 %v1494, %v1493
      %v1505 = vpack.c.b16 %v1496, %v1495
      %v1506 = vpack.c.b16 %v1498, %v1497
      %1515 = vmatprep.subr.bf16.mxu0 0
      %1516 = vmatpush1.bf16.msra.mxu0 %v1499
      %1517 = vmatprep.subr.bf16.mxu0 0
      %1518 = vmatpush1.bf16.msra.mxu0 %v1500
      %1519 = vmatprep.subr.bf16.mxu0 0
      %1520 = vmatpush1.bf16.msra.mxu0 %v1501
      %1521 = vmatprep.subr.bf16.mxu0 0
      %1522 = vmatpush1.bf16.msra.mxu0 %v1502
      %1523 = vmatprep.subr.bf16.mxu0 0
      %1524 = vmatpush1.bf16.msra.mxu0 %v1503
      %1525 = vmatprep.subr.bf16.mxu0 0
      %1526 = vmatpush1.bf16.msra.mxu0 %v1504
      %1527 = vmatprep.subr.bf16.mxu0 0
      %1528 = vmatpush1.bf16.msra.mxu0 %v1505
      %1529 = vmatprep.subr.bf16.mxu0 0
      %1530 = vmatpush1.bf16.msra.mxu0 %v1506
      %1531 = vmatprep.subr.bf16.mxu0 0
      %1532 = vmatpush1.bf16.msra.mxu0 0
      %1533 = vmatprep.subr.bf16.mxu0 0
      %1534 = vmatpush1.bf16.msra.mxu0 0
      %1535 = vmatprep.subr.bf16.mxu0 0
      %1536 = vmatpush1.bf16.msra.mxu0 0
      %1537 = vmatprep.subr.bf16.mxu0 0
      %1538 = vmatpush1.bf16.msra.mxu0 0
      %1539 = vmatprep.subr.bf16.mxu0 0
      %1540 = vmatpush1.bf16.msra.mxu0 0
      %1541 = vmatprep.subr.bf16.mxu0 0
      %1542 = vmatpush1.bf16.msra.mxu0 0
      %1543 = vmatprep.subr.bf16.mxu0 0
      %1544 = vmatpush1.bf16.msra.mxu0 0
      %1545 = vmatprep.subr.bf16.mxu0 0
      %1546 = vmatpush1.bf16.msra.mxu0 0
      %1547 = vmatprep.mubr.bf16.mxu0 0
      %1548 = vmatmul.mubr.bf16.gmra.mrb[0].mxu0 %v1446
      %v1549 = vpop.f32.mrb[0].mxu0
      %v1550 = vadd.f32 0.0, %v1549
      %v1551 = vpop.f32.mrb[0].mxu0
      %v1552 = vpop.f32.mrb[0].mxu0
      %v1553 = vadd.f32 0.0, %v1552
      %v1554 = vpop.f32.mrb[0].mxu0
      %1555 = vmatprep.mubr.bf16.mxu0 0
      %1556 = vmatmul.mubr.bf16.gmra.mrb[0].mxu0 %v1447
      %v1557 = vpop.f32.mrb[0].mxu0
      %v1558 = vadd.f32 0.0, %v1557
      %v1559 = vpop.f32.mrb[0].mxu0
      %v1560 = vpop.f32.mrb[0].mxu0
      %v1561 = vadd.f32 0.0, %v1560
      %v1562 = vpop.f32.mrb[0].mxu0
      %1563 = vmatprep.mubr.bf16.mxu0 0
      %1564 = vmatmul.mubr.bf16.gmra.mrb[0].mxu0 %v1448
      %v1565 = vpop.f32.mrb[0].mxu0
      %v1566 = vadd.f32 0.0, %v1565
      %v1567 = vpop.f32.mrb[0].mxu0
      %v1568 = vpop.f32.mrb[0].mxu0
      %v1569 = vadd.f32 0.0, %v1568
      %v1570 = vpop.f32.mrb[0].mxu0
      %1571 = vmatprep.mubr.bf16.mxu0 0
      %1572 = vmatmul.mubr.bf16.gmra.mrb[0].mxu0 %v1449
      %v1573 = vpop.f32.mrb[0].mxu0
      %v1574 = vadd.f32 0.0, %v1573
      %v1575 = vpop.f32.mrb[0].mxu0
      %v1576 = vpop.f32.mrb[0].mxu0
      %v1577 = vadd.f32 0.0, %v1576
      %v1578 = vpop.f32.mrb[0].mxu0
      %1579 = vdwg.mxu0
      %v1580 = vadd.f32 %v1421, %v1550
      %v1581 = vadd.f32 %v1422, %v1553
      %v1582 = vadd.f32 %v1423, %v1558
      %v1583 = vadd.f32 %v1424, %v1561
      %v1584 = vadd.f32 %v1425, %v1566
      %v1585 = vadd.f32 %v1426, %v1569
      %v1586 = vadd.f32 %v1427, %v1574
      %v1587 = vadd.f32 %v1428, %v1577
      %v1604 = vrot.slane %v1271, 1
      %v1605 = vrot.slane %v1272, 1
      %v1606 = vsel %vm555, %v1604, %v1605
      %v1607 = vrot.slane %v1273, 1
      %v1608 = vrot.slane %v1274, 1
      %v1609 = vsel %vm555, %v1607, %v1608
      %v1610 = vrot.slane %v1275, 1
      %v1611 = vrot.slane %v1276, 1
      %v1612 = vsel %vm555, %v1610, %v1611
      %v1613 = vrot.slane %v1277, 1
      %v1614 = vrot.slane %v1278, 1
      %v1615 = vsel %vm555, %v1613, %v1614
      %v1616 = vrot.slane %v1279, 1
      %v1617 = vrot.slane %v1280, 1
      %v1618 = vsel %vm555, %v1616, %v1617
      %v1619 = vrot.slane %v1281, 1
      %v1620 = vrot.slane %v1282, 1
      %v1621 = vsel %vm555, %v1619, %v1620
      %v1622 = vrot.slane %v1283, 1
      %v1623 = vrot.slane %v1284, 1
      %v1624 = vsel %vm555, %v1622, %v1623
      %v1625 = vrot.slane %v1285, 1
      %v1626 = vrot.slane %v1286, 1
      %v1627 = vsel %vm555, %v1625, %v1626
      %v1636 = vpack.c.bf16 %v1609, %v1606
      %v1637 = vpack.c.bf16 %v1615, %v1612
      %v1638 = vpack.c.bf16 %v1621, %v1618
      %v1639 = vpack.c.bf16 %v1627, %v1624
      %s1640 = scalar_lea.vmem %s210, 512
      %v1641 = vld [vmem:[%s1640] sm:$0xf]
      %v1642 = vld [vmem:[%s1640 + $0x4] sm:$0xf]
      %v1643 = vld [vmem:[%s1640 + $0x8] sm:$0xf]
      %v1644 = vld [vmem:[%s1640 + $0xc] sm:$0xf]
      %v1645 = vld [vmem:[%s1640 + $0x10] sm:$0xf]
      %v1646 = vld [vmem:[%s1640 + $0x14] sm:$0xf]
      %v1647 = vld [vmem:[%s1640 + $0x18] sm:$0xf]
      %v1648 = vld [vmem:[%s1640 + $0x1c] sm:$0xf]
      %v1649 = vld [vmem:[%s1640 + $0x20] sm:$0xf]
      %v1650 = vld [vmem:[%s1640 + $0x24] sm:$0xf]
      %v1651 = vld [vmem:[%s1640 + $0x28] sm:$0xf]
      %v1652 = vld [vmem:[%s1640 + $0x2c] sm:$0xf]
      %v1653 = vld [vmem:[%s1640 + $0x30] sm:$0xf]
      %v1654 = vld [vmem:[%s1640 + $0x34] sm:$0xf]
      %v1655 = vld [vmem:[%s1640 + $0x38] sm:$0xf]
      %v1656 = vld [vmem:[%s1640 + $0x3c] sm:$0xf]
      %v1673 = vunpack.c.l.b16 %v1641
      %v1674 = vunpack.c.l.b16 %v1642
      %v1675 = vunpack.c.l.b16 %v1643
      %v1676 = vunpack.c.l.b16 %v1644
      %v1677 = vunpack.c.l.b16 %v1645
      %v1678 = vunpack.c.l.b16 %v1646
      %v1679 = vunpack.c.l.b16 %v1647
      %v1680 = vunpack.c.l.b16 %v1648
      %v1681 = vunpack.c.l.b16 %v1649
      %v1682 = vunpack.c.l.b16 %v1650
      %v1683 = vunpack.c.l.b16 %v1651
      %v1684 = vunpack.c.l.b16 %v1652
      %v1685 = vunpack.c.l.b16 %v1653
      %v1686 = vunpack.c.l.b16 %v1654
      %v1687 = vunpack.c.l.b16 %v1655
      %v1688 = vunpack.c.l.b16 %v1656
      %v1689 = vpack.c.b16 %v1674, %v1673
      %v1690 = vpack.c.b16 %v1676, %v1675
      %v1691 = vpack.c.b16 %v1678, %v1677
      %v1692 = vpack.c.b16 %v1680, %v1679
      %v1693 = vpack.c.b16 %v1682, %v1681
      %v1694 = vpack.c.b16 %v1684, %v1683
      %v1695 = vpack.c.b16 %v1686, %v1685
      %v1696 = vpack.c.b16 %v1688, %v1687
      %1705 = vmatprep.subr.bf16.mxu0 0
      %1706 = vmatpush1.bf16.msra.mxu0 %v1689
      %1707 = vmatprep.subr.bf16.mxu0 0
      %1708 = vmatpush1.bf16.msra.mxu0 %v1690
      %1709 = vmatprep.subr.bf16.mxu0 0
      %1710 = vmatpush1.bf16.msra.mxu0 %v1691
      %1711 = vmatprep.subr.bf16.mxu0 0
      %1712 = vmatpush1.bf16.msra.mxu0 %v1692
      %1713 = vmatprep.subr.bf16.mxu0 0
      %1714 = vmatpush1.bf16.msra.mxu0 %v1693
      %1715 = vmatprep.subr.bf16.mxu0 0
      %1716 = vmatpush1.bf16.msra.mxu0 %v1694
      %1717 = vmatprep.subr.bf16.mxu0 0
      %1718 = vmatpush1.bf16.msra.mxu0 %v1695
      %1719 = vmatprep.subr.bf16.mxu0 0
      %1720 = vmatpush1.bf16.msra.mxu0 %v1696
      %1721 = vmatprep.subr.bf16.mxu0 0
      %1722 = vmatpush1.bf16.msra.mxu0 0
      %1723 = vmatprep.subr.bf16.mxu0 0
      %1724 = vmatpush1.bf16.msra.mxu0 0
      %1725 = vmatprep.subr.bf16.mxu0 0
      %1726 = vmatpush1.bf16.msra.mxu0 0
      %1727 = vmatprep.subr.bf16.mxu0 0
      %1728 = vmatpush1.bf16.msra.mxu0 0
      %1729 = vmatprep.subr.bf16.mxu0 0
      %1730 = vmatpush1.bf16.msra.mxu0 0
      %1731 = vmatprep.subr.bf16.mxu0 0
      %1732 = vmatpush1.bf16.msra.mxu0 0
      %1733 = vmatprep.subr.bf16.mxu0 0
      %1734 = vmatpush1.bf16.msra.mxu0 0
      %1735 = vmatprep.subr.bf16.mxu0 0
      %1736 = vmatpush1.bf16.msra.mxu0 0
      %1737 = vmatprep.mubr.bf16.mxu0 0
      %1738 = vmatmul.mubr.bf16.gmra.mrb[0].mxu0 %v1636
      %v1739 = vpop.f32.mrb[0].mxu0
      %v1740 = vadd.f32 0.0, %v1739
      %v1741 = vpop.f32.mrb[0].mxu0
      %v1742 = vpop.f32.mrb[0].mxu0
      %v1743 = vadd.f32 0.0, %v1742
      %v1744 = vpop.f32.mrb[0].mxu0
      %1745 = vmatprep.mubr.bf16.mxu0 0
      %1746 = vmatmul.mubr.bf16.gmra.mrb[0].mxu0 %v1637
      %v1747 = vpop.f32.mrb[0].mxu0
      %v1748 = vadd.f32 0.0, %v1747
      %v1749 = vpop.f32.mrb[0].mxu0
      %v1750 = vpop.f32.mrb[0].mxu0
      %v1751 = vadd.f32 0.0, %v1750
      %v1752 = vpop.f32.mrb[0].mxu0
      %1753 = vmatprep.mubr.bf16.mxu0 0
      %1754 = vmatmul.mubr.bf16.gmra.mrb[0].mxu0 %v1638
      %v1755 = vpop.f32.mrb[0].mxu0
      %v1756 = vadd.f32 0.0, %v1755
      %v1757 = vpop.f32.mrb[0].mxu0
      %v1758 = vpop.f32.mrb[0].mxu0
      %v1759 = vadd.f32 0.0, %v1758
      %v1760 = vpop.f32.mrb[0].mxu0
      %1761 = vmatprep.mubr.bf16.mxu0 0
      %1762 = vmatmul.mubr.bf16.gmra.mrb[0].mxu0 %v1639
      %v1763 = vpop.f32.mrb[0].mxu0
      %v1764 = vadd.f32 0.0, %v1763
      %v1765 = vpop.f32.mrb[0].mxu0
      %v1766 = vpop.f32.mrb[0].mxu0
      %v1767 = vadd.f32 0.0, %v1766
      %v1768 = vpop.f32.mrb[0].mxu0
      %1769 = vdwg.mxu0
      %v1770 = vadd.f32 %v1580, %v1740
      %v1771 = vadd.f32 %v1581, %v1743
      %v1772 = vadd.f32 %v1582, %v1748
      %v1773 = vadd.f32 %v1583, %v1751
      %v1774 = vadd.f32 %v1584, %v1756
      %v1775 = vadd.f32 %v1585, %v1759
      %v1776 = vadd.f32 %v1586, %v1764
      %v1777 = vadd.f32 %v1587, %v1767
      %v1778 = vld [vmem:[%s213] sm:$0x1]
      %v1780 = vlaneseq
      %v1781 = vshrl.u32 %v1780, 7
      %v1782 = vsub.s32 0, %v1781
      %v1783 = vrot.slane %v1778, %v1782
      %v1785 = vadd.f32 %v1770, %v1783
      %v1786 = vadd.f32 %v1771, %v1783
      %v1787 = vadd.f32 %v1772, %v1783
      %v1788 = vadd.f32 %v1773, %v1783
      %v1789 = vadd.f32 %v1774, %v1783
      %v1790 = vadd.f32 %v1775, %v1783
      %v1791 = vadd.f32 %v1776, %v1783
      %v1792 = vadd.f32 %v1777, %v1783
      %v1793 = vmax.f32 %v1785, 0.0
      %v1794 = vmax.f32 %v1786, 0.0
      %v1795 = vmax.f32 %v1787, 0.0
      %v1796 = vmax.f32 %v1788, 0.0
      %v1797 = vmax.f32 %v1789, 0.0
      %v1798 = vmax.f32 %v1790, 0.0
      %v1799 = vmax.f32 %v1791, 0.0
      %v1800 = vmax.f32 %v1792, 0.0
      %v1801 = vpack.c.bf16 %v1794, %v1793
      %v1802 = vpack.c.bf16 %v1796, %v1795
      %v1803 = vpack.c.bf16 %v1798, %v1797
      %v1804 = vpack.c.bf16 %v1800, %v1799
      %v1809 = vunpack.c.l.b16 %v1801
      %v1810 = vunpack.c.h.b16 %v1801
      %v1811 = vunpack.c.l.b16 %v1802
      %v1812 = vunpack.c.h.b16 %v1802
      %v1813 = vunpack.c.l.b16 %v1803
      %v1814 = vunpack.c.h.b16 %v1803
      %v1815 = vunpack.c.l.b16 %v1804
      %v1816 = vunpack.c.h.b16 %v1804
      %v1817 = vpack.c.b16 %v1809, %v1809
      %v1818 = vpack.c.b16 %v1810, %v1810
      %v1819 = vpack.c.b16 %v1811, %v1811
      %v1820 = vpack.c.b16 %v1812, %v1812
      %v1821 = vpack.c.b16 %v1813, %v1813
      %v1822 = vpack.c.b16 %v1814, %v1814
      %v1823 = vpack.c.b16 %v1815, %v1815
      %v1824 = vpack.c.b16 %v1816, %v1816
      %1833 = vst [vmem:[%s221] sm:$0xf] %v1817
      %1834 = vst [vmem:[%s221 + $0x4] sm:$0xf] %v1818
      %1835 = vst [vmem:[%s221 + $0x8] sm:$0xf] %v1819
      %1836 = vst [vmem:[%s221 + $0xc] sm:$0xf] %v1820
      %1837 = vst [vmem:[%s221 + $0x10] sm:$0xf] %v1821
      %1838 = vst [vmem:[%s221 + $0x14] sm:$0xf] %v1822
      %1839 = vst [vmem:[%s221 + $0x18] sm:$0xf] %v1823
      %1840 = vst [vmem:[%s221 + $0x1c] sm:$0xf] %v1824
      %p1841 = scmp.lt.s32.totalorder %s18, 1
      %s1842 = scalar_select %p1841, %s18, 1
      %p1843 = scmp.lt.s32.totalorder %s19, 0
      %s1844 = scalar_select %p1843, %s19, 0
      %s1845 = smul.addr %s1842, 8
      %s1846 = sadd.s32 %s1844, %s1845
      %s1847 = smul.addr %s1846, 4
      %s1848 = scalar_lea.vmem %s3, %s1847
      // Predicated region
      $region33: #{bottleneck_forward.6} parent=31 // pred_check
        %p1849 = pneg %p124
      $region34: #{bottleneck_forward.6} parent=31 // pred_check_branch
        %1851 = sbr.rel (%p1849) target = $region36
      $region35: #{bottleneck_forward.6} parent=31 // pred_region
        _
      $region36: #{bottleneck_forward.6} parent=31 // pred_fallthru
        _
    $region32: #{bottleneck_forward.6} parent=5 // pred_fallthru
      _
    %p1852 = scmp.le.s32.totalorder 2, %s9
    // Predicated region
    $region37: #{bottleneck_forward.6} parent=5 // pred_check
      %p1853 = pneg %p1852
    $region38: #{bottleneck_forward.6} parent=5 // pred_check_branch
      %1855 = sbr.rel (%p1853) target = $region40
    $region39: #{bottleneck_forward.6} parent=5 // pred_region
      %s1856 = ssub.s32 %s9, 2
      // Predicated region
      $region41: #{bottleneck_forward.6} parent=39 // pred_check
        %p1857 = pneg %p130
      $region42: #{bottleneck_forward.6} parent=39 // pred_check_branch
        %1859 = sbr.rel (%p1857) target = $region44
      $region43: #{bottleneck_forward.6} parent=39 // pred_region
        %p1860 = scmp.lt.s32.totalorder %s20, 1
        %s1861 = scalar_select %p1860, %s20, 1
        %p1862 = scmp.lt.s32.totalorder %s21, 0
        %s1863 = scalar_select %p1862, %s21, 0
        %s1864 = smul.addr %s1861, 8
        %s1865 = sadd.s32 %s1863, %s1864
        %s1866 = smul.addr %s1865, 4
        %s1867 = scalar_lea.vmem %s3, %s1866
      $region44: #{bottleneck_forward.6} parent=39 // pred_fallthru
        _
    $region40: #{bottleneck_forward.6} parent=5 // pred_fallthru
      _
  $region6: #{bottleneck_forward.6} parent=0 // loop_footer
    %s13 = sadd.s32 1, %s9
  $region7: #{bottleneck_forward.6} parent=0 // loop_footer_branch
    %8 = sbr.rel target = $region3
  $region8: #{bottleneck_forward.6} parent=0 // loop_exit
    _

// kernel: bottleneck_forward.4
$region0: #{bottleneck_forward.4}
  #allocation0 [shape = 'u32[]', space=smem, size = 0x4, offset = 0x4, fixed_abs, tag = 'smem constant byte address 0x4 - core index']
  #allocation1 [shape = 'u32[144,128]{1,0:T(1,128)}', space=vmem, size = 0x12000, scoped, tag = 'internal scratch']
  #allocation2 [shape = 'f32[128,128]{1,0:T(8,128)}', space=vmem, size = 0x10000, scoped, tag = 'scratch operand']
  %s0 = inlined_call_operand.vmem [shape: bf16[128,128], index: 0, kind: input, shape index: {}]
  %s1 = inlined_call_operand.vmem [shape: bf16[128,128], index: 1, kind: input, shape index: {}]
  %s2 = inlined_call_operand.vmem [shape: f32[1,128], index: 2, kind: input, shape index: {}]
  %s3 = inlined_call_operand.vmem [shape: bf16[128,128], index: 3, kind: output, shape index: {}]
  %s4 = sld [smem:[#allocation0]]
  $region30: #{bottleneck_forward.4} parent=0
    _
  %s6 = ssub.s32 1, %s4
  %s7 = scalar_select 0, %s6, %s4
  // Predicated region
  $region2: #{bottleneck_forward.4} parent=0 // pred_check
    _
  $region3: #{bottleneck_forward.4} parent=0 // pred_check_branch
    %9 = sbr.rel (0) target = $region5
  $region4: #{bottleneck_forward.4} parent=0 // pred_region
    _
  $region5: #{bottleneck_forward.4} parent=0 // pred_fallthru
    _
  // Predicated region
  $region6: #{bottleneck_forward.4} parent=0 // pred_check
    _
  $region7: #{bottleneck_forward.4} parent=0 // pred_check_branch
    %11 = sbr.rel (0) target = $region9
  $region8: #{bottleneck_forward.4} parent=0 // pred_region
    _
  $region9: #{bottleneck_forward.4} parent=0 // pred_fallthru
    _
  // Predicated region
  $region10: #{bottleneck_forward.4} parent=0 // pred_check
    _
  $region11: #{bottleneck_forward.4} parent=0 // pred_check_branch
    %13 = sbr.rel (0) target = $region13
  $region12: #{bottleneck_forward.4} parent=0 // pred_region
    _
  $region13: #{bottleneck_forward.4} parent=0 // pred_fallthru
    _
  %p15 = scmp.eq.s32.totalorder 0, 0
  // Predicated region
  $region14: #{bottleneck_forward.4} parent=0 // pred_check
    %p16 = pneg %p15
  $region15: #{bottleneck_forward.4} parent=0 // pred_check_branch
    %18 = sbr.rel (%p16) target = $region17
  $region16: #{bottleneck_forward.4} parent=0 // pred_region
    %19 = vst [vmem:[#allocation2] sm:$0xff] 0.0
    %20 = vst [vmem:[#allocation2 + $0x8] sm:$0xff] 0.0
    %21 = vst [vmem:[#allocation2 + $0x10] sm:$0xff] 0.0
    %22 = vst [vmem:[#allocation2 + $0x18] sm:$0xff] 0.0
    %23 = vst [vmem:[#allocation2 + $0x20] sm:$0xff] 0.0
    %24 = vst [vmem:[#allocation2 + $0x28] sm:$0xff] 0.0
    %25 = vst [vmem:[#allocation2 + $0x30] sm:$0xff] 0.0
    %26 = vst [vmem:[#allocation2 + $0x38] sm:$0xff] 0.0
    %27 = vst [vmem:[#allocation2 + $0x40] sm:$0xff] 0.0
    %28 = vst [vmem:[#allocation2 + $0x48] sm:$0xff] 0.0
    %29 = vst [vmem:[#allocation2 + $0x50] sm:$0xff] 0.0
    %30 = vst [vmem:[#allocation2 + $0x58] sm:$0xff] 0.0
    %31 = vst [vmem:[#allocation2 + $0x60] sm:$0xff] 0.0
    %32 = vst [vmem:[#allocation2 + $0x68] sm:$0xff] 0.0
    %33 = vst [vmem:[#allocation2 + $0x70] sm:$0xff] 0.0
    %34 = vst [vmem:[#allocation2 + $0x78] sm:$0xff] 0.0
  $region17: #{bottleneck_forward.4} parent=0 // pred_fallthru
    _
  %v35 = vld [vmem:[#allocation2] sm:$0xff]
  %v36 = vld [vmem:[#allocation2 + $0x8] sm:$0xff]
  %v37 = vld [vmem:[#allocation2 + $0x10] sm:$0xff]
  %v38 = vld [vmem:[#allocation2 + $0x18] sm:$0xff]
  %v39 = vld [vmem:[#allocation2 + $0x20] sm:$0xff]
  %v40 = vld [vmem:[#allocation2 + $0x28] sm:$0xff]
  %v41 = vld [vmem:[#allocation2 + $0x30] sm:$0xff]
  %v42 = vld [vmem:[#allocation2 + $0x38] sm:$0xff]
  %v43 = vld [vmem:[#allocation2 + $0x40] sm:$0xff]
  %v44 = vld [vmem:[#allocation2 + $0x48] sm:$0xff]
  %v45 = vld [vmem:[#allocation2 + $0x50] sm:$0xff]
  %v46 = vld [vmem:[#allocation2 + $0x58] sm:$0xff]
  %v47 = vld [vmem:[#allocation2 + $0x60] sm:$0xff]
  %v48 = vld [vmem:[#allocation2 + $0x68] sm:$0xff]
  %v49 = vld [vmem:[#allocation2 + $0x70] sm:$0xff]
  %v50 = vld [vmem:[#allocation2 + $0x78] sm:$0xff]
  %v51 = vld [vmem:[%s0] sm:$0xf]
  %v52 = vld [vmem:[%s0 + $0x4] sm:$0xf]
  %v53 = vld [vmem:[%s0 + $0x8] sm:$0xf]
  %v54 = vld [vmem:[%s0 + $0xc] sm:$0xf]
  %v55 = vld [vmem:[%s0 + $0x10] sm:$0xf]
  %v56 = vld [vmem:[%s0 + $0x14] sm:$0xf]
  %v57 = vld [vmem:[%s0 + $0x18] sm:$0xf]
  %v58 = vld [vmem:[%s0 + $0x1c] sm:$0xf]
  %v59 = vld [vmem:[%s0 + $0x20] sm:$0xf]
  %v60 = vld [vmem:[%s0 + $0x24] sm:$0xf]
  %v61 = vld [vmem:[%s0 + $0x28] sm:$0xf]
  %v62 = vld [vmem:[%s0 + $0x2c] sm:$0xf]
  %v63 = vld [vmem:[%s0 + $0x30] sm:$0xf]
  %v64 = vld [vmem:[%s0 + $0x34] sm:$0xf]
  %v65 = vld [vmem:[%s0 + $0x38] sm:$0xf]
  %v66 = vld [vmem:[%s0 + $0x3c] sm:$0xf]
  %v67 = vld [vmem:[%s1] sm:$0xf]
  %v68 = vld [vmem:[%s1 + $0x4] sm:$0xf]
  %v69 = vld [vmem:[%s1 + $0x8] sm:$0xf]
  %v70 = vld [vmem:[%s1 + $0xc] sm:$0xf]
  %v71 = vld [vmem:[%s1 + $0x10] sm:$0xf]
  %v72 = vld [vmem:[%s1 + $0x14] sm:$0xf]
  %v73 = vld [vmem:[%s1 + $0x18] sm:$0xf]
  %v74 = vld [vmem:[%s1 + $0x1c] sm:$0xf]
  %v75 = vld [vmem:[%s1 + $0x20] sm:$0xf]
  %v76 = vld [vmem:[%s1 + $0x24] sm:$0xf]
  %v77 = vld [vmem:[%s1 + $0x28] sm:$0xf]
  %v78 = vld [vmem:[%s1 + $0x2c] sm:$0xf]
  %v79 = vld [vmem:[%s1 + $0x30] sm:$0xf]
  %v80 = vld [vmem:[%s1 + $0x34] sm:$0xf]
  %v81 = vld [vmem:[%s1 + $0x38] sm:$0xf]
  %v82 = vld [vmem:[%s1 + $0x3c] sm:$0xf]
  %v99 = vunpack.c.l.b16 %v51
  %v100 = vunpack.c.l.b16 %v52
  %v101 = vunpack.c.l.b16 %v53
  %v102 = vunpack.c.l.b16 %v54
  %v103 = vunpack.c.l.b16 %v55
  %v104 = vunpack.c.l.b16 %v56
  %v105 = vunpack.c.l.b16 %v57
  %v106 = vunpack.c.l.b16 %v58
  %v107 = vunpack.c.l.b16 %v59
  %v108 = vunpack.c.l.b16 %v60
  %v109 = vunpack.c.l.b16 %v61
  %v110 = vunpack.c.l.b16 %v62
  %v111 = vunpack.c.l.b16 %v63
  %v112 = vunpack.c.l.b16 %v64
  %v113 = vunpack.c.l.b16 %v65
  %v114 = vunpack.c.l.b16 %v66
  %v115 = vpack.c.b16 %v100, %v99
  %v116 = vpack.c.b16 %v102, %v101
  %v117 = vpack.c.b16 %v104, %v103
  %v118 = vpack.c.b16 %v106, %v105
  %v119 = vpack.c.b16 %v108, %v107
  %v120 = vpack.c.b16 %v110, %v109
  %v121 = vpack.c.b16 %v112, %v111
  %v122 = vpack.c.b16 %v114, %v113
  %v147 = vunpack.c.l.b16 %v67
  %v148 = vunpack.c.l.b16 %v68
  %v149 = vunpack.c.l.b16 %v69
  %v150 = vunpack.c.l.b16 %v70
  %v151 = vunpack.c.l.b16 %v71
  %v152 = vunpack.c.l.b16 %v72
  %v153 = vunpack.c.l.b16 %v73
  %v154 = vunpack.c.l.b16 %v74
  %v155 = vunpack.c.l.b16 %v75
  %v156 = vunpack.c.l.b16 %v76
  %v157 = vunpack.c.l.b16 %v77
  %v158 = vunpack.c.l.b16 %v78
  %v159 = vunpack.c.l.b16 %v79
  %v160 = vunpack.c.l.b16 %v80
  %v161 = vunpack.c.l.b16 %v81
  %v162 = vunpack.c.l.b16 %v82
  %v163 = vpack.c.b16 %v148, %v147
  %v164 = vpack.c.b16 %v150, %v149
  %v165 = vpack.c.b16 %v152, %v151
  %v166 = vpack.c.b16 %v154, %v153
  %v167 = vpack.c.b16 %v156, %v155
  %v168 = vpack.c.b16 %v158, %v157
  %v169 = vpack.c.b16 %v160, %v159
  %v170 = vpack.c.b16 %v162, %v161
  %179 = vmatprep.subr.bf16.mxu0 0
  %180 = vmatpush1.bf16.msra.mxu0 %v163
  %181 = vmatprep.subr.bf16.mxu0 0
  %182 = vmatpush1.bf16.msra.mxu0 %v164
  %183 = vmatprep.subr.bf16.mxu0 0
  %184 = vmatpush1.bf16.msra.mxu0 %v165
  %185 = vmatprep.subr.bf16.mxu0 0
  %186 = vmatpush1.bf16.msra.mxu0 %v166
  %187 = vmatprep.subr.bf16.mxu0 0
  %188 = vmatpush1.bf16.msra.mxu0 %v167
  %189 = vmatprep.subr.bf16.mxu0 0
  %190 = vmatpush1.bf16.msra.mxu0 %v168
  %191 = vmatprep.subr.bf16.mxu0 0
  %192 = vmatpush1.bf16.msra.mxu0 %v169
  %193 = vmatprep.subr.bf16.mxu0 0
  %194 = vmatpush1.bf16.msra.mxu0 %v170
  %195 = vmatprep.subr.bf16.mxu0 0
  %196 = vmatpush1.bf16.msra.mxu0 0
  %197 = vmatprep.subr.bf16.mxu0 0
  %198 = vmatpush1.bf16.msra.mxu0 0
  %199 = vmatprep.subr.bf16.mxu0 0
  %200 = vmatpush1.bf16.msra.mxu0 0
  %201 = vmatprep.subr.bf16.mxu0 0
  %202 = vmatpush1.bf16.msra.mxu0 0
  %203 = vmatprep.subr.bf16.mxu0 0
  %204 = vmatpush1.bf16.msra.mxu0 0
  %205 = vmatprep.subr.bf16.mxu0 0
  %206 = vmatpush1.bf16.msra.mxu0 0
  %207 = vmatprep.subr.bf16.mxu0 0
  %208 = vmatpush1.bf16.msra.mxu0 0
  %209 = vmatprep.subr.bf16.mxu0 0
  %210 = vmatpush1.bf16.msra.mxu0 0
  %211 = vmatprep.mubr.bf16.mxu0 0
  %212 = vmatmul.mubr.bf16.gmra.mrb[0].mxu0 %v115
  %v213 = vpop.f32.mrb[0].mxu0
  %v214 = vadd.f32 0.0, %v213
  %v215 = vpop.f32.mrb[0].mxu0
  %v216 = vpop.f32.mrb[0].mxu0
  %v217 = vadd.f32 0.0, %v216
  %v218 = vpop.f32.mrb[0].mxu0
  %219 = vmatprep.mubr.bf16.mxu0 0
  %220 = vmatmul.mubr.bf16.gmra.mrb[0].mxu0 %v116
  %v221 = vpop.f32.mrb[0].mxu0
  %v222 = vadd.f32 0.0, %v221
  %v223 = vpop.f32.mrb[0].mxu0
  %v224 = vpop.f32.mrb[0].mxu0
  %v225 = vadd.f32 0.0, %v224
  %v226 = vpop.f32.mrb[0].mxu0
  %227 = vmatprep.mubr.bf16.mxu0 0
  %228 = vmatmul.mubr.bf16.gmra.mrb[0].mxu0 %v117
  %v229 = vpop.f32.mrb[0].mxu0
  %v230 = vadd.f32 0.0, %v229
  %v231 = vpop.f32.mrb[0].mxu0
  %v232 = vpop.f32.mrb[0].mxu0
  %v233 = vadd.f32 0.0, %v232
  %v234 = vpop.f32.mrb[0].mxu0
  %235 = vmatprep.mubr.bf16.mxu0 0
  %236 = vmatmul.mubr.bf16.gmra.mrb[0].mxu0 %v118
  %v237 = vpop.f32.mrb[0].mxu0
  %v238 = vadd.f32 0.0, %v237
  %v239 = vpop.f32.mrb[0].mxu0
  %v240 = vpop.f32.mrb[0].mxu0
  %v241 = vadd.f32 0.0, %v240
  %v242 = vpop.f32.mrb[0].mxu0
  %243 = vmatprep.mubr.bf16.mxu0 0
  %244 = vmatmul.mubr.bf16.gmra.mrb[0].mxu0 %v119
  %v245 = vpop.f32.mrb[0].mxu0
  %v246 = vadd.f32 0.0, %v245
  %v247 = vpop.f32.mrb[0].mxu0
  %v248 = vpop.f32.mrb[0].mxu0
  %v249 = vadd.f32 0.0, %v248
  %v250 = vpop.f32.mrb[0].mxu0
  %251 = vmatprep.mubr.bf16.mxu0 0
  %252 = vmatmul.mubr.bf16.gmra.mrb[0].mxu0 %v120
  %v253 = vpop.f32.mrb[0].mxu0
  %v254 = vadd.f32 0.0, %v253
  %v255 = vpop.f32.mrb[0].mxu0
  %v256 = vpop.f32.mrb[0].mxu0
  %v257 = vadd.f32 0.0, %v256
  %v258 = vpop.f32.mrb[0].mxu0
  %259 = vmatprep.mubr.bf16.mxu0 0
  %260 = vmatmul.mubr.bf16.gmra.mrb[0].mxu0 %v121
  %v261 = vpop.f32.mrb[0].mxu0
  %v262 = vadd.f32 0.0, %v261
  %v263 = vpop.f32.mrb[0].mxu0
  %v264 = vpop.f32.mrb[0].mxu0
  %v265 = vadd.f32 0.0, %v264
  %v266 = vpop.f32.mrb[0].mxu0
  %267 = vmatprep.mubr.bf16.mxu0 0
  %268 = vmatmul.mubr.bf16.gmra.mrb[0].mxu0 %v122
  %v269 = vpop.f32.mrb[0].mxu0
  %v270 = vadd.f32 0.0, %v269
  %v271 = vpop.f32.mrb[0].mxu0
  %v272 = vpop.f32.mrb[0].mxu0
  %v273 = vadd.f32 0.0, %v272
  %v274 = vpop.f32.mrb[0].mxu0
  %275 = vdwg.mxu0
  %v276 = vadd.f32 %v35, %v214
  %v277 = vadd.f32 %v36, %v217
  %v278 = vadd.f32 %v37, %v222
  %v279 = vadd.f32 %v38, %v225
  %v280 = vadd.f32 %v39, %v230
  %v281 = vadd.f32 %v40, %v233
  %v282 = vadd.f32 %v41, %v238
  %v283 = vadd.f32 %v42, %v241
  %v284 = vadd.f32 %v43, %v246
  %v285 = vadd.f32 %v44, %v249
  %v286 = vadd.f32 %v45, %v254
  %v287 = vadd.f32 %v46, %v257
  %v288 = vadd.f32 %v47, %v262
  %v289 = vadd.f32 %v48, %v265
  %v290 = vadd.f32 %v49, %v270
  %v291 = vadd.f32 %v50, %v273
  %292 = vst [vmem:[#allocation2] sm:$0xff] %v276
  %293 = vst [vmem:[#allocation2 + $0x8] sm:$0xff] %v277
  %294 = vst [vmem:[#allocation2 + $0x10] sm:$0xff] %v278
  %295 = vst [vmem:[#allocation2 + $0x18] sm:$0xff] %v279
  %296 = vst [vmem:[#allocation2 + $0x20] sm:$0xff] %v280
  %297 = vst [vmem:[#allocation2 + $0x28] sm:$0xff] %v281
  %298 = vst [vmem:[#allocation2 + $0x30] sm:$0xff] %v282
  %299 = vst [vmem:[#allocation2 + $0x38] sm:$0xff] %v283
  %300 = vst [vmem:[#allocation2 + $0x40] sm:$0xff] %v284
  %301 = vst [vmem:[#allocation2 + $0x48] sm:$0xff] %v285
  %302 = vst [vmem:[#allocation2 + $0x50] sm:$0xff] %v286
  %303 = vst [vmem:[#allocation2 + $0x58] sm:$0xff] %v287
  %304 = vst [vmem:[#allocation2 + $0x60] sm:$0xff] %v288
  %305 = vst [vmem:[#allocation2 + $0x68] sm:$0xff] %v289
  %306 = vst [vmem:[#allocation2 + $0x70] sm:$0xff] %v290
  %307 = vst [vmem:[#allocation2 + $0x78] sm:$0xff] %v291
  // Predicated region
  $region18: #{bottleneck_forward.4} parent=0 // pred_check
    %p308 = pneg %p15
  $region19: #{bottleneck_forward.4} parent=0 // pred_check_branch
    %310 = sbr.rel (%p308) target = $region21
  $region20: #{bottleneck_forward.4} parent=0 // pred_region
    %v311 = vld [vmem:[#allocation2] sm:$0xff]
    %v312 = vld [vmem:[#allocation2 + $0x8] sm:$0xff]
    %v313 = vld [vmem:[#allocation2 + $0x10] sm:$0xff]
    %v314 = vld [vmem:[#allocation2 + $0x18] sm:$0xff]
    %v315 = vld [vmem:[#allocation2 + $0x20] sm:$0xff]
    %v316 = vld [vmem:[#allocation2 + $0x28] sm:$0xff]
    %v317 = vld [vmem:[#allocation2 + $0x30] sm:$0xff]
    %v318 = vld [vmem:[#allocation2 + $0x38] sm:$0xff]
    %v319 = vld [vmem:[#allocation2 + $0x40] sm:$0xff]
    %v320 = vld [vmem:[#allocation2 + $0x48] sm:$0xff]
    %v321 = vld [vmem:[#allocation2 + $0x50] sm:$0xff]
    %v322 = vld [vmem:[#allocation2 + $0x58] sm:$0xff]
    %v323 = vld [vmem:[#allocation2 + $0x60] sm:$0xff]
    %v324 = vld [vmem:[#allocation2 + $0x68] sm:$0xff]
    %v325 = vld [vmem:[#allocation2 + $0x70] sm:$0xff]
    %v326 = vld [vmem:[#allocation2 + $0x78] sm:$0xff]
    %v327 = vld [vmem:[%s2] sm:$0x1]
    %v329 = vlaneseq
    %v330 = vshrl.u32 %v329, 7
    %v331 = vsub.s32 0, %v330
    %v332 = vrot.slane %v327, %v331
    %v334 = vadd.f32 %v311, %v332
    %v335 = vadd.f32 %v312, %v332
    %v336 = vadd.f32 %v313, %v332
    %v337 = vadd.f32 %v314, %v332
    %v338 = vadd.f32 %v315, %v332
    %v339 = vadd.f32 %v316, %v332
    %v340 = vadd.f32 %v317, %v332
    %v341 = vadd.f32 %v318, %v332
    %v342 = vadd.f32 %v319, %v332
    %v343 = vadd.f32 %v320, %v332
    %v344 = vadd.f32 %v321, %v332
    %v345 = vadd.f32 %v322, %v332
    %v346 = vadd.f32 %v323, %v332
    %v347 = vadd.f32 %v324, %v332
    %v348 = vadd.f32 %v325, %v332
    %v349 = vadd.f32 %v326, %v332
    %v350 = vpack.c.bf16 %v335, %v334
    %v351 = vpack.c.bf16 %v337, %v336
    %v352 = vpack.c.bf16 %v339, %v338
    %v353 = vpack.c.bf16 %v341, %v340
    %v354 = vpack.c.bf16 %v343, %v342
    %v355 = vpack.c.bf16 %v345, %v344
    %v356 = vpack.c.bf16 %v347, %v346
    %v357 = vpack.c.bf16 %v349, %v348
    %v366 = vunpack.c.l.b16 %v350
    %v367 = vunpack.c.h.b16 %v350
    %v368 = vunpack.c.l.b16 %v351
    %v369 = vunpack.c.h.b16 %v351
    %v370 = vunpack.c.l.b16 %v352
    %v371 = vunpack.c.h.b16 %v352
    %v372 = vunpack.c.l.b16 %v353
    %v373 = vunpack.c.h.b16 %v353
    %v374 = vunpack.c.l.b16 %v354
    %v375 = vunpack.c.h.b16 %v354
    %v376 = vunpack.c.l.b16 %v355
    %v377 = vunpack.c.h.b16 %v355
    %v378 = vunpack.c.l.b16 %v356
    %v379 = vunpack.c.h.b16 %v356
    %v380 = vunpack.c.l.b16 %v357
    %v381 = vunpack.c.h.b16 %v357
    %v382 = vpack.c.b16 %v366, %v366
    %v383 = vpack.c.b16 %v367, %v367
    %v384 = vpack.c.b16 %v368, %v368
    %v385 = vpack.c.b16 %v369, %v369
    %v386 = vpack.c.b16 %v370, %v370
    %v387 = vpack.c.b16 %v371, %v371
    %v388 = vpack.c.b16 %v372, %v372
    %v389 = vpack.c.b16 %v373, %v373
    %v390 = vpack.c.b16 %v374, %v374
    %v391 = vpack.c.b16 %v375, %v375
    %v392 = vpack.c.b16 %v376, %v376
    %v393 = vpack.c.b16 %v377, %v377
    %v394 = vpack.c.b16 %v378, %v378
    %v395 = vpack.c.b16 %v379, %v379
    %v396 = vpack.c.b16 %v380, %v380
    %v397 = vpack.c.b16 %v381, %v381
    %414 = vst [vmem:[%s3] sm:$0xf] %v382
    %415 = vst [vmem:[%s3 + $0x4] sm:$0xf] %v383
    %416 = vst [vmem:[%s3 + $0x8] sm:$0xf] %v384
    %417 = vst [vmem:[%s3 + $0xc] sm:$0xf] %v385
    %418 = vst [vmem:[%s3 + $0x10] sm:$0xf] %v386
    %419 = vst [vmem:[%s3 + $0x14] sm:$0xf] %v387
    %420 = vst [vmem:[%s3 + $0x18] sm:$0xf] %v388
    %421 = vst [vmem:[%s3 + $0x1c] sm:$0xf] %v389
    %422 = vst [vmem:[%s3 + $0x20] sm:$0xf] %v390
    %423 = vst [vmem:[%s3 + $0x24] sm:$0xf] %v391
    %424 = vst [vmem:[%s3 + $0x28] sm:$0xf] %v392
    %425 = vst [vmem:[%s3 + $0x2c] sm:$0xf] %v393
    %426 = vst [vmem:[%s3 + $0x30] sm:$0xf] %v394
    %427 = vst [vmem:[%s3 + $0x34] sm:$0xf] %v395
    %428 = vst [vmem:[%s3 + $0x38] sm:$0xf] %v396
    %429 = vst [vmem:[%s3 + $0x3c] sm:$0xf] %v397
  $region21: #{bottleneck_forward.4} parent=0 // pred_fallthru
    _
  // Predicated region
  $region22: #{bottleneck_forward.4} parent=0 // pred_check
    _
  $region23: #{bottleneck_forward.4} parent=0 // pred_check_branch
    %431 = sbr.rel (0) target = $region25
  $region24: #{bottleneck_forward.4} parent=0 // pred_region
    _
  $region25: #{bottleneck_forward.4} parent=0 // pred_fallthru
    _
  // Predicated region
  $region26: #{bottleneck_forward.4} parent=0 // pred_check
    _
  $region27: #{bottleneck_forward.4} parent=0 // pred_check_branch
    %433 = sbr.rel (0) target = $region29
  $region28: #{bottleneck_forward.4} parent=0 // pred_region
    _
  $region29: #{bottleneck_forward.4} parent=0 // pred_fallthru
    _

// kernel: bottleneck_forward.7
$region0: #{bottleneck_forward.7}
  #allocation0 [shape = 'u32[]', space=smem, size = 0x4, offset = 0x4, fixed_abs, tag = 'smem constant byte address 0x4 - core index']
  #allocation1 [shape = 'u32[144,128]{1,0:T(1,128)}', space=vmem, size = 0x12000, scoped, tag = 'internal scratch']
  #allocation2 [shape = 'f32[128,128]{1,0:T(8,128)}', space=vmem, size = 0x10000, scoped, tag = 'scratch operand']
  %s0 = inlined_call_operand.vmem [shape: bf16[128,128], index: 0, kind: input, shape index: {}]
  %s1 = inlined_call_operand.vmem [shape: bf16[128,128], index: 1, kind: input, shape index: {}]
  %s2 = inlined_call_operand.vmem [shape: f32[1,128], index: 2, kind: input, shape index: {}]
  %s3 = inlined_call_operand.vmem [shape: bf16[128,128], index: 3, kind: input, shape index: {}]
  %s4 = inlined_call_operand.vmem [shape: f32[128,128], index: 4, kind: output, shape index: {}]
  %s5 = sld [smem:[#allocation0]]
  $region34: #{bottleneck_forward.7} parent=0
    _
  %s7 = ssub.s32 1, %s5
  %s8 = scalar_select 0, %s7, %s5
  // Predicated region
  $region2: #{bottleneck_forward.7} parent=0 // pred_check
    _
  $region3: #{bottleneck_forward.7} parent=0 // pred_check_branch
    %10 = sbr.rel (0) target = $region5
  $region4: #{bottleneck_forward.7} parent=0 // pred_region
    _
  $region5: #{bottleneck_forward.7} parent=0 // pred_fallthru
    _
  // Predicated region
  $region6: #{bottleneck_forward.7} parent=0 // pred_check
    _
  $region7: #{bottleneck_forward.7} parent=0 // pred_check_branch
    %12 = sbr.rel (0) target = $region9
  $region8: #{bottleneck_forward.7} parent=0 // pred_region
    _
  $region9: #{bottleneck_forward.7} parent=0 // pred_fallthru
    _
  // Predicated region
  $region10: #{bottleneck_forward.7} parent=0 // pred_check
    _
  $region11: #{bottleneck_forward.7} parent=0 // pred_check_branch
    %14 = sbr.rel (0) target = $region13
  $region12: #{bottleneck_forward.7} parent=0 // pred_region
    _
  $region13: #{bottleneck_forward.7} parent=0 // pred_fallthru
    _
  // Predicated region
  $region14: #{bottleneck_forward.7} parent=0 // pred_check
    _
  $region15: #{bottleneck_forward.7} parent=0 // pred_check_branch
    %16 = sbr.rel (0) target = $region17
  $region16: #{bottleneck_forward.7} parent=0 // pred_region
    _
  $region17: #{bottleneck_forward.7} parent=0 // pred_fallthru
    _
  %p18 = scmp.eq.s32.totalorder 0, 0
  // Predicated region
  $region18: #{bottleneck_forward.7} parent=0 // pred_check
    %p19 = pneg %p18
  $region19: #{bottleneck_forward.7} parent=0 // pred_check_branch
    %21 = sbr.rel (%p19) target = $region21
  $region20: #{bottleneck_forward.7} parent=0 // pred_region
    %22 = vst [vmem:[#allocation2] sm:$0xff] 0.0
    %23 = vst [vmem:[#allocation2 + $0x8] sm:$0xff] 0.0
    %24 = vst [vmem:[#allocation2 + $0x10] sm:$0xff] 0.0
    %25 = vst [vmem:[#allocation2 + $0x18] sm:$0xff] 0.0
    %26 = vst [vmem:[#allocation2 + $0x20] sm:$0xff] 0.0
    %27 = vst [vmem:[#allocation2 + $0x28] sm:$0xff] 0.0
    %28 = vst [vmem:[#allocation2 + $0x30] sm:$0xff] 0.0
    %29 = vst [vmem:[#allocation2 + $0x38] sm:$0xff] 0.0
    %30 = vst [vmem:[#allocation2 + $0x40] sm:$0xff] 0.0
    %31 = vst [vmem:[#allocation2 + $0x48] sm:$0xff] 0.0
    %32 = vst [vmem:[#allocation2 + $0x50] sm:$0xff] 0.0
    %33 = vst [vmem:[#allocation2 + $0x58] sm:$0xff] 0.0
    %34 = vst [vmem:[#allocation2 + $0x60] sm:$0xff] 0.0
    %35 = vst [vmem:[#allocation2 + $0x68] sm:$0xff] 0.0
    %36 = vst [vmem:[#allocation2 + $0x70] sm:$0xff] 0.0
    %37 = vst [vmem:[#allocation2 + $0x78] sm:$0xff] 0.0
  $region21: #{bottleneck_forward.7} parent=0 // pred_fallthru
    _
  %v38 = vld [vmem:[#allocation2] sm:$0xff]
  %v39 = vld [vmem:[#allocation2 + $0x8] sm:$0xff]
  %v40 = vld [vmem:[#allocation2 + $0x10] sm:$0xff]
  %v41 = vld [vmem:[#allocation2 + $0x18] sm:$0xff]
  %v42 = vld [vmem:[#allocation2 + $0x20] sm:$0xff]
  %v43 = vld [vmem:[#allocation2 + $0x28] sm:$0xff]
  %v44 = vld [vmem:[#allocation2 + $0x30] sm:$0xff]
  %v45 = vld [vmem:[#allocation2 + $0x38] sm:$0xff]
  %v46 = vld [vmem:[#allocation2 + $0x40] sm:$0xff]
  %v47 = vld [vmem:[#allocation2 + $0x48] sm:$0xff]
  %v48 = vld [vmem:[#allocation2 + $0x50] sm:$0xff]
  %v49 = vld [vmem:[#allocation2 + $0x58] sm:$0xff]
  %v50 = vld [vmem:[#allocation2 + $0x60] sm:$0xff]
  %v51 = vld [vmem:[#allocation2 + $0x68] sm:$0xff]
  %v52 = vld [vmem:[#allocation2 + $0x70] sm:$0xff]
  %v53 = vld [vmem:[#allocation2 + $0x78] sm:$0xff]
  %v54 = vld [vmem:[%s0] sm:$0xf]
  %v55 = vld [vmem:[%s0 + $0x4] sm:$0xf]
  %v56 = vld [vmem:[%s0 + $0x8] sm:$0xf]
  %v57 = vld [vmem:[%s0 + $0xc] sm:$0xf]
  %v58 = vld [vmem:[%s0 + $0x10] sm:$0xf]
  %v59 = vld [vmem:[%s0 + $0x14] sm:$0xf]
  %v60 = vld [vmem:[%s0 + $0x18] sm:$0xf]
  %v61 = vld [vmem:[%s0 + $0x1c] sm:$0xf]
  %v62 = vld [vmem:[%s0 + $0x20] sm:$0xf]
  %v63 = vld [vmem:[%s0 + $0x24] sm:$0xf]
  %v64 = vld [vmem:[%s0 + $0x28] sm:$0xf]
  %v65 = vld [vmem:[%s0 + $0x2c] sm:$0xf]
  %v66 = vld [vmem:[%s0 + $0x30] sm:$0xf]
  %v67 = vld [vmem:[%s0 + $0x34] sm:$0xf]
  %v68 = vld [vmem:[%s0 + $0x38] sm:$0xf]
  %v69 = vld [vmem:[%s0 + $0x3c] sm:$0xf]
  %v70 = vld [vmem:[%s1] sm:$0xf]
  %v71 = vld [vmem:[%s1 + $0x4] sm:$0xf]
  %v72 = vld [vmem:[%s1 + $0x8] sm:$0xf]
  %v73 = vld [vmem:[%s1 + $0xc] sm:$0xf]
  %v74 = vld [vmem:[%s1 + $0x10] sm:$0xf]
  %v75 = vld [vmem:[%s1 + $0x14] sm:$0xf]
  %v76 = vld [vmem:[%s1 + $0x18] sm:$0xf]
  %v77 = vld [vmem:[%s1 + $0x1c] sm:$0xf]
  %v78 = vld [vmem:[%s1 + $0x20] sm:$0xf]
  %v79 = vld [vmem:[%s1 + $0x24] sm:$0xf]
  %v80 = vld [vmem:[%s1 + $0x28] sm:$0xf]
  %v81 = vld [vmem:[%s1 + $0x2c] sm:$0xf]
  %v82 = vld [vmem:[%s1 + $0x30] sm:$0xf]
  %v83 = vld [vmem:[%s1 + $0x34] sm:$0xf]
  %v84 = vld [vmem:[%s1 + $0x38] sm:$0xf]
  %v85 = vld [vmem:[%s1 + $0x3c] sm:$0xf]
  %v102 = vunpack.c.l.b16 %v54
  %v103 = vunpack.c.l.b16 %v55
  %v104 = vunpack.c.l.b16 %v56
  %v105 = vunpack.c.l.b16 %v57
  %v106 = vunpack.c.l.b16 %v58
  %v107 = vunpack.c.l.b16 %v59
  %v108 = vunpack.c.l.b16 %v60
  %v109 = vunpack.c.l.b16 %v61
  %v110 = vunpack.c.l.b16 %v62
  %v111 = vunpack.c.l.b16 %v63
  %v112 = vunpack.c.l.b16 %v64
  %v113 = vunpack.c.l.b16 %v65
  %v114 = vunpack.c.l.b16 %v66
  %v115 = vunpack.c.l.b16 %v67
  %v116 = vunpack.c.l.b16 %v68
  %v117 = vunpack.c.l.b16 %v69
  %v118 = vpack.c.b16 %v103, %v102
  %v119 = vpack.c.b16 %v105, %v104
  %v120 = vpack.c.b16 %v107, %v106
  %v121 = vpack.c.b16 %v109, %v108
  %v122 = vpack.c.b16 %v111, %v110
  %v123 = vpack.c.b16 %v113, %v112
  %v124 = vpack.c.b16 %v115, %v114
  %v125 = vpack.c.b16 %v117, %v116
  %v150 = vunpack.c.l.b16 %v70
  %v151 = vunpack.c.l.b16 %v71
  %v152 = vunpack.c.l.b16 %v72
  %v153 = vunpack.c.l.b16 %v73
  %v154 = vunpack.c.l.b16 %v74
  %v155 = vunpack.c.l.b16 %v75
  %v156 = vunpack.c.l.b16 %v76
  %v157 = vunpack.c.l.b16 %v77
  %v158 = vunpack.c.l.b16 %v78
  %v159 = vunpack.c.l.b16 %v79
  %v160 = vunpack.c.l.b16 %v80
  %v161 = vunpack.c.l.b16 %v81
  %v162 = vunpack.c.l.b16 %v82
  %v163 = vunpack.c.l.b16 %v83
  %v164 = vunpack.c.l.b16 %v84
  %v165 = vunpack.c.l.b16 %v85
  %v166 = vpack.c.b16 %v151, %v150
  %v167 = vpack.c.b16 %v153, %v152
  %v168 = vpack.c.b16 %v155, %v154
  %v169 = vpack.c.b16 %v157, %v156
  %v170 = vpack.c.b16 %v159, %v158
  %v171 = vpack.c.b16 %v161, %v160
  %v172 = vpack.c.b16 %v163, %v162
  %v173 = vpack.c.b16 %v165, %v164
  %182 = vmatprep.subr.bf16.mxu0 0
  %183 = vmatpush1.bf16.msra.mxu0 %v166
  %184 = vmatprep.subr.bf16.mxu0 0
  %185 = vmatpush1.bf16.msra.mxu0 %v167
  %186 = vmatprep.subr.bf16.mxu0 0
  %187 = vmatpush1.bf16.msra.mxu0 %v168
  %188 = vmatprep.subr.bf16.mxu0 0
  %189 = vmatpush1.bf16.msra.mxu0 %v169
  %190 = vmatprep.subr.bf16.mxu0 0
  %191 = vmatpush1.bf16.msra.mxu0 %v170
  %192 = vmatprep.subr.bf16.mxu0 0
  %193 = vmatpush1.bf16.msra.mxu0 %v171
  %194 = vmatprep.subr.bf16.mxu0 0
  %195 = vmatpush1.bf16.msra.mxu0 %v172
  %196 = vmatprep.subr.bf16.mxu0 0
  %197 = vmatpush1.bf16.msra.mxu0 %v173
  %198 = vmatprep.subr.bf16.mxu0 0
  %199 = vmatpush1.bf16.msra.mxu0 0
  %200 = vmatprep.subr.bf16.mxu0 0
  %201 = vmatpush1.bf16.msra.mxu0 0
  %202 = vmatprep.subr.bf16.mxu0 0
  %203 = vmatpush1.bf16.msra.mxu0 0
  %204 = vmatprep.subr.bf16.mxu0 0
  %205 = vmatpush1.bf16.msra.mxu0 0
  %206 = vmatprep.subr.bf16.mxu0 0
  %207 = vmatpush1.bf16.msra.mxu0 0
  %208 = vmatprep.subr.bf16.mxu0 0
  %209 = vmatpush1.bf16.msra.mxu0 0
  %210 = vmatprep.subr.bf16.mxu0 0
  %211 = vmatpush1.bf16.msra.mxu0 0
  %212 = vmatprep.subr.bf16.mxu0 0
  %213 = vmatpush1.bf16.msra.mxu0 0
  %214 = vmatprep.mubr.bf16.mxu0 0
  %215 = vmatmul.mubr.bf16.gmra.mrb[0].mxu0 %v118
  %v216 = vpop.f32.mrb[0].mxu0
  %v217 = vadd.f32 0.0, %v216
  %v218 = vpop.f32.mrb[0].mxu0
  %v219 = vpop.f32.mrb[0].mxu0
  %v220 = vadd.f32 0.0, %v219
  %v221 = vpop.f32.mrb[0].mxu0
  %222 = vmatprep.mubr.bf16.mxu0 0
  %223 = vmatmul.mubr.bf16.gmra.mrb[0].mxu0 %v119
  %v224 = vpop.f32.mrb[0].mxu0
  %v225 = vadd.f32 0.0, %v224
  %v226 = vpop.f32.mrb[0].mxu0
  %v227 = vpop.f32.mrb[0].mxu0
  %v228 = vadd.f32 0.0, %v227
  %v229 = vpop.f32.mrb[0].mxu0
  %230 = vmatprep.mubr.bf16.mxu0 0
  %231 = vmatmul.mubr.bf16.gmra.mrb[0].mxu0 %v120
  %v232 = vpop.f32.mrb[0].mxu0
  %v233 = vadd.f32 0.0, %v232
  %v234 = vpop.f32.mrb[0].mxu0
  %v235 = vpop.f32.mrb[0].mxu0
  %v236 = vadd.f32 0.0, %v235
  %v237 = vpop.f32.mrb[0].mxu0
  %238 = vmatprep.mubr.bf16.mxu0 0
  %239 = vmatmul.mubr.bf16.gmra.mrb[0].mxu0 %v121
  %v240 = vpop.f32.mrb[0].mxu0
  %v241 = vadd.f32 0.0, %v240
  %v242 = vpop.f32.mrb[0].mxu0
  %v243 = vpop.f32.mrb[0].mxu0
  %v244 = vadd.f32 0.0, %v243
  %v245 = vpop.f32.mrb[0].mxu0
  %246 = vmatprep.mubr.bf16.mxu0 0
  %247 = vmatmul.mubr.bf16.gmra.mrb[0].mxu0 %v122
  %v248 = vpop.f32.mrb[0].mxu0
  %v249 = vadd.f32 0.0, %v248
  %v250 = vpop.f32.mrb[0].mxu0
  %v251 = vpop.f32.mrb[0].mxu0
  %v252 = vadd.f32 0.0, %v251
  %v253 = vpop.f32.mrb[0].mxu0
  %254 = vmatprep.mubr.bf16.mxu0 0
  %255 = vmatmul.mubr.bf16.gmra.mrb[0].mxu0 %v123
  %v256 = vpop.f32.mrb[0].mxu0
  %v257 = vadd.f32 0.0, %v256
  %v258 = vpop.f32.mrb[0].mxu0
  %v259 = vpop.f32.mrb[0].mxu0
  %v260 = vadd.f32 0.0, %v259
  %v261 = vpop.f32.mrb[0].mxu0
  %262 = vmatprep.mubr.bf16.mxu0 0
  %263 = vmatmul.mubr.bf16.gmra.mrb[0].mxu0 %v124
  %v264 = vpop.f32.mrb[0].mxu0
  %v265 = vadd.f32 0.0, %v264
  %v266 = vpop.f32.mrb[0].mxu0
  %v267 = vpop.f32.mrb[0].mxu0
  %v268 = vadd.f32 0.0, %v267
  %v269 = vpop.f32.mrb[0].mxu0
  %270 = vmatprep.mubr.bf16.mxu0 0
  %271 = vmatmul.mubr.bf16.gmra.mrb[0].mxu0 %v125
  %v272 = vpop.f32.mrb[0].mxu0
  %v273 = vadd.f32 0.0, %v272
  %v274 = vpop.f32.mrb[0].mxu0
  %v275 = vpop.f32.mrb[0].mxu0
  %v276 = vadd.f32 0.0, %v275
  %v277 = vpop.f32.mrb[0].mxu0
  %278 = vdwg.mxu0
  %v279 = vadd.f32 %v38, %v217
  %v280 = vadd.f32 %v39, %v220
  %v281 = vadd.f32 %v40, %v225
  %v282 = vadd.f32 %v41, %v228
  %v283 = vadd.f32 %v42, %v233
  %v284 = vadd.f32 %v43, %v236
  %v285 = vadd.f32 %v44, %v241
  %v286 = vadd.f32 %v45, %v244
  %v287 = vadd.f32 %v46, %v249
  %v288 = vadd.f32 %v47, %v252
  %v289 = vadd.f32 %v48, %v257
  %v290 = vadd.f32 %v49, %v260
  %v291 = vadd.f32 %v50, %v265
  %v292 = vadd.f32 %v51, %v268
  %v293 = vadd.f32 %v52, %v273
  %v294 = vadd.f32 %v53, %v276
  %295 = vst [vmem:[#allocation2] sm:$0xff] %v279
  %296 = vst [vmem:[#allocation2 + $0x8] sm:$0xff] %v280
  %297 = vst [vmem:[#allocation2 + $0x10] sm:$0xff] %v281
  %298 = vst [vmem:[#allocation2 + $0x18] sm:$0xff] %v282
  %299 = vst [vmem:[#allocation2 + $0x20] sm:$0xff] %v283
  %300 = vst [vmem:[#allocation2 + $0x28] sm:$0xff] %v284
  %301 = vst [vmem:[#allocation2 + $0x30] sm:$0xff] %v285
  %302 = vst [vmem:[#allocation2 + $0x38] sm:$0xff] %v286
  %303 = vst [vmem:[#allocation2 + $0x40] sm:$0xff] %v287
  %304 = vst [vmem:[#allocation2 + $0x48] sm:$0xff] %v288
  %305 = vst [vmem:[#allocation2 + $0x50] sm:$0xff] %v289
  %306 = vst [vmem:[#allocation2 + $0x58] sm:$0xff] %v290
  %307 = vst [vmem:[#allocation2 + $0x60] sm:$0xff] %v291
  %308 = vst [vmem:[#allocation2 + $0x68] sm:$0xff] %v292
  %309 = vst [vmem:[#allocation2 + $0x70] sm:$0xff] %v293
  %310 = vst [vmem:[#allocation2 + $0x78] sm:$0xff] %v294
  // Predicated region
  $region22: #{bottleneck_forward.7} parent=0 // pred_check
    %p311 = pneg %p18
  $region23: #{bottleneck_forward.7} parent=0 // pred_check_branch
    %313 = sbr.rel (%p311) target = $region25
  $region24: #{bottleneck_forward.7} parent=0 // pred_region
    %v314 = vld [vmem:[#allocation2] sm:$0xff]
    %v315 = vld [vmem:[#allocation2 + $0x8] sm:$0xff]
    %v316 = vld [vmem:[#allocation2 + $0x10] sm:$0xff]
    %v317 = vld [vmem:[#allocation2 + $0x18] sm:$0xff]
    %v318 = vld [vmem:[#allocation2 + $0x20] sm:$0xff]
    %v319 = vld [vmem:[#allocation2 + $0x28] sm:$0xff]
    %v320 = vld [vmem:[#allocation2 + $0x30] sm:$0xff]
    %v321 = vld [vmem:[#allocation2 + $0x38] sm:$0xff]
    %v322 = vld [vmem:[#allocation2 + $0x40] sm:$0xff]
    %v323 = vld [vmem:[#allocation2 + $0x48] sm:$0xff]
    %v324 = vld [vmem:[#allocation2 + $0x50] sm:$0xff]
    %v325 = vld [vmem:[#allocation2 + $0x58] sm:$0xff]
    %v326 = vld [vmem:[#allocation2 + $0x60] sm:$0xff]
    %v327 = vld [vmem:[#allocation2 + $0x68] sm:$0xff]
    %v328 = vld [vmem:[#allocation2 + $0x70] sm:$0xff]
    %v329 = vld [vmem:[#allocation2 + $0x78] sm:$0xff]
    %v330 = vld [vmem:[%s2] sm:$0x1]
    %v332 = vlaneseq
    %v333 = vshrl.u32 %v332, 7
    %v334 = vsub.s32 0, %v333
    %v335 = vrot.slane %v330, %v334
    %v337 = vadd.f32 %v314, %v335
    %v338 = vadd.f32 %v315, %v335
    %v339 = vadd.f32 %v316, %v335
    %v340 = vadd.f32 %v317, %v335
    %v341 = vadd.f32 %v318, %v335
    %v342 = vadd.f32 %v319, %v335
    %v343 = vadd.f32 %v320, %v335
    %v344 = vadd.f32 %v321, %v335
    %v345 = vadd.f32 %v322, %v335
    %v346 = vadd.f32 %v323, %v335
    %v347 = vadd.f32 %v324, %v335
    %v348 = vadd.f32 %v325, %v335
    %v349 = vadd.f32 %v326, %v335
    %v350 = vadd.f32 %v327, %v335
    %v351 = vadd.f32 %v328, %v335
    %v352 = vadd.f32 %v329, %v335
    %v353 = vld [vmem:[%s3] sm:$0xf]
    %v354 = vld [vmem:[%s3 + $0x4] sm:$0xf]
    %v355 = vld [vmem:[%s3 + $0x8] sm:$0xf]
    %v356 = vld [vmem:[%s3 + $0xc] sm:$0xf]
    %v357 = vld [vmem:[%s3 + $0x10] sm:$0xf]
    %v358 = vld [vmem:[%s3 + $0x14] sm:$0xf]
    %v359 = vld [vmem:[%s3 + $0x18] sm:$0xf]
    %v360 = vld [vmem:[%s3 + $0x1c] sm:$0xf]
    %v361 = vld [vmem:[%s3 + $0x20] sm:$0xf]
    %v362 = vld [vmem:[%s3 + $0x24] sm:$0xf]
    %v363 = vld [vmem:[%s3 + $0x28] sm:$0xf]
    %v364 = vld [vmem:[%s3 + $0x2c] sm:$0xf]
    %v365 = vld [vmem:[%s3 + $0x30] sm:$0xf]
    %v366 = vld [vmem:[%s3 + $0x34] sm:$0xf]
    %v367 = vld [vmem:[%s3 + $0x38] sm:$0xf]
    %v368 = vld [vmem:[%s3 + $0x3c] sm:$0xf]
    %v369 = vunpack.c.l.bf16 %v353
    %v370 = vunpack.c.l.bf16 %v354
    %v371 = vunpack.c.l.bf16 %v355
    %v372 = vunpack.c.l.bf16 %v356
    %v373 = vunpack.c.l.bf16 %v357
    %v374 = vunpack.c.l.bf16 %v358
    %v375 = vunpack.c.l.bf16 %v359
    %v376 = vunpack.c.l.bf16 %v360
    %v377 = vunpack.c.l.bf16 %v361
    %v378 = vunpack.c.l.bf16 %v362
    %v379 = vunpack.c.l.bf16 %v363
    %v380 = vunpack.c.l.bf16 %v364
    %v381 = vunpack.c.l.bf16 %v365
    %v382 = vunpack.c.l.bf16 %v366
    %v383 = vunpack.c.l.bf16 %v367
    %v384 = vunpack.c.l.bf16 %v368
    %v385 = vadd.f32 %v337, %v369
    %v386 = vadd.f32 %v338, %v370
    %v387 = vadd.f32 %v339, %v371
    %v388 = vadd.f32 %v340, %v372
    %v389 = vadd.f32 %v341, %v373
    %v390 = vadd.f32 %v342, %v374
    %v391 = vadd.f32 %v343, %v375
    %v392 = vadd.f32 %v344, %v376
    %v393 = vadd.f32 %v345, %v377
    %v394 = vadd.f32 %v346, %v378
    %v395 = vadd.f32 %v347, %v379
    %v396 = vadd.f32 %v348, %v380
    %v397 = vadd.f32 %v349, %v381
    %v398 = vadd.f32 %v350, %v382
    %v399 = vadd.f32 %v351, %v383
    %v400 = vadd.f32 %v352, %v384
    %v401 = vmax.f32 %v385, 0.0
    %v402 = vmax.f32 %v386, 0.0
    %v403 = vmax.f32 %v387, 0.0
    %v404 = vmax.f32 %v388, 0.0
    %v405 = vmax.f32 %v389, 0.0
    %v406 = vmax.f32 %v390, 0.0
    %v407 = vmax.f32 %v391, 0.0
    %v408 = vmax.f32 %v392, 0.0
    %v409 = vmax.f32 %v393, 0.0
    %v410 = vmax.f32 %v394, 0.0
    %v411 = vmax.f32 %v395, 0.0
    %v412 = vmax.f32 %v396, 0.0
    %v413 = vmax.f32 %v397, 0.0
    %v414 = vmax.f32 %v398, 0.0
    %v415 = vmax.f32 %v399, 0.0
    %v416 = vmax.f32 %v400, 0.0
    %417 = vst [vmem:[%s4] sm:$0xff] %v401
    %418 = vst [vmem:[%s4 + $0x8] sm:$0xff] %v402
    %419 = vst [vmem:[%s4 + $0x10] sm:$0xff] %v403
    %420 = vst [vmem:[%s4 + $0x18] sm:$0xff] %v404
    %421 = vst [vmem:[%s4 + $0x20] sm:$0xff] %v405
    %422 = vst [vmem:[%s4 + $0x28] sm:$0xff] %v406
    %423 = vst [vmem:[%s4 + $0x30] sm:$0xff] %v407
    %424 = vst [vmem:[%s4 + $0x38] sm:$0xff] %v408
    %425 = vst [vmem:[%s4 + $0x40] sm:$0xff] %v409
    %426 = vst [vmem:[%s4 + $0x48] sm:$0xff] %v410
    %427 = vst [vmem:[%s4 + $0x50] sm:$0xff] %v411
    %428 = vst [vmem:[%s4 + $0x58] sm:$0xff] %v412
    %429 = vst [vmem:[%s4 + $0x60] sm:$0xff] %v413
    %430 = vst [vmem:[%s4 + $0x68] sm:$0xff] %v414
    %431 = vst [vmem:[%s4 + $0x70] sm:$0xff] %v415
    %432 = vst [vmem:[%s4 + $0x78] sm:$0xff] %v416
  $region25: #{bottleneck_forward.7} parent=0 // pred_fallthru
    _
  // Predicated region
  $region26: #{bottleneck_forward.7} parent=0 // pred_check
    _
  $region27: #{bottleneck_forward.7} parent=0 // pred_check_branch
    %434 = sbr.rel (0) target = $region29
  $region28: #{bottleneck_forward.7} parent=0 // pred_region
    _
  $region29: #{bottleneck_forward.7} parent=0 // pred_fallthru
    _
  // Predicated region
  $region30: #{bottleneck_forward.7} parent=0 // pred_check
    _
  $region31: #{bottleneck_forward.7} parent=0 // pred_check_branch
    %436 = sbr.rel (0) target = $region33
  $region32: #{bottleneck_forward.7} parent=0 // pred_region
    _
  $region33: #{bottleneck_forward.7} parent=0 // pred_fallthru
    _

</llo_original>
